<compile_context>
chip_gen: v7x
topology: tpu7x:2x2x1
jax: 0.10.0
libtpu: 0.0.40
codegen_flags: <defaults>
</compile_context>

<pallas_src>
import math

import numpy as np
import jax
import jax.numpy as jnp
from jax.experimental import pallas as pl
from jax.experimental.pallas import tpu as pltpu

BN_EPS = 1e-5
POOL_OUT = 5


# ----------------------------------------------------------------------------
# Pallas kernel: full forward for one batch tile.
# ----------------------------------------------------------------------------
def cnn_kernel(x_ref,
               w1_ref, t1_ref,
               w2_ref, t2_ref,
               w3_ref, t3_ref,
               w4_ref, t4_ref,
               fw1_ref, fb1_ref, fw2_ref, fb2_ref,
               o_ref):
    b_tile, seq_len, c_in = x_ref.shape
    m = b_tile * seq_len

    # Fold batch into the matmul M dimension (merge of leading dims).
    x = x_ref[...].reshape(m, c_in)                       # (M, Cin) f32

    # Position of each row inside its own sample -> masks for the conv halo.
    pos = jax.lax.broadcasted_iota(jnp.int32, (m, 1), 0) % seq_len
    is_first = pos == 0
    is_last = pos == seq_len - 1

    def conv_bn_relu(h, w_ref, t_ref):
        # h: (M, C) f32.  Shifted copies via XLU roll; zero at sample edges
        # (this is both the padding=1 halo and the cross-sample isolation).
        h_prev = jnp.where(is_first, 0.0, pltpu.roll(h, 1, axis=0))
        h_next = jnp.where(is_last, 0.0, pltpu.roll(h, m - 1, axis=0))
        # Three accumulating matmuls (prev / center / next kernel taps) with
        # bf16 operands, f32 accumulation.  BN scale is pre-folded into w.
        y = jnp.dot(h_prev.astype(jnp.bfloat16), w_ref[0],
                    preferred_element_type=jnp.float32)
        y = y + jnp.dot(h.astype(jnp.bfloat16), w_ref[1],
                        preferred_element_type=jnp.float32)
        y = y + jnp.dot(h_next.astype(jnp.bfloat16), w_ref[2],
                        preferred_element_type=jnp.float32)
        y = y + t_ref[...]                                # fused conv-bias + BN shift
        return jnp.maximum(y, 0.0)                        # ReLU, f32

    h = conv_bn_relu(x, w1_ref, t1_ref)                   # (M, 32)
    h = conv_bn_relu(h, w2_ref, t2_ref)                   # (M, 64)
    h = conv_bn_relu(h, w3_ref, t3_ref)                   # (M, 128)
    h = conv_bn_relu(h, w4_ref, t4_ref)                   # (M, 256) f32 for pooling

    # AdaptiveAvgPool1d(5): each bucket weight is constant, so pooling is a
    # static-slice segment sum + scalar scale (no per-element multiply pass).
    c4 = h.shape[-1]
    h3 = h.reshape(b_tile, seq_len, c4)                   # split leading dims
    pooled = []
    for p_idx in range(POOL_OUT):
        s = (p_idx * seq_len) // POOL_OUT
        e = -(-((p_idx + 1) * seq_len) // POOL_OUT)
        blk = jnp.sum(h3[:, s:e, :], axis=1) * (1.0 / (e - s))   # (B_TILE, 256)
        pooled.append(blk)
    # Column order p*256 + c matches the host-side fc1 weight permutation.
    pooled_cat = jnp.concatenate(pooled, axis=1).astype(jnp.bfloat16)  # (B_TILE, 1280)

    # fc1 + ReLU as a single contraction.
    z = jnp.dot(pooled_cat, fw1_ref[...], preferred_element_type=jnp.float32)
    z = jnp.maximum(z + fb1_ref[...], 0.0)                # (B_TILE, 512) f32

    # fc2 (classes padded to a lane-dense 128 on the host).
    out = jnp.dot(z.astype(jnp.bfloat16), fw2_ref[...],
                  preferred_element_type=jnp.float32) + fb2_ref[...]
    o_ref[...] = out                                      # (B_TILE, NC_pad) f32

    # TODO(synk): self.dropout is defined in __init__ but never used in
    # forward(), so it is intentionally omitted.


# ----------------------------------------------------------------------------
# Host-side glue.
# ----------------------------------------------------------------------------
def adaptive_avg_pool_matrix(length, out_size=POOL_OUT):
    P = np.zeros((out_size, length), np.float32)
    for i in range(out_size):
        s = (i * length) // out_size
        e = -(-((i + 1) * length) // out_size)
        P[i, s:e] = 1.0 / (e - s)
    return jnp.asarray(P)


def kaiming_uniform(key, shape, fan_in):
    # nn.init.kaiming_uniform_(w, nonlinearity='relu'): bound = sqrt(6 / fan_in)
    bound = math.sqrt(6.0 / fan_in)
    return jax.random.uniform(key, shape, jnp.float32, -bound, bound)


def init_params(key, num_features, num_classes):
    conv_specs = [(32, num_features), (64, 32), (128, 64), (256, 128)]
    keys = jax.random.split(key, len(conv_specs) + 2)
    p = {"num_classes": num_classes}
    bn_scale = 1.0 / math.sqrt(1.0 + BN_EPS)              # gamma=1, running_var=1
    for i, (co, ci) in enumerate(conv_specs, start=1):
        wt = kaiming_uniform(keys[i - 1], (co, ci, 3), fan_in=ci * 3)  # torch layout
        p[f"conv{i}_w_torch"] = wt
        # Kernel weight: (3, Cin, Cout), tap k in {prev, center, next}; the BN
        # scale is folded into the weights so the kernel only adds the shift.
        w_split = jnp.transpose(wt, (2, 1, 0))            # (3, ci, co)
        p[f"conv{i}_w"] = (w_split * bn_scale).astype(jnp.bfloat16)
        bias = jnp.zeros((co,), jnp.float32)
        p[f"conv{i}_b"] = bias
        # shift = (conv_bias - running_mean) * scale * gamma + beta
        p[f"bn{i}_shift"] = (bias * bn_scale).reshape(1, co)
    fc1_wt = kaiming_uniform(keys[-2], (512, 256 * POOL_OUT), fan_in=256 * POOL_OUT)
    p["fc1_w_torch"] = fc1_wt
    # torch flatten column = c*5 + p; kernel concatenates pooled blocks p*256 + c,
    # so pre-permute once on the host to (1280, 512).
    p["fc1_w_cat"] = (jnp.transpose(fc1_wt.reshape(512, 256, POOL_OUT), (2, 1, 0))
                      .reshape(POOL_OUT * 256, 512).astype(jnp.bfloat16))
    p["fc1_b"] = jnp.zeros((1, 512), jnp.float32)
    fc2_wt = kaiming_uniform(keys[-1], (num_classes, 512), fan_in=512)
    p["fc2_w_torch"] = fc2_wt
    p["fc2_b"] = jnp.zeros((num_classes,), jnp.float32)
    nc_pad = ((num_classes + 127) // 128) * 128
    fc2_pad = jnp.zeros((512, nc_pad), jnp.float32).at[:, :num_classes].set(fc2_wt.T)
    p["fc2_w_pad"] = fc2_pad.astype(jnp.bfloat16)
    p["fc2_b_pad"] = jnp.zeros((1, nc_pad), jnp.float32)
    return p


def _tpu_config():
    """Generation-aware tiling / VMEM knobs (conservative defaults if unknown)."""
    kind = ""
    try:
        dev = jax.devices()[0]
        if dev.platform == "tpu":
            kind = dev.device_kind.lower()
    except Exception:
        pass
    is_v5e = ("v5 lite" in kind) or ("v5e" in kind) or ("v5litepod" in kind)
    is_v6 = ("v6" in kind) or ("trillium" in kind)
    is_v7 = ("v7" in kind) or ("tpu7" in kind) or ("7x" in kind)
    big_vmem = is_v5e or is_v6                 # 128 MiB VMEM per TensorCore
    return {
        "max_rows": 4096 if big_vmem else 2048,
        "vmem_limit": (96 if big_vmem else 48) * 1024 * 1024,
        "split_fitting_batch": is_v7,          # only v7x has 2 TCs per chip
    }


def _choose_batch_tile(B, L, max_rows, split_fitting):
    """Batch tile: rows (b_tile*L) within budget; multi-tile configs 8-aligned."""
    fit = max_rows // max(L, 1)
    if fit >= B:
        # Whole batch fits in one tile.
        if split_fitting and B >= 2 and B * L >= 1024:
            half = (((B + 1) // 2 + 7) // 8) * 8     # 2 grid steps, 8-aligned
            if half < B:
                return half
        return B                                      # single tile == full dim
    b_tile = (fit // 8) * 8
    if b_tile == 0:
        # L alone exceeds the row budget; fall back to the smallest aligned tile.
        # TODO(synk): add an L-chunk grid axis (halo + pool accumulation) for
        # very long sequences instead of overshooting the row budget.
        b_tile = 8 if B > 8 else B
    return min(b_tile, ((B + 7) // 8) * 8)


def improved_1dcnn_forward(x_ncl, params):
    """x_ncl: (B, num_features, L) float32, PyTorch NCL layout."""
    cfg = _tpu_config()
    x = jnp.transpose(x_ncl, (0, 2, 1)).astype(jnp.float32)   # (B, L, Cin)
    B, L, c_in = x.shape
    num_classes = params["num_classes"]
    nc_pad = params["fc2_w_pad"].shape[1]

    b_tile = _choose_batch_tile(B, L, cfg["max_rows"], cfg["split_fitting_batch"])
    n_tiles = pl.cdiv(B, b_tile)
    b_pad = n_tiles * b_tile
    if b_pad != B:
        x = jnp.pad(x, ((0, b_pad - B), (0, 0), (0, 0)))

    param_arrays = [
        params["conv1_w"], params["bn1_shift"],
        params["conv2_w"], params["bn2_shift"],
        params["conv3_w"], params["bn3_shift"],
        params["conv4_w"], params["bn4_shift"],
        params["fc1_w_cat"], params["fc1_b"],
        params["fc2_w_pad"], params["fc2_b_pad"],
    ]

    def full_block(arr):
        nd = arr.ndim
        return pl.BlockSpec(arr.shape, lambda i, _nd=nd: (0,) * _nd)

    in_specs = [pl.BlockSpec((b_tile, L, c_in), lambda i: (i, 0, 0))]
    in_specs += [full_block(a) for a in param_arrays]

    out = pl.pallas_call(
        cnn_kernel,
        out_shape=jax.ShapeDtypeStruct((b_pad, nc_pad), jnp.float32),
        grid=(n_tiles,),
        in_specs=in_specs,
        out_specs=pl.BlockSpec((b_tile, nc_pad), lambda i: (i, 0)),
        compiler_params=pltpu.CompilerParams(
            dimension_semantics=("parallel",),
            vmem_limit_bytes=cfg["vmem_limit"]),
    )(x, *param_arrays)
    return out[:B, :num_classes]


# ----------------------------------------------------------------------------
# Pure-JAX reference (mirrors PyTorch semantics, full f32) for validation.
# ----------------------------------------------------------------------------
def reference_forward(x_ncl, p):
    hp = jax.lax.Precision.HIGHEST
    h = x_ncl.astype(jnp.float32)
    for i in range(1, 5):
        w = p[f"conv{i}_w_torch"]
        b = p[f"conv{i}_b"]
        h = jax.lax.conv_general_dilated(
            h, w, window_strides=(1,), padding=((1, 1),),
            dimension_numbers=("NCH", "OIH", "NCH"), precision=hp)
        h = (h + b[None, :, None]) / jnp.sqrt(1.0 + BN_EPS)   # BN eval, default stats
        h = jnp.maximum(h, 0.0)
    B_, C_, L_ = h.shape
    P = adaptive_avg_pool_matrix(L_)
    h = jnp.einsum("bcl,pl->bcp", h, P, precision=hp)
    h = h.reshape(B_, C_ * POOL_OUT)                           # torch flatten (c*5 + p)
    h = jnp.maximum(jnp.dot(h, p["fc1_w_torch"].T, precision=hp) + p["fc1_b"], 0.0)
    return jnp.dot(h, p["fc2_w_torch"].T, precision=hp) + p["fc2_b"]


# ----------------------------------------------------------------------------
if __name__ == "__main__":
    key = jax.random.PRNGKey(0)
    B, num_features, L, num_classes = 2, 4, 16, 10

    params = init_params(key, num_features, num_classes)
    x = jax.random.normal(jax.random.fold_in(key, 123),
                          (B, num_features, L), jnp.float32)

    out = jax.block_until_ready(improved_1dcnn_forward(x, params))
    ref = reference_forward(x, params)

    assert out.shape == (B, num_classes)
    max_err = float(jnp.max(jnp.abs(out - ref)))
    assert jnp.allclose(out, ref, atol=3e-2, rtol=3e-2), (
        f"mismatch: max abs diff {max_err}")
    print("KERNEL_OK")
</pallas_src>

<mosaic_0001>
module attributes {stable_mosaic.version = 11 : i64} {
  func.func @cnn_kernel(%arg0: i32, %arg1: memref<2x16x4xf32, #tpu.memory_space<vmem>>, %arg2: memref<3x4x32xbf16, #tpu.memory_space<vmem>>, %arg3: memref<1x32xf32, #tpu.memory_space<vmem>>, %arg4: memref<3x32x64xbf16, #tpu.memory_space<vmem>>, %arg5: memref<1x64xf32, #tpu.memory_space<vmem>>, %arg6: memref<3x64x128xbf16, #tpu.memory_space<vmem>>, %arg7: memref<1x128xf32, #tpu.memory_space<vmem>>, %arg8: memref<3x128x256xbf16, #tpu.memory_space<vmem>>, %arg9: memref<1x256xf32, #tpu.memory_space<vmem>>, %arg10: memref<1280x512xbf16, #tpu.memory_space<vmem>>, %arg11: memref<1x512xf32, #tpu.memory_space<vmem>>, %arg12: memref<512x128xbf16, #tpu.memory_space<vmem>>, %arg13: memref<1x128xf32, #tpu.memory_space<vmem>>, %arg14: memref<2x128xf32, #tpu.memory_space<vmem>>) attributes {dimension_semantics = [#tpu.dimension_semantics<parallel>], iteration_bounds = array<i64: 1>, scalar_prefetch = 0 : i64, scratch_operands = 0 : i64, tpu.core_type = #tpu.core_type<tc>, window_params = [{transform_indices = @transform_0, window_bounds = array<i64: 2, 16, 4>}, {pipeline_mode = #tpu.pipeline_mode<synchronous>, transform_indices = @transform_1, window_bounds = array<i64: 3, 4, 32>}, {pipeline_mode = #tpu.pipeline_mode<synchronous>, transform_indices = @transform_2, window_bounds = array<i64: 1, 32>}, {pipeline_mode = #tpu.pipeline_mode<synchronous>, transform_indices = @transform_3, window_bounds = array<i64: 3, 32, 64>}, {pipeline_mode = #tpu.pipeline_mode<synchronous>, transform_indices = @transform_4, window_bounds = array<i64: 1, 64>}, {pipeline_mode = #tpu.pipeline_mode<synchronous>, transform_indices = @transform_5, window_bounds = array<i64: 3, 64, 128>}, {pipeline_mode = #tpu.pipeline_mode<synchronous>, transform_indices = @transform_6, window_bounds = array<i64: 1, 128>}, {pipeline_mode = #tpu.pipeline_mode<synchronous>, transform_indices = @transform_7, window_bounds = array<i64: 3, 128, 256>}, {pipeline_mode = #tpu.pipeline_mode<synchronous>, transform_indices = @transform_8, window_bounds = array<i64: 1, 256>}, {pipeline_mode = #tpu.pipeline_mode<synchronous>, transform_indices = @transform_9, window_bounds = array<i64: 1280, 512>}, {pipeline_mode = #tpu.pipeline_mode<synchronous>, transform_indices = @transform_10, window_bounds = array<i64: 1, 512>}, {pipeline_mode = #tpu.pipeline_mode<synchronous>, transform_indices = @transform_11, window_bounds = array<i64: 512, 128>}, {pipeline_mode = #tpu.pipeline_mode<synchronous>, transform_indices = @transform_12, window_bounds = array<i64: 1, 128>}, {transform_indices = @transform_13, window_bounds = array<i64: 2, 128>}]} {
    %c0 = arith.constant 0 : index
    %c0_0 = arith.constant 0 : index
    %c0_1 = arith.constant 0 : index
    %0 = vector.load %arg1[%c0, %c0_0, %c0_1] : memref<2x16x4xf32, #tpu.memory_space<vmem>>, vector<2x16x4xf32>
    %1 = vector.shape_cast %0 : vector<2x16x4xf32> to vector<32x4xf32>
    %2 = tpu.iota {dimensions = array<i32: 0>} : vector<32x1xi32>
    %c16_i32 = arith.constant 16 : i32
    %c0_i32 = arith.constant 0 : i32
    %3 = arith.cmpi eq, %c16_i32, %c0_i32 : i32
    %c1_i32 = arith.constant 1 : i32
    %4 = arith.select %3, %c1_i32, %c16_i32 : i32
    %5 = vector.broadcast %4 : i32 to vector<32x1xi32>
    %6 = arith.remsi %2, %5 : vector<32x1xi32>
    %c0_i32_2 = arith.constant 0 : i32
    %7 = vector.broadcast %c0_i32_2 : i32 to vector<32x1xi32>
    %8 = arith.cmpi ne, %6, %7 : vector<32x1xi32>
    %c0_i32_3 = arith.constant 0 : i32
    %9 = vector.broadcast %c0_i32_3 : i32 to vector<32x1xi32>
    %10 = arith.cmpi slt, %6, %9 : vector<32x1xi32>
    %c0_i32_4 = arith.constant 0 : i32
    %11 = arith.cmpi slt, %4, %c0_i32_4 : i32
    %12 = vector.broadcast %11 : i1 to vector<32x1xi1>
    %13 = vector.broadcast %12 : vector<32x1xi1> to vector<32x1xi1>
    %14 = arith.xori %10, %13 : vector<32x1xi1>
    %15 = arith.andi %14, %8 : vector<32x1xi1>
    %16 = vector.broadcast %4 : i32 to vector<32x1xi32>
    %17 = arith.addi %6, %16 : vector<32x1xi32>
    %18 = arith.select %15, %17, %6 : vector<32x1xi1>, vector<32x1xi32>
    %c0_i32_5 = arith.constant 0 : i32
    %19 = vector.broadcast %c0_i32_5 : i32 to vector<32x1xi32>
    %20 = arith.cmpi eq, %18, %19 : vector<32x1xi32>
    %c15_i32 = arith.constant 15 : i32
    %21 = vector.broadcast %c15_i32 : i32 to vector<32x1xi32>
    %22 = arith.cmpi eq, %18, %21 : vector<32x1xi32>
    %c1_i32_6 = arith.constant 1 : i32
    %23 = tpu.dynamic_rotate %1 by %c1_i32_6 dim 0 : vector<32x4xf32>, i32 -> vector<32x4xf32>
    %cst = arith.constant 0.000000e+00 : f32
    %24 = vector.shape_cast %20 : vector<32x1xi1> to vector<32x1xi1>
    %25 = vector.broadcast %24 : vector<32x1xi1> to vector<32x4xi1>
    %26 = vector.broadcast %cst : f32 to vector<32x4xf32>
    %27 = arith.select %25, %26, %23 : vector<32x4xi1>, vector<32x4xf32>
    %c31_i32 = arith.constant 31 : i32
    %28 = tpu.dynamic_rotate %1 by %c31_i32 dim 0 : vector<32x4xf32>, i32 -> vector<32x4xf32>
    %cst_7 = arith.constant 0.000000e+00 : f32
    %29 = vector.shape_cast %22 : vector<32x1xi1> to vector<32x1xi1>
    %30 = vector.broadcast %29 : vector<32x1xi1> to vector<32x4xi1>
    %31 = vector.broadcast %cst_7 : f32 to vector<32x4xf32>
    %32 = arith.select %30, %31, %28 : vector<32x4xi1>, vector<32x4xf32>
    %33 = arith.truncf %27 : vector<32x4xf32> to vector<32x4xbf16>
    %c0_8 = arith.constant 0 : index
    %c0_9 = arith.constant 0 : index
    %c0_10 = arith.constant 0 : index
    %34 = vector.load %arg2[%c0_8, %c0_9, %c0_10] : memref<3x4x32xbf16, #tpu.memory_space<vmem>>, vector<1x4x32xbf16>
    %35 = vector.shape_cast %34 : vector<1x4x32xbf16> to vector<4x32xbf16>
    %cst_11 = arith.constant dense<0.000000e+00> : vector<32x32xf32>
    %36 = tpu.matmul %33, %35, %cst_11 {dimension_numbers = #tpu.dot_dimension_numbers<[1], [0], [0], [1], [0, 0, 1, 1], [], []>} : vector<32x4xbf16>, vector<4x32xbf16>, vector<32x32xf32> -> vector<32x32xf32>
    %37 = arith.truncf %1 : vector<32x4xf32> to vector<32x4xbf16>
    %c1 = arith.constant 1 : index
    %c0_12 = arith.constant 0 : index
    %c0_13 = arith.constant 0 : index
    %38 = vector.load %arg2[%c1, %c0_12, %c0_13] : memref<3x4x32xbf16, #tpu.memory_space<vmem>>, vector<1x4x32xbf16>
    %39 = vector.shape_cast %38 : vector<1x4x32xbf16> to vector<4x32xbf16>
    %cst_14 = arith.constant dense<0.000000e+00> : vector<32x32xf32>
    %40 = tpu.matmul %37, %39, %cst_14 {dimension_numbers = #tpu.dot_dimension_numbers<[1], [0], [0], [1], [0, 0, 1, 1], [], []>} : vector<32x4xbf16>, vector<4x32xbf16>, vector<32x32xf32> -> vector<32x32xf32>
    %41 = arith.addf %36, %40 : vector<32x32xf32>
    %42 = arith.truncf %32 : vector<32x4xf32> to vector<32x4xbf16>
    %c2 = arith.constant 2 : index
    %c0_15 = arith.constant 0 : index
    %c0_16 = arith.constant 0 : index
    %43 = vector.load %arg2[%c2, %c0_15, %c0_16] : memref<3x4x32xbf16, #tpu.memory_space<vmem>>, vector<1x4x32xbf16>
    %44 = vector.shape_cast %43 : vector<1x4x32xbf16> to vector<4x32xbf16>
    %cst_17 = arith.constant dense<0.000000e+00> : vector<32x32xf32>
    %45 = tpu.matmul %42, %44, %cst_17 {dimension_numbers = #tpu.dot_dimension_numbers<[1], [0], [0], [1], [0, 0, 1, 1], [], []>} : vector<32x4xbf16>, vector<4x32xbf16>, vector<32x32xf32> -> vector<32x32xf32>
    %46 = arith.addf %41, %45 : vector<32x32xf32>
    %c0_18 = arith.constant 0 : index
    %c0_19 = arith.constant 0 : index
    %47 = vector.load %arg3[%c0_18, %c0_19] : memref<1x32xf32, #tpu.memory_space<vmem>>, vector<1x32xf32>
    %48 = vector.broadcast %47 : vector<1x32xf32> to vector<32x32xf32>
    %49 = arith.addf %46, %48 : vector<32x32xf32>
    %cst_20 = arith.constant 0.000000e+00 : f32
    %50 = vector.broadcast %cst_20 : f32 to vector<32x32xf32>
    %51 = arith.maximumf %49, %50 : vector<32x32xf32>
    %c1_i32_21 = arith.constant 1 : i32
    %52 = tpu.dynamic_rotate %51 by %c1_i32_21 dim 0 : vector<32x32xf32>, i32 -> vector<32x32xf32>
    %cst_22 = arith.constant 0.000000e+00 : f32
    %53 = vector.shape_cast %20 : vector<32x1xi1> to vector<32x1xi1>
    %54 = vector.broadcast %53 : vector<32x1xi1> to vector<32x32xi1>
    %55 = vector.broadcast %cst_22 : f32 to vector<32x32xf32>
    %56 = arith.select %54, %55, %52 : vector<32x32xi1>, vector<32x32xf32>
    %c31_i32_23 = arith.constant 31 : i32
    %57 = tpu.dynamic_rotate %51 by %c31_i32_23 dim 0 : vector<32x32xf32>, i32 -> vector<32x32xf32>
    %cst_24 = arith.constant 0.000000e+00 : f32
    %58 = vector.shape_cast %22 : vector<32x1xi1> to vector<32x1xi1>
    %59 = vector.broadcast %58 : vector<32x1xi1> to vector<32x32xi1>
    %60 = vector.broadcast %cst_24 : f32 to vector<32x32xf32>
    %61 = arith.select %59, %60, %57 : vector<32x32xi1>, vector<32x32xf32>
    %62 = arith.truncf %56 : vector<32x32xf32> to vector<32x32xbf16>
    %c0_25 = arith.constant 0 : index
    %c0_26 = arith.constant 0 : index
    %c0_27 = arith.constant 0 : index
    %63 = vector.load %arg4[%c0_25, %c0_26, %c0_27] : memref<3x32x64xbf16, #tpu.memory_space<vmem>>, vector<1x32x64xbf16>
    %64 = vector.shape_cast %63 : vector<1x32x64xbf16> to vector<32x64xbf16>
    %cst_28 = arith.constant dense<0.000000e+00> : vector<32x64xf32>
    %65 = tpu.matmul %62, %64, %cst_28 {dimension_numbers = #tpu.dot_dimension_numbers<[1], [0], [0], [1], [0, 0, 1, 1], [], []>} : vector<32x32xbf16>, vector<32x64xbf16>, vector<32x64xf32> -> vector<32x64xf32>
    %66 = arith.truncf %51 : vector<32x32xf32> to vector<32x32xbf16>
    %c1_29 = arith.constant 1 : index
    %c0_30 = arith.constant 0 : index
    %c0_31 = arith.constant 0 : index
    %67 = vector.load %arg4[%c1_29, %c0_30, %c0_31] : memref<3x32x64xbf16, #tpu.memory_space<vmem>>, vector<1x32x64xbf16>
    %68 = vector.shape_cast %67 : vector<1x32x64xbf16> to vector<32x64xbf16>
    %cst_32 = arith.constant dense<0.000000e+00> : vector<32x64xf32>
    %69 = tpu.matmul %66, %68, %cst_32 {dimension_numbers = #tpu.dot_dimension_numbers<[1], [0], [0], [1], [0, 0, 1, 1], [], []>} : vector<32x32xbf16>, vector<32x64xbf16>, vector<32x64xf32> -> vector<32x64xf32>
    %70 = arith.addf %65, %69 : vector<32x64xf32>
    %71 = arith.truncf %61 : vector<32x32xf32> to vector<32x32xbf16>
    %c2_33 = arith.constant 2 : index
    %c0_34 = arith.constant 0 : index
    %c0_35 = arith.constant 0 : index
    %72 = vector.load %arg4[%c2_33, %c0_34, %c0_35] : memref<3x32x64xbf16, #tpu.memory_space<vmem>>, vector<1x32x64xbf16>
    %73 = vector.shape_cast %72 : vector<1x32x64xbf16> to vector<32x64xbf16>
    %cst_36 = arith.constant dense<0.000000e+00> : vector<32x64xf32>
    %74 = tpu.matmul %71, %73, %cst_36 {dimension_numbers = #tpu.dot_dimension_numbers<[1], [0], [0], [1], [0, 0, 1, 1], [], []>} : vector<32x32xbf16>, vector<32x64xbf16>, vector<32x64xf32> -> vector<32x64xf32>
    %75 = arith.addf %70, %74 : vector<32x64xf32>
    %c0_37 = arith.constant 0 : index
    %c0_38 = arith.constant 0 : index
    %76 = vector.load %arg5[%c0_37, %c0_38] : memref<1x64xf32, #tpu.memory_space<vmem>>, vector<1x64xf32>
    %77 = vector.broadcast %76 : vector<1x64xf32> to vector<32x64xf32>
    %78 = arith.addf %75, %77 : vector<32x64xf32>
    %cst_39 = arith.constant 0.000000e+00 : f32
    %79 = vector.broadcast %cst_39 : f32 to vector<32x64xf32>
    %80 = arith.maximumf %78, %79 : vector<32x64xf32>
    %c1_i32_40 = arith.constant 1 : i32
    %81 = tpu.dynamic_rotate %80 by %c1_i32_40 dim 0 : vector<32x64xf32>, i32 -> vector<32x64xf32>
    %cst_41 = arith.constant 0.000000e+00 : f32
    %82 = vector.shape_cast %20 : vector<32x1xi1> to vector<32x1xi1>
    %83 = vector.broadcast %82 : vector<32x1xi1> to vector<32x64xi1>
    %84 = vector.broadcast %cst_41 : f32 to vector<32x64xf32>
    %85 = arith.select %83, %84, %81 : vector<32x64xi1>, vector<32x64xf32>
    %c31_i32_42 = arith.constant 31 : i32
    %86 = tpu.dynamic_rotate %80 by %c31_i32_42 dim 0 : vector<32x64xf32>, i32 -> vector<32x64xf32>
    %cst_43 = arith.constant 0.000000e+00 : f32
    %87 = vector.shape_cast %22 : vector<32x1xi1> to vector<32x1xi1>
    %88 = vector.broadcast %87 : vector<32x1xi1> to vector<32x64xi1>
    %89 = vector.broadcast %cst_43 : f32 to vector<32x64xf32>
    %90 = arith.select %88, %89, %86 : vector<32x64xi1>, vector<32x64xf32>
    %91 = arith.truncf %85 : vector<32x64xf32> to vector<32x64xbf16>
    %c0_44 = arith.constant 0 : index
    %c0_45 = arith.constant 0 : index
    %c0_46 = arith.constant 0 : index
    %92 = vector.load %arg6[%c0_44, %c0_45, %c0_46] : memref<3x64x128xbf16, #tpu.memory_space<vmem>>, vector<1x64x128xbf16>
    %93 = vector.shape_cast %92 : vector<1x64x128xbf16> to vector<64x128xbf16>
    %cst_47 = arith.constant dense<0.000000e+00> : vector<32x128xf32>
    %94 = tpu.matmul %91, %93, %cst_47 {dimension_numbers = #tpu.dot_dimension_numbers<[1], [0], [0], [1], [0, 0, 1, 1], [], []>} : vector<32x64xbf16>, vector<64x128xbf16>, vector<32x128xf32> -> vector<32x128xf32>
    %95 = arith.truncf %80 : vector<32x64xf32> to vector<32x64xbf16>
    %c1_48 = arith.constant 1 : index
    %c0_49 = arith.constant 0 : index
    %c0_50 = arith.constant 0 : index
    %96 = vector.load %arg6[%c1_48, %c0_49, %c0_50] : memref<3x64x128xbf16, #tpu.memory_space<vmem>>, vector<1x64x128xbf16>
    %97 = vector.shape_cast %96 : vector<1x64x128xbf16> to vector<64x128xbf16>
    %cst_51 = arith.constant dense<0.000000e+00> : vector<32x128xf32>
    %98 = tpu.matmul %95, %97, %cst_51 {dimension_numbers = #tpu.dot_dimension_numbers<[1], [0], [0], [1], [0, 0, 1, 1], [], []>} : vector<32x64xbf16>, vector<64x128xbf16>, vector<32x128xf32> -> vector<32x128xf32>
    %99 = arith.addf %94, %98 : vector<32x128xf32>
    %100 = arith.truncf %90 : vector<32x64xf32> to vector<32x64xbf16>
    %c2_52 = arith.constant 2 : index
    %c0_53 = arith.constant 0 : index
    %c0_54 = arith.constant 0 : index
    %101 = vector.load %arg6[%c2_52, %c0_53, %c0_54] : memref<3x64x128xbf16, #tpu.memory_space<vmem>>, vector<1x64x128xbf16>
    %102 = vector.shape_cast %101 : vector<1x64x128xbf16> to vector<64x128xbf16>
    %cst_55 = arith.constant dense<0.000000e+00> : vector<32x128xf32>
    %103 = tpu.matmul %100, %102, %cst_55 {dimension_numbers = #tpu.dot_dimension_numbers<[1], [0], [0], [1], [0, 0, 1, 1], [], []>} : vector<32x64xbf16>, vector<64x128xbf16>, vector<32x128xf32> -> vector<32x128xf32>
    %104 = arith.addf %99, %103 : vector<32x128xf32>
    %c0_56 = arith.constant 0 : index
    %c0_57 = arith.constant 0 : index
    %105 = vector.load %arg7[%c0_56, %c0_57] : memref<1x128xf32, #tpu.memory_space<vmem>>, vector<1x128xf32>
    %106 = vector.broadcast %105 : vector<1x128xf32> to vector<32x128xf32>
    %107 = arith.addf %104, %106 : vector<32x128xf32>
    %cst_58 = arith.constant 0.000000e+00 : f32
    %108 = vector.broadcast %cst_58 : f32 to vector<32x128xf32>
    %109 = arith.maximumf %107, %108 : vector<32x128xf32>
    %c1_i32_59 = arith.constant 1 : i32
    %110 = tpu.dynamic_rotate %109 by %c1_i32_59 dim 0 : vector<32x128xf32>, i32 -> vector<32x128xf32>
    %cst_60 = arith.constant 0.000000e+00 : f32
    %111 = vector.shape_cast %20 : vector<32x1xi1> to vector<32x1xi1>
    %112 = vector.broadcast %111 : vector<32x1xi1> to vector<32x128xi1>
    %113 = vector.broadcast %cst_60 : f32 to vector<32x128xf32>
    %114 = arith.select %112, %113, %110 : vector<32x128xi1>, vector<32x128xf32>
    %c31_i32_61 = arith.constant 31 : i32
    %115 = tpu.dynamic_rotate %109 by %c31_i32_61 dim 0 : vector<32x128xf32>, i32 -> vector<32x128xf32>
    %cst_62 = arith.constant 0.000000e+00 : f32
    %116 = vector.shape_cast %22 : vector<32x1xi1> to vector<32x1xi1>
    %117 = vector.broadcast %116 : vector<32x1xi1> to vector<32x128xi1>
    %118 = vector.broadcast %cst_62 : f32 to vector<32x128xf32>
    %119 = arith.select %117, %118, %115 : vector<32x128xi1>, vector<32x128xf32>
    %120 = arith.truncf %114 : vector<32x128xf32> to vector<32x128xbf16>
    %c0_63 = arith.constant 0 : index
    %c0_64 = arith.constant 0 : index
    %c0_65 = arith.constant 0 : index
    %121 = vector.load %arg8[%c0_63, %c0_64, %c0_65] : memref<3x128x256xbf16, #tpu.memory_space<vmem>>, vector<1x128x256xbf16>
    %122 = vector.shape_cast %121 : vector<1x128x256xbf16> to vector<128x256xbf16>
    %cst_66 = arith.constant dense<0.000000e+00> : vector<32x256xf32>
    %123 = tpu.matmul %120, %122, %cst_66 {dimension_numbers = #tpu.dot_dimension_numbers<[1], [0], [0], [1], [0, 0, 1, 1], [], []>} : vector<32x128xbf16>, vector<128x256xbf16>, vector<32x256xf32> -> vector<32x256xf32>
    %124 = arith.truncf %109 : vector<32x128xf32> to vector<32x128xbf16>
    %c1_67 = arith.constant 1 : index
    %c0_68 = arith.constant 0 : index
    %c0_69 = arith.constant 0 : index
    %125 = vector.load %arg8[%c1_67, %c0_68, %c0_69] : memref<3x128x256xbf16, #tpu.memory_space<vmem>>, vector<1x128x256xbf16>
    %126 = vector.shape_cast %125 : vector<1x128x256xbf16> to vector<128x256xbf16>
    %cst_70 = arith.constant dense<0.000000e+00> : vector<32x256xf32>
    %127 = tpu.matmul %124, %126, %cst_70 {dimension_numbers = #tpu.dot_dimension_numbers<[1], [0], [0], [1], [0, 0, 1, 1], [], []>} : vector<32x128xbf16>, vector<128x256xbf16>, vector<32x256xf32> -> vector<32x256xf32>
    %128 = arith.addf %123, %127 : vector<32x256xf32>
    %129 = arith.truncf %119 : vector<32x128xf32> to vector<32x128xbf16>
    %c2_71 = arith.constant 2 : index
    %c0_72 = arith.constant 0 : index
    %c0_73 = arith.constant 0 : index
    %130 = vector.load %arg8[%c2_71, %c0_72, %c0_73] : memref<3x128x256xbf16, #tpu.memory_space<vmem>>, vector<1x128x256xbf16>
    %131 = vector.shape_cast %130 : vector<1x128x256xbf16> to vector<128x256xbf16>
    %cst_74 = arith.constant dense<0.000000e+00> : vector<32x256xf32>
    %132 = tpu.matmul %129, %131, %cst_74 {dimension_numbers = #tpu.dot_dimension_numbers<[1], [0], [0], [1], [0, 0, 1, 1], [], []>} : vector<32x128xbf16>, vector<128x256xbf16>, vector<32x256xf32> -> vector<32x256xf32>
    %133 = arith.addf %128, %132 : vector<32x256xf32>
    %c0_75 = arith.constant 0 : index
    %c0_76 = arith.constant 0 : index
    %134 = vector.load %arg9[%c0_75, %c0_76] : memref<1x256xf32, #tpu.memory_space<vmem>>, vector<1x256xf32>
    %135 = vector.broadcast %134 : vector<1x256xf32> to vector<32x256xf32>
    %136 = arith.addf %133, %135 : vector<32x256xf32>
    %cst_77 = arith.constant 0.000000e+00 : f32
    %137 = vector.broadcast %cst_77 : f32 to vector<32x256xf32>
    %138 = arith.maximumf %136, %137 : vector<32x256xf32>
    %139 = vector.shape_cast %138 : vector<32x256xf32> to vector<2x16x256xf32>
    %140 = vector.extract_strided_slice %139 {offsets = [0, 0, 0], sizes = [2, 4, 256], strides = [1, 1, 1]} : vector<2x16x256xf32> to vector<2x4x256xf32>
    %cst_78 = arith.constant dense<0.000000e+00> : vector<2x256xf32>
    %141 = vector.multi_reduction <add>, %140, %cst_78 [1] : vector<2x4x256xf32> to vector<2x256xf32>
    %cst_79 = arith.constant 2.500000e-01 : f32
    %142 = vector.broadcast %cst_79 : f32 to vector<2x256xf32>
    %143 = arith.mulf %141, %142 : vector<2x256xf32>
    %144 = vector.extract_strided_slice %139 {offsets = [0, 3, 0], sizes = [2, 4, 256], strides = [1, 1, 1]} : vector<2x16x256xf32> to vector<2x4x256xf32>
    %cst_80 = arith.constant dense<0.000000e+00> : vector<2x256xf32>
    %145 = vector.multi_reduction <add>, %144, %cst_80 [1] : vector<2x4x256xf32> to vector<2x256xf32>
    %cst_81 = arith.constant 2.500000e-01 : f32
    %146 = vector.broadcast %cst_81 : f32 to vector<2x256xf32>
    %147 = arith.mulf %145, %146 : vector<2x256xf32>
    %148 = vector.extract_strided_slice %139 {offsets = [0, 6, 0], sizes = [2, 4, 256], strides = [1, 1, 1]} : vector<2x16x256xf32> to vector<2x4x256xf32>
    %cst_82 = arith.constant dense<0.000000e+00> : vector<2x256xf32>
    %149 = vector.multi_reduction <add>, %148, %cst_82 [1] : vector<2x4x256xf32> to vector<2x256xf32>
    %cst_83 = arith.constant 2.500000e-01 : f32
    %150 = vector.broadcast %cst_83 : f32 to vector<2x256xf32>
    %151 = arith.mulf %149, %150 : vector<2x256xf32>
    %152 = vector.extract_strided_slice %139 {offsets = [0, 9, 0], sizes = [2, 4, 256], strides = [1, 1, 1]} : vector<2x16x256xf32> to vector<2x4x256xf32>
    %cst_84 = arith.constant dense<0.000000e+00> : vector<2x256xf32>
    %153 = vector.multi_reduction <add>, %152, %cst_84 [1] : vector<2x4x256xf32> to vector<2x256xf32>
    %cst_85 = arith.constant 2.500000e-01 : f32
    %154 = vector.broadcast %cst_85 : f32 to vector<2x256xf32>
    %155 = arith.mulf %153, %154 : vector<2x256xf32>
    %156 = vector.extract_strided_slice %139 {offsets = [0, 12, 0], sizes = [2, 4, 256], strides = [1, 1, 1]} : vector<2x16x256xf32> to vector<2x4x256xf32>
    %cst_86 = arith.constant dense<0.000000e+00> : vector<2x256xf32>
    %157 = vector.multi_reduction <add>, %156, %cst_86 [1] : vector<2x4x256xf32> to vector<2x256xf32>
    %cst_87 = arith.constant 2.500000e-01 : f32
    %158 = vector.broadcast %cst_87 : f32 to vector<2x256xf32>
    %159 = arith.mulf %157, %158 : vector<2x256xf32>
    %160 = tpu.concatenate %143, %147, %151, %155, %159 in 1 : vector<2x256xf32>, vector<2x256xf32>, vector<2x256xf32>, vector<2x256xf32>, vector<2x256xf32> -> vector<2x1280xf32>
    %161 = arith.truncf %160 : vector<2x1280xf32> to vector<2x1280xbf16>
    %c0_88 = arith.constant 0 : index
    %c0_89 = arith.constant 0 : index
    %162 = vector.load %arg10[%c0_88, %c0_89] : memref<1280x512xbf16, #tpu.memory_space<vmem>>, vector<1280x512xbf16>
    %cst_90 = arith.constant dense<0.000000e+00> : vector<2x512xf32>
    %163 = tpu.matmul %161, %162, %cst_90 {dimension_numbers = #tpu.dot_dimension_numbers<[1], [0], [0], [1], [0, 0, 1, 1], [], []>} : vector<2x1280xbf16>, vector<1280x512xbf16>, vector<2x512xf32> -> vector<2x512xf32>
    %c0_91 = arith.constant 0 : index
    %c0_92 = arith.constant 0 : index
    %164 = vector.load %arg11[%c0_91, %c0_92] : memref<1x512xf32, #tpu.memory_space<vmem>>, vector<1x512xf32>
    %165 = vector.broadcast %164 : vector<1x512xf32> to vector<2x512xf32>
    %166 = arith.addf %163, %165 : vector<2x512xf32>
    %cst_93 = arith.constant 0.000000e+00 : f32
    %167 = vector.broadcast %cst_93 : f32 to vector<2x512xf32>
    %168 = arith.maximumf %166, %167 : vector<2x512xf32>
    %169 = arith.truncf %168 : vector<2x512xf32> to vector<2x512xbf16>
    %c0_94 = arith.constant 0 : index
    %c0_95 = arith.constant 0 : index
    %170 = vector.load %arg12[%c0_94, %c0_95] : memref<512x128xbf16, #tpu.memory_space<vmem>>, vector<512x128xbf16>
    %cst_96 = arith.constant dense<0.000000e+00> : vector<2x128xf32>
    %171 = tpu.matmul %169, %170, %cst_96 {dimension_numbers = #tpu.dot_dimension_numbers<[1], [0], [0], [1], [0, 0, 1, 1], [], []>} : vector<2x512xbf16>, vector<512x128xbf16>, vector<2x128xf32> -> vector<2x128xf32>
    %c0_97 = arith.constant 0 : index
    %c0_98 = arith.constant 0 : index
    %172 = vector.load %arg13[%c0_97, %c0_98] : memref<1x128xf32, #tpu.memory_space<vmem>>, vector<1x128xf32>
    %173 = vector.broadcast %172 : vector<1x128xf32> to vector<2x128xf32>
    %174 = arith.addf %171, %173 : vector<2x128xf32>
    %c0_99 = arith.constant 0 : index
    %c0_100 = arith.constant 0 : index
    %175 = vector.load %arg14[%c0_99, %c0_100] : memref<2x128xf32, #tpu.memory_space<vmem>>, vector<2x128xf32>
    tpu.vector_store %arg14[%c0_99, %c0_100], %174 {strides = array<i32>} : memref<2x128xf32, #tpu.memory_space<vmem>>, vector<2x128xf32>,
    return
  }
  func.func @transform_0(%arg0: i32) -> (i32, i32, i32) {
    %c0_i32 = arith.constant 0 : i32
    %c0_i32_0 = arith.constant 0 : i32
    %c0_i32_1 = arith.constant 0 : i32
    return %arg0, %c0_i32, %c0_i32_0 : i32, i32, i32
  }
  func.func @transform_1(%arg0: i32) -> (i32, i32, i32) {
    %c0_i32 = arith.constant 0 : i32
    %c0_i32_0 = arith.constant 0 : i32
    %c0_i32_1 = arith.constant 0 : i32
    %c0_i32_2 = arith.constant 0 : i32
    return %c0_i32, %c0_i32_0, %c0_i32_1 : i32, i32, i32
  }
  func.func @transform_2(%arg0: i32) -> (i32, i32) {
    %c0_i32 = arith.constant 0 : i32
    %c0_i32_0 = arith.constant 0 : i32
    %c0_i32_1 = arith.constant 0 : i32
    return %c0_i32, %c0_i32_0 : i32, i32
  }
  func.func @transform_3(%arg0: i32) -> (i32, i32, i32) {
    %c0_i32 = arith.constant 0 : i32
    %c0_i32_0 = arith.constant 0 : i32
    %c0_i32_1 = arith.constant 0 : i32
    %c0_i32_2 = arith.constant 0 : i32
    return %c0_i32, %c0_i32_0, %c0_i32_1 : i32, i32, i32
  }
  func.func @transform_4(%arg0: i32) -> (i32, i32) {
    %c0_i32 = arith.constant 0 : i32
    %c0_i32_0 = arith.constant 0 : i32
    %c0_i32_1 = arith.constant 0 : i32
    return %c0_i32, %c0_i32_0 : i32, i32
  }
  func.func @transform_5(%arg0: i32) -> (i32, i32, i32) {
    %c0_i32 = arith.constant 0 : i32
    %c0_i32_0 = arith.constant 0 : i32
    %c0_i32_1 = arith.constant 0 : i32
    %c0_i32_2 = arith.constant 0 : i32
    return %c0_i32, %c0_i32_0, %c0_i32_1 : i32, i32, i32
  }
  func.func @transform_6(%arg0: i32) -> (i32, i32) {
    %c0_i32 = arith.constant 0 : i32
    %c0_i32_0 = arith.constant 0 : i32
    %c0_i32_1 = arith.constant 0 : i32
    return %c0_i32, %c0_i32_0 : i32, i32
  }
  func.func @transform_7(%arg0: i32) -> (i32, i32, i32) {
    %c0_i32 = arith.constant 0 : i32
    %c0_i32_0 = arith.constant 0 : i32
    %c0_i32_1 = arith.constant 0 : i32
    %c0_i32_2 = arith.constant 0 : i32
    return %c0_i32, %c0_i32_0, %c0_i32_1 : i32, i32, i32
  }
  func.func @transform_8(%arg0: i32) -> (i32, i32) {
    %c0_i32 = arith.constant 0 : i32
    %c0_i32_0 = arith.constant 0 : i32
    %c0_i32_1 = arith.constant 0 : i32
    return %c0_i32, %c0_i32_0 : i32, i32
  }
  func.func @transform_9(%arg0: i32) -> (i32, i32) {
    %c0_i32 = arith.constant 0 : i32
    %c0_i32_0 = arith.constant 0 : i32
    %c0_i32_1 = arith.constant 0 : i32
    return %c0_i32, %c0_i32_0 : i32, i32
  }
  func.func @transform_10(%arg0: i32) -> (i32, i32) {
    %c0_i32 = arith.constant 0 : i32
    %c0_i32_0 = arith.constant 0 : i32
    %c0_i32_1 = arith.constant 0 : i32
    return %c0_i32, %c0_i32_0 : i32, i32
  }
  func.func @transform_11(%arg0: i32) -> (i32, i32) {
    %c0_i32 = arith.constant 0 : i32
    %c0_i32_0 = arith.constant 0 : i32
    %c0_i32_1 = arith.constant 0 : i32
    return %c0_i32, %c0_i32_0 : i32, i32
  }
  func.func @transform_12(%arg0: i32) -> (i32, i32) {
    %c0_i32 = arith.constant 0 : i32
    %c0_i32_0 = arith.constant 0 : i32
    %c0_i32_1 = arith.constant 0 : i32
    return %c0_i32, %c0_i32_0 : i32, i32
  }
  func.func @transform_13(%arg0: i32) -> (i32, i32) {
    %c0_i32 = arith.constant 0 : i32
    %c0_i32_0 = arith.constant 0 : i32
    return %arg0, %c0_i32 : i32, i32
  }
}

</mosaic_0001>

<llo_original>
// kernel: tpu_custom_call.1
$region0: #{tpu_custom_call.1}
  #allocation0 [shape = 'u32[]', space=smem, size = 0x4, offset = 0x4, fixed_abs, tag = 'smem constant byte address 0x4 - core index']
  #allocation1 [shape = 'u32[144,128]{1,0:T(1,128)}', space=vmem, size = 0x12000, scoped, tag = 'internal scratch']
  %s0 = inlined_call_operand.vmem [shape: f32[2,16,4], index: 0, kind: input, shape index: {}]
  %s1 = inlined_call_operand.hbm [shape: bf16[3,4,32], index: 1, kind: input, shape index: {}]
  %s2 = inlined_call_operand.hbm [shape: f32[1,32], index: 2, kind: input, shape index: {}]
  %s3 = inlined_call_operand.hbm [shape: bf16[3,32,64], index: 3, kind: input, shape index: {}]
  %s4 = inlined_call_operand.hbm [shape: f32[1,64], index: 4, kind: input, shape index: {}]
  %s5 = inlined_call_operand.hbm [shape: bf16[3,64,128], index: 5, kind: input, shape index: {}]
  %s6 = inlined_call_operand.hbm [shape: f32[1,128], index: 6, kind: input, shape index: {}]
  %s7 = inlined_call_operand.hbm [shape: bf16[3,128,256], index: 7, kind: input, shape index: {}]
  %s8 = inlined_call_operand.hbm [shape: f32[1,256], index: 8, kind: input, shape index: {}]
  %s9 = inlined_call_operand.hbm [shape: bf16[1280,512], index: 9, kind: input, shape index: {}]
  %s10 = inlined_call_operand.hbm [shape: f32[1,512], index: 10, kind: input, shape index: {}]
  %s11 = inlined_call_operand.hbm [shape: bf16[512,128], index: 11, kind: input, shape index: {}]
  %s12 = inlined_call_operand.hbm [shape: f32[1,128], index: 12, kind: input, shape index: {}]
  %s13 = inlined_call_operand.hbm [shape: f32[2,128], index: 13, kind: output, shape index: {}]
  %s14 = sld [smem:[#allocation0]]
  $region110: #{tpu_custom_call.1} parent=0
    _
  %s16 = ssub.s32 1, %s14
  %s17 = scalar_select 0, %s16, %s14
  $region1: #{tpu_custom_call.1} parent=0
    #allocation2 [shape = 'u8[3072]{0}', space=vmem, size = 0xc00, scoped, tag = 'input window, operand 1, single buffered']
    #allocation3 [shape = 's32[1]{0}', space=sflag, size = 0x4, scoped, tag = 'scoped memory for tpu_custom_call.1']
    #allocation4 [shape = 's32[1]{0}', space=sflag, size = 0x4, scoped, tag = 'scoped memory for tpu_custom_call.1']
    #allocation5 [shape = 'u8[512]{0}', space=vmem, size = 0x400, scoped, tag = 'input window, operand 2, single buffered']
    #allocation6 [shape = 's32[1]{0}', space=sflag, size = 0x4, scoped, tag = 'scoped memory for tpu_custom_call.1']
    #allocation7 [shape = 'u8[24576]{0}', space=vmem, size = 0x6000, scoped, tag = 'input window, operand 3, single buffered']
    #allocation8 [shape = 'u8[512]{0}', space=vmem, size = 0x400, scoped, tag = 'input window, operand 4, single buffered']
    #allocation9 [shape = 's32[1]{0}', space=sflag, size = 0x4, scoped, tag = 'scoped memory for tpu_custom_call.1']
    #allocation10 [shape = 'u8[49152]{0}', space=vmem, size = 0xc000, scoped, tag = 'input window, operand 5, single buffered']
    #allocation11 [shape = 'u8[512]{0}', space=vmem, size = 0x400, scoped, tag = 'input window, operand 6, single buffered']
    #allocation12 [shape = 's32[1]{0}', space=sflag, size = 0x4, scoped, tag = 'scoped memory for tpu_custom_call.1']
    #allocation13 [shape = 'u8[196608]{0}', space=vmem, size = 0x30000, scoped, tag = 'input window, operand 7, single buffered']
    #allocation14 [shape = 'u8[1024]{0}', space=vmem, size = 0x400, scoped, tag = 'input window, operand 8, single buffered']
    #allocation15 [shape = 's32[1]{0}', space=sflag, size = 0x4, scoped, tag = 'scoped memory for tpu_custom_call.1']
    #allocation16 [shape = 'u8[1310720]{0}', space=vmem, size = 0x140000, scoped, tag = 'input window, operand 9, single buffered']
    #allocation17 [shape = 'u8[2048]{0}', space=vmem, size = 0x800, scoped, tag = 'input window, operand 10, single buffered']
    #allocation18 [shape = 's32[1]{0}', space=sflag, size = 0x4, scoped, tag = 'scoped memory for tpu_custom_call.1']
    #allocation19 [shape = 'u8[131072]{0}', space=vmem, size = 0x20000, scoped, tag = 'input window, operand 11, single buffered']
    #allocation20 [shape = 'u8[512]{0}', space=vmem, size = 0x400, scoped, tag = 'input window, operand 12, single buffered']
    #allocation21 [shape = 's32[1]{0}', space=sflag, size = 0x4, scoped, tag = 'scoped memory for tpu_custom_call.1']
    #allocation22 [shape = 'u8[1024]{0}', space=vmem, size = 0x400, scoped, tag = 'output window, operand 0, single buffered']
    %18 = vsyncpa [#allocation3], 0
    %19 = vsyncpa [#allocation6], 0
    %20 = vsyncpa [#allocation9], 0
    %21 = vsyncpa [#allocation12], 0
    %22 = vsyncpa [#allocation15], 0
    %23 = vsyncpa [#allocation18], 0
    %24 = vsyncpa [#allocation21], 0
    %25 = vsyncpa [#allocation4], 0
    // Predicated region
    $region2: #{tpu_custom_call.1} parent=1 // pred_check
      _
    $region3: #{tpu_custom_call.1} parent=1 // pred_check_branch
      %27 = sbr.rel (0) target = $region5
    $region4: #{tpu_custom_call.1} parent=1 // pred_region
      _
    $region5: #{tpu_custom_call.1} parent=1 // pred_fallthru
      _
    // Predicated region
    $region6: #{tpu_custom_call.1} parent=1 // pred_check
      _
    $region7: #{tpu_custom_call.1} parent=1 // pred_check_branch
      %29 = sbr.rel (0) target = $region9
    $region8: #{tpu_custom_call.1} parent=1 // pred_region
      %s31 = ssub.s32 96, 96
      %32 = vsyncadd [#allocation3], %s31
      %s33 = sshll.u32 [#allocation2], 4
      %s34 = int_to_ptr.vmem [resolvable:$true] %s33
      %39 = dma.hbm_to_vmem [thread:$0]  %s1, 96, %s34, [#allocation3], 32, 32, 2
    $region9: #{tpu_custom_call.1} parent=1 // pred_fallthru
      _
    // Predicated region
    $region10: #{tpu_custom_call.1} parent=1 // pred_check
      _
    $region11: #{tpu_custom_call.1} parent=1 // pred_check_branch
      %41 = sbr.rel (0) target = $region13
    $region12: #{tpu_custom_call.1} parent=1 // pred_region
      %s43 = ssub.s32 16, 16
      %44 = vsyncadd [#allocation6], %s43
      %s46 = sshll.u32 [#allocation5], 4
      %s47 = int_to_ptr.vmem [resolvable:$true] %s46
      %49 = dma.hbm_to_vmem [thread:$0]  %s2, 16, %s47, [#allocation6]
    $region13: #{tpu_custom_call.1} parent=1 // pred_fallthru
      _
    // Predicated region
    $region14: #{tpu_custom_call.1} parent=1 // pred_check
      _
    $region15: #{tpu_custom_call.1} parent=1 // pred_check_branch
      %51 = sbr.rel (0) target = $region17
    $region16: #{tpu_custom_call.1} parent=1 // pred_region
      %s53 = ssub.s32 768, 768
      %54 = vsyncadd [#allocation6], %s53
      %s55 = sshll.u32 [#allocation7], 4
      %s56 = int_to_ptr.vmem [resolvable:$true] %s55
      %61 = dma.hbm_to_vmem [thread:$0]  %s3, 768, %s56, [#allocation6], 64, 64, 4
    $region17: #{tpu_custom_call.1} parent=1 // pred_fallthru
      _
    // Predicated region
    $region18: #{tpu_custom_call.1} parent=1 // pred_check
      _
    $region19: #{tpu_custom_call.1} parent=1 // pred_check_branch
      %63 = sbr.rel (0) target = $region21
    $region20: #{tpu_custom_call.1} parent=1 // pred_region
      %s65 = ssub.s32 16, 16
      %66 = vsyncadd [#allocation9], %s65
      %s68 = sshll.u32 [#allocation8], 4
      %s69 = int_to_ptr.vmem [resolvable:$true] %s68
      %71 = dma.hbm_to_vmem [thread:$0]  %s4, 16, %s69, [#allocation9]
    $region21: #{tpu_custom_call.1} parent=1 // pred_fallthru
      _
    // Predicated region
    $region22: #{tpu_custom_call.1} parent=1 // pred_check
      _
    $region23: #{tpu_custom_call.1} parent=1 // pred_check_branch
      %73 = sbr.rel (0) target = $region25
    $region24: #{tpu_custom_call.1} parent=1 // pred_region
      %s75 = ssub.s32 1536, 1536
      %76 = vsyncadd [#allocation9], %s75
      %s77 = sshll.u32 [#allocation10], 4
      %s78 = int_to_ptr.vmem [resolvable:$true] %s77
      %83 = dma.hbm_to_vmem [thread:$0]  %s5, 1536, %s78, [#allocation9], 64, 64, 4
    $region25: #{tpu_custom_call.1} parent=1 // pred_fallthru
      _
    // Predicated region
    $region26: #{tpu_custom_call.1} parent=1 // pred_check
      _
    $region27: #{tpu_custom_call.1} parent=1 // pred_check_branch
      %85 = sbr.rel (0) target = $region29
    $region28: #{tpu_custom_call.1} parent=1 // pred_region
      %s87 = ssub.s32 16, 16
      %88 = vsyncadd [#allocation12], %s87
      %s90 = sshll.u32 [#allocation11], 4
      %s91 = int_to_ptr.vmem [resolvable:$true] %s90
      %93 = dma.hbm_to_vmem [thread:$0]  %s6, 16, %s91, [#allocation12]
    $region29: #{tpu_custom_call.1} parent=1 // pred_fallthru
      _
    // Predicated region
    $region30: #{tpu_custom_call.1} parent=1 // pred_check
      _
    $region31: #{tpu_custom_call.1} parent=1 // pred_check_branch
      %95 = sbr.rel (0) target = $region33
    $region32: #{tpu_custom_call.1} parent=1 // pred_region
      %s97 = ssub.s32 6144, 6144
      %98 = vsyncadd [#allocation12], %s97
      %s99 = sshll.u32 [#allocation13], 4
      %s100 = int_to_ptr.vmem [resolvable:$true] %s99
      %105 = dma.hbm_to_vmem [thread:$0]  %s7, 6144, %s100, [#allocation12], 128, 128, 8
    $region33: #{tpu_custom_call.1} parent=1 // pred_fallthru
      _
    // Predicated region
    $region34: #{tpu_custom_call.1} parent=1 // pred_check
      _
    $region35: #{tpu_custom_call.1} parent=1 // pred_check_branch
      %107 = sbr.rel (0) target = $region37
    $region36: #{tpu_custom_call.1} parent=1 // pred_region
      %s109 = ssub.s32 32, 32
      %110 = vsyncadd [#allocation15], %s109
      %s112 = sshll.u32 [#allocation14], 4
      %s113 = int_to_ptr.vmem [resolvable:$true] %s112
      %115 = dma.hbm_to_vmem [thread:$0]  %s8, 32, %s113, [#allocation15]
    $region37: #{tpu_custom_call.1} parent=1 // pred_fallthru
      _
    // Predicated region
    $region38: #{tpu_custom_call.1} parent=1 // pred_check
      _
    $region39: #{tpu_custom_call.1} parent=1 // pred_check_branch
      %117 = sbr.rel (0) target = $region41
    $region40: #{tpu_custom_call.1} parent=1 // pred_region
      %s119 = ssub.s32 40960, 40960
      %120 = vsyncadd [#allocation15], %s119
      %s121 = sshll.u32 [#allocation16], 4
      %s122 = int_to_ptr.vmem [resolvable:$true] %s121
      %127 = dma.hbm_to_vmem [thread:$0]  %s9, 40960, %s122, [#allocation15], 256, 256, 16
    $region41: #{tpu_custom_call.1} parent=1 // pred_fallthru
      _
    // Predicated region
    $region42: #{tpu_custom_call.1} parent=1 // pred_check
      _
    $region43: #{tpu_custom_call.1} parent=1 // pred_check_branch
      %129 = sbr.rel (0) target = $region45
    $region44: #{tpu_custom_call.1} parent=1 // pred_region
      %s131 = ssub.s32 64, 64
      %132 = vsyncadd [#allocation18], %s131
      %s134 = sshll.u32 [#allocation17], 4
      %s135 = int_to_ptr.vmem [resolvable:$true] %s134
      %137 = dma.hbm_to_vmem [thread:$0]  %s10, 64, %s135, [#allocation18]
    $region45: #{tpu_custom_call.1} parent=1 // pred_fallthru
      _
    // Predicated region
    $region46: #{tpu_custom_call.1} parent=1 // pred_check
      _
    $region47: #{tpu_custom_call.1} parent=1 // pred_check_branch
      %139 = sbr.rel (0) target = $region49
    $region48: #{tpu_custom_call.1} parent=1 // pred_region
      %s141 = ssub.s32 4096, 4096
      %142 = vsyncadd [#allocation18], %s141
      %s143 = sshll.u32 [#allocation19], 4
      %s144 = int_to_ptr.vmem [resolvable:$true] %s143
      %149 = dma.hbm_to_vmem [thread:$0]  %s11, 4096, %s144, [#allocation18], 64, 64, 4
    $region49: #{tpu_custom_call.1} parent=1 // pred_fallthru
      _
    // Predicated region
    $region50: #{tpu_custom_call.1} parent=1 // pred_check
      _
    $region51: #{tpu_custom_call.1} parent=1 // pred_check_branch
      %151 = sbr.rel (0) target = $region53
    $region52: #{tpu_custom_call.1} parent=1 // pred_region
      %s153 = ssub.s32 16, 16
      %154 = vsyncadd [#allocation21], %s153
      %s156 = sshll.u32 [#allocation20], 4
      %s157 = int_to_ptr.vmem [resolvable:$true] %s156
      %159 = dma.hbm_to_vmem [thread:$0]  %s12, 16, %s157, [#allocation21]
    $region53: #{tpu_custom_call.1} parent=1 // pred_fallthru
      _
    // Predicated region
    $region54: #{tpu_custom_call.1} parent=1 // pred_check
      _
    $region55: #{tpu_custom_call.1} parent=1 // pred_check_branch
      %161 = sbr.rel (0) target = $region57
    $region56: #{tpu_custom_call.1} parent=1 // pred_region
      %162 = dma.done [#allocation3], 96
    $region57: #{tpu_custom_call.1} parent=1 // pred_fallthru
      _
    // Predicated region
    $region58: #{tpu_custom_call.1} parent=1 // pred_check
      _
    $region59: #{tpu_custom_call.1} parent=1 // pred_check_branch
      %164 = sbr.rel (0) target = $region61
    $region60: #{tpu_custom_call.1} parent=1 // pred_region
      %165 = dma.done [#allocation6], 16
    $region61: #{tpu_custom_call.1} parent=1 // pred_fallthru
      _
    // Predicated region
    $region62: #{tpu_custom_call.1} parent=1 // pred_check
      _
    $region63: #{tpu_custom_call.1} parent=1 // pred_check_branch
      %167 = sbr.rel (0) target = $region65
    $region64: #{tpu_custom_call.1} parent=1 // pred_region
      %168 = dma.done [#allocation6], 768
    $region65: #{tpu_custom_call.1} parent=1 // pred_fallthru
      _
    // Predicated region
    $region66: #{tpu_custom_call.1} parent=1 // pred_check
      _
    $region67: #{tpu_custom_call.1} parent=1 // pred_check_branch
      %170 = sbr.rel (0) target = $region69
    $region68: #{tpu_custom_call.1} parent=1 // pred_region
      %171 = dma.done [#allocation9], 16
    $region69: #{tpu_custom_call.1} parent=1 // pred_fallthru
      _
    // Predicated region
    $region70: #{tpu_custom_call.1} parent=1 // pred_check
      _
    $region71: #{tpu_custom_call.1} parent=1 // pred_check_branch
      %173 = sbr.rel (0) target = $region73
    $region72: #{tpu_custom_call.1} parent=1 // pred_region
      %174 = dma.done [#allocation9], 1536
    $region73: #{tpu_custom_call.1} parent=1 // pred_fallthru
      _
    // Predicated region
    $region74: #{tpu_custom_call.1} parent=1 // pred_check
      _
    $region75: #{tpu_custom_call.1} parent=1 // pred_check_branch
      %176 = sbr.rel (0) target = $region77
    $region76: #{tpu_custom_call.1} parent=1 // pred_region
      %177 = dma.done [#allocation12], 16
    $region77: #{tpu_custom_call.1} parent=1 // pred_fallthru
      _
    // Predicated region
    $region78: #{tpu_custom_call.1} parent=1 // pred_check
      _
    $region79: #{tpu_custom_call.1} parent=1 // pred_check_branch
      %179 = sbr.rel (0) target = $region81
    $region80: #{tpu_custom_call.1} parent=1 // pred_region
      %180 = dma.done [#allocation12], 6144
    $region81: #{tpu_custom_call.1} parent=1 // pred_fallthru
      _
    // Predicated region
    $region82: #{tpu_custom_call.1} parent=1 // pred_check
      _
    $region83: #{tpu_custom_call.1} parent=1 // pred_check_branch
      %182 = sbr.rel (0) target = $region85
    $region84: #{tpu_custom_call.1} parent=1 // pred_region
      %183 = dma.done [#allocation15], 32
    $region85: #{tpu_custom_call.1} parent=1 // pred_fallthru
      _
    // Predicated region
    $region86: #{tpu_custom_call.1} parent=1 // pred_check
      _
    $region87: #{tpu_custom_call.1} parent=1 // pred_check_branch
      %185 = sbr.rel (0) target = $region89
    $region88: #{tpu_custom_call.1} parent=1 // pred_region
      %186 = dma.done [#allocation15], 40960
    $region89: #{tpu_custom_call.1} parent=1 // pred_fallthru
      _
    // Predicated region
    $region90: #{tpu_custom_call.1} parent=1 // pred_check
      _
    $region91: #{tpu_custom_call.1} parent=1 // pred_check_branch
      %188 = sbr.rel (0) target = $region93
    $region92: #{tpu_custom_call.1} parent=1 // pred_region
      %189 = dma.done [#allocation18], 64
    $region93: #{tpu_custom_call.1} parent=1 // pred_fallthru
      _
    // Predicated region
    $region94: #{tpu_custom_call.1} parent=1 // pred_check
      _
    $region95: #{tpu_custom_call.1} parent=1 // pred_check_branch
      %191 = sbr.rel (0) target = $region97
    $region96: #{tpu_custom_call.1} parent=1 // pred_region
      %192 = dma.done [#allocation18], 4096
    $region97: #{tpu_custom_call.1} parent=1 // pred_fallthru
      _
    // Predicated region
    $region98: #{tpu_custom_call.1} parent=1 // pred_check
      _
    $region99: #{tpu_custom_call.1} parent=1 // pred_check_branch
      %194 = sbr.rel (0) target = $region101
    $region100: #{tpu_custom_call.1} parent=1 // pred_region
      %195 = dma.done [#allocation21], 16
    $region101: #{tpu_custom_call.1} parent=1 // pred_fallthru
      _
    %v197 = vld [vmem:[%s0] sm:$0xff]
    %v198 = vld [vmem:[%s0 + $0x8] sm:$0xff]
    %v199 = vld [vmem:[%s0 + $0x10] sm:$0xff]
    %v200 = vld [vmem:[%s0 + $0x18] sm:$0xff]
    %v201 = vlaneseq
    %v202 = vshrl.u32 %v201, 7
    %v203 = vadd.s32 %v202, 8
    %v204 = vadd.s32 %v202, 16
    %v205 = vadd.s32 %v202, 24
    %vm206 = vcmp.lt.s32.totalorder %v202, 0
    %v207 = vsub.s32 0, %v202
    %v208 = vsel %vm206, %v207, %v202
    %v209 = vshrl.u32 %v208, 4
    %v210 = vand.u32 %v208, 15
    %v211 = vsub.s32 0, %v210
    %v212 = vsel %vm206, %v211, %v210
    %vm213 = vcmp.lt.s32.totalorder %v203, 0
    %v214 = vsub.s32 0, %v203
    %v215 = vsel %vm213, %v214, %v203
    %v216 = vshrl.u32 %v215, 4
    %v217 = vand.u32 %v215, 15
    %v218 = vsub.s32 0, %v217
    %v219 = vsel %vm213, %v218, %v217
    %vm220 = vcmp.lt.s32.totalorder %v204, 0
    %v221 = vsub.s32 0, %v204
    %v222 = vsel %vm220, %v221, %v204
    %v223 = vshrl.u32 %v222, 4
    %v224 = vand.u32 %v222, 15
    %v225 = vsub.s32 0, %v224
    %v226 = vsel %vm220, %v225, %v224
    %vm227 = vcmp.lt.s32.totalorder %v205, 0
    %v228 = vsub.s32 0, %v205
    %v229 = vsel %vm227, %v228, %v205
    %v230 = vshrl.u32 %v229, 4
    %v231 = vand.u32 %v229, 15
    %v232 = vsub.s32 0, %v231
    %v233 = vsel %vm227, %v232, %v231
    %vm234 = vcmp.ne.s32.totalorder %v212, 0
    %vm235 = vcmp.ne.s32.totalorder %v219, 0
    %vm236 = vcmp.ne.s32.totalorder %v226, 0
    %vm237 = vcmp.ne.s32.totalorder %v233, 0
    %vm238 = vcmp.lt.s32.totalorder %v212, 0
    %vm239 = vcmp.lt.s32.totalorder %v219, 0
    %vm240 = vcmp.lt.s32.totalorder %v226, 0
    %vm241 = vcmp.lt.s32.totalorder %v233, 0
    %vm242 = vmand %vm238, %vm234
    %vm243 = vmand %vm239, %vm235
    %vm244 = vmand %vm240, %vm236
    %vm245 = vmand %vm241, %vm237
    %v246 = vadd.s32 %v212, 16
    %v247 = vadd.s32 %v219, 16
    %v248 = vadd.s32 %v226, 16
    %v249 = vadd.s32 %v233, 16
    %v250 = vsel %vm242, %v246, %v212
    %v251 = vsel %vm243, %v247, %v219
    %v252 = vsel %vm244, %v248, %v226
    %v253 = vsel %vm245, %v249, %v233
    %vm254 = vcmp.eq.s32.totalorder %v250, 0
    %vm255 = vcmp.eq.s32.totalorder %v251, 0
    %vm256 = vcmp.eq.s32.totalorder %v252, 0
    %vm257 = vcmp.eq.s32.totalorder %v253, 0
    %vm258 = vcmp.eq.s32.totalorder %v250, 15
    %vm259 = vcmp.eq.s32.totalorder %v251, 15
    %vm260 = vcmp.eq.s32.totalorder %v252, 15
    %vm261 = vcmp.eq.s32.totalorder %v253, 15
    %v262 = vrot.slane %v197, 7
    %v263 = vrot.slane %v198, 7
    %v264 = vrot.slane %v199, 7
    %v265 = vrot.slane %v200, 7
    %vm266 = vcmp.lt.s32.totalorder %v202, 1
    %v267 = vsel %vm266, %v264, %v265
    %v268 = vsel %vm266, %v263, %v264
    %v269 = vsel %vm266, %v262, %v263
    %v270 = vsel %vm266, %v265, %v262
    %v271 = vsel %vm254, 1, 0
    %v272 = vsel %vm255, 1, 0
    %v273 = vsel %vm256, 1, 0
    %v274 = vsel %vm257, 1, 0
    %vm275 = vcmp.eq.s32.totalorder %v271, 1
    %vm276 = vcmp.eq.s32.totalorder %v272, 1
    %vm277 = vcmp.eq.s32.totalorder %v273, 1
    %vm278 = vcmp.eq.s32.totalorder %v274, 1
    %v279 = vsel %vm275, 0.0, %v270
    %v280 = vsel %vm276, 0.0, %v269
    %v281 = vsel %vm277, 0.0, %v268
    %v282 = vsel %vm278, 0.0, %v267
    %v283 = vrot.slane %v197, 1
    %v284 = vrot.slane %v198, 1
    %v285 = vrot.slane %v199, 1
    %v286 = vrot.slane %v200, 1
    %vm287 = vcmp.lt.s32.totalorder %v202, 7
    %v288 = vsel %vm287, %v285, %v286
    %v289 = vsel %vm287, %v284, %v285
    %v290 = vsel %vm287, %v283, %v284
    %v291 = vsel %vm287, %v286, %v283
    %v292 = vsel %vm258, 1, 0
    %v293 = vsel %vm259, 1, 0
    %v294 = vsel %vm260, 1, 0
    %v295 = vsel %vm261, 1, 0
    %vm296 = vcmp.eq.s32.totalorder %v292, 1
    %vm297 = vcmp.eq.s32.totalorder %v293, 1
    %vm298 = vcmp.eq.s32.totalorder %v294, 1
    %vm299 = vcmp.eq.s32.totalorder %v295, 1
    %v300 = vsel %vm296, 0.0, %v290
    %v301 = vsel %vm297, 0.0, %v289
    %v302 = vsel %vm298, 0.0, %v288
    %v303 = vsel %vm299, 0.0, %v291
    %v304 = vpack.c.bf16 %v280, %v279
    %v305 = vpack.c.bf16 %v282, %v281
    %v306 = vld [vmem:[#allocation2] sm:$0x3]
    %v307 = vpack.c.bf16 %v198, %v197
    %v308 = vpack.c.bf16 %v200, %v199
    %s309 = scalar_lea.vmem [#allocation2], 2
    %v310 = vld [vmem:[%s309] sm:$0x3]
    %vm311 = vcmask 31744
    %v313 = vsel %vm311, %v307, 0
    %v316 = vsel %vm311, %v308, 0
    %vm318 = vcmask 1041408
    %v320 = vsel %vm318, %v310, 0
    %322 = vmatprep.subr.bf16.mxu0 0
    %323 = vmatpush1.bf16.msra.mxu0 %v320
    %324 = vmatprep.subr.bf16.mxu0 0
    %325 = vmatpush1.bf16.msra.mxu0 0
    %326 = vmatprep.subr.bf16.mxu0 0
    %327 = vmatpush1.bf16.msra.mxu0 0
    %328 = vmatprep.subr.bf16.mxu0 0
    %329 = vmatpush1.bf16.msra.mxu0 0
    %330 = vmatprep.subr.bf16.mxu0 0
    %331 = vmatpush1.bf16.msra.mxu0 0
    %332 = vmatprep.subr.bf16.mxu0 0
    %333 = vmatpush1.bf16.msra.mxu0 0
    %334 = vmatprep.subr.bf16.mxu0 0
    %335 = vmatpush1.bf16.msra.mxu0 0
    %336 = vmatprep.subr.bf16.mxu0 0
    %337 = vmatpush1.bf16.msra.mxu0 0
    %338 = vmatprep.subr.bf16.mxu0 0
    %339 = vmatpush1.bf16.msra.mxu0 0
    %340 = vmatprep.subr.bf16.mxu0 0
    %341 = vmatpush1.bf16.msra.mxu0 0
    %342 = vmatprep.subr.bf16.mxu0 0
    %343 = vmatpush1.bf16.msra.mxu0 0
    %344 = vmatprep.subr.bf16.mxu0 0
    %345 = vmatpush1.bf16.msra.mxu0 0
    %346 = vmatprep.subr.bf16.mxu0 0
    %347 = vmatpush1.bf16.msra.mxu0 0
    %348 = vmatprep.subr.bf16.mxu0 0
    %349 = vmatpush1.bf16.msra.mxu0 0
    %350 = vmatprep.subr.bf16.mxu0 0
    %351 = vmatpush1.bf16.msra.mxu0 0
    %352 = vmatprep.subr.bf16.mxu0 0
    %353 = vmatpush1.bf16.msra.mxu0 0
    %354 = vmatprep.mubr.bf16.mxu0 0
    %355 = vmatmul.mubr.bf16.gmra.mrb[0].mxu0 %v313
    %v356 = vpop.f32.mrb[0].mxu0
    %v357 = vadd.f32 0.0, %v356
    %v358 = vpop.f32.mrb[0].mxu0
    %v359 = vpop.f32.mrb[0].mxu0
    %v360 = vadd.f32 0.0, %v359
    %v361 = vpop.f32.mrb[0].mxu0
    %362 = vmatprep.mubr.bf16.mxu0 0
    %363 = vmatmul.mubr.bf16.gmra.mrb[0].mxu0 %v316
    %v364 = vpop.f32.mrb[0].mxu0
    %v365 = vadd.f32 0.0, %v364
    %v366 = vpop.f32.mrb[0].mxu0
    %v367 = vpop.f32.mrb[0].mxu0
    %v368 = vadd.f32 0.0, %v367
    %v369 = vpop.f32.mrb[0].mxu0
    %370 = vdwg.mxu0
    %v372 = vsel %vm311, %v304, 0
    %v375 = vsel %vm311, %v305, 0
    %v378 = vsel %vm318, %v306, 0
    %380 = vmatprep.subr.bf16.mxu0 0
    %381 = vmatpush1.bf16.msra.mxu0 %v378
    %382 = vmatprep.subr.bf16.mxu0 0
    %383 = vmatpush1.bf16.msra.mxu0 0
    %384 = vmatprep.subr.bf16.mxu0 0
    %385 = vmatpush1.bf16.msra.mxu0 0
    %386 = vmatprep.subr.bf16.mxu0 0
    %387 = vmatpush1.bf16.msra.mxu0 0
    %388 = vmatprep.subr.bf16.mxu0 0
    %389 = vmatpush1.bf16.msra.mxu0 0
    %390 = vmatprep.subr.bf16.mxu0 0
    %391 = vmatpush1.bf16.msra.mxu0 0
    %392 = vmatprep.subr.bf16.mxu0 0
    %393 = vmatpush1.bf16.msra.mxu0 0
    %394 = vmatprep.subr.bf16.mxu0 0
    %395 = vmatpush1.bf16.msra.mxu0 0
    %396 = vmatprep.subr.bf16.mxu0 0
    %397 = vmatpush1.bf16.msra.mxu0 0
    %398 = vmatprep.subr.bf16.mxu0 0
    %399 = vmatpush1.bf16.msra.mxu0 0
    %400 = vmatprep.subr.bf16.mxu0 0
    %401 = vmatpush1.bf16.msra.mxu0 0
    %402 = vmatprep.subr.bf16.mxu0 0
    %403 = vmatpush1.bf16.msra.mxu0 0
    %404 = vmatprep.subr.bf16.mxu0 0
    %405 = vmatpush1.bf16.msra.mxu0 0
    %406 = vmatprep.subr.bf16.mxu0 0
    %407 = vmatpush1.bf16.msra.mxu0 0
    %408 = vmatprep.subr.bf16.mxu0 0
    %409 = vmatpush1.bf16.msra.mxu0 0
    %410 = vmatprep.subr.bf16.mxu0 0
    %411 = vmatpush1.bf16.msra.mxu0 0
    %412 = vmatprep.mubr.bf16.mxu0 0
    %413 = vmatmul.mubr.bf16.gmra.mrb[0].mxu0 %v372
    %v414 = vpop.f32.mrb[0].mxu0
    %v415 = vadd.f32 %v357, %v414
    %v416 = vpop.f32.mrb[0].mxu0
    %v417 = vpop.f32.mrb[0].mxu0
    %v418 = vadd.f32 %v360, %v417
    %v419 = vpop.f32.mrb[0].mxu0
    %420 = vmatprep.mubr.bf16.mxu0 0
    %421 = vmatmul.mubr.bf16.gmra.mrb[0].mxu0 %v375
    %v422 = vpop.f32.mrb[0].mxu0
    %v423 = vadd.f32 %v365, %v422
    %v424 = vpop.f32.mrb[0].mxu0
    %v425 = vpop.f32.mrb[0].mxu0
    %v426 = vadd.f32 %v368, %v425
    %v427 = vpop.f32.mrb[0].mxu0
    %428 = vdwg.mxu0
    %v429 = vpack.c.bf16 %v301, %v300
    %v430 = vpack.c.bf16 %v303, %v302
    %s431 = scalar_lea.vmem [#allocation2], 4
    %v432 = vld [vmem:[%s431] sm:$0x3]
    %v434 = vsel %vm311, %v429, 0
    %v437 = vsel %vm311, %v430, 0
    %v440 = vsel %vm318, %v432, 0
    %442 = vmatprep.subr.bf16.mxu0 0
    %443 = vmatpush1.bf16.msra.mxu0 %v440
    %444 = vmatprep.subr.bf16.mxu0 0
    %445 = vmatpush1.bf16.msra.mxu0 0
    %446 = vmatprep.subr.bf16.mxu0 0
    %447 = vmatpush1.bf16.msra.mxu0 0
    %448 = vmatprep.subr.bf16.mxu0 0
    %449 = vmatpush1.bf16.msra.mxu0 0
    %450 = vmatprep.subr.bf16.mxu0 0
    %451 = vmatpush1.bf16.msra.mxu0 0
    %452 = vmatprep.subr.bf16.mxu0 0
    %453 = vmatpush1.bf16.msra.mxu0 0
    %454 = vmatprep.subr.bf16.mxu0 0
    %455 = vmatpush1.bf16.msra.mxu0 0
    %456 = vmatprep.subr.bf16.mxu0 0
    %457 = vmatpush1.bf16.msra.mxu0 0
    %458 = vmatprep.subr.bf16.mxu0 0
    %459 = vmatpush1.bf16.msra.mxu0 0
    %460 = vmatprep.subr.bf16.mxu0 0
    %461 = vmatpush1.bf16.msra.mxu0 0
    %462 = vmatprep.subr.bf16.mxu0 0
    %463 = vmatpush1.bf16.msra.mxu0 0
    %464 = vmatprep.subr.bf16.mxu0 0
    %465 = vmatpush1.bf16.msra.mxu0 0
    %466 = vmatprep.subr.bf16.mxu0 0
    %467 = vmatpush1.bf16.msra.mxu0 0
    %468 = vmatprep.subr.bf16.mxu0 0
    %469 = vmatpush1.bf16.msra.mxu0 0
    %470 = vmatprep.subr.bf16.mxu0 0
    %471 = vmatpush1.bf16.msra.mxu0 0
    %472 = vmatprep.subr.bf16.mxu0 0
    %473 = vmatpush1.bf16.msra.mxu0 0
    %474 = vmatprep.mubr.bf16.mxu0 0
    %475 = vmatmul.mubr.bf16.gmra.mrb[0].mxu0 %v434
    %v476 = vpop.f32.mrb[0].mxu0
    %v477 = vadd.f32 0.0, %v476
    %v478 = vpop.f32.mrb[0].mxu0
    %v479 = vpop.f32.mrb[0].mxu0
    %v480 = vadd.f32 0.0, %v479
    %v481 = vpop.f32.mrb[0].mxu0
    %482 = vmatprep.mubr.bf16.mxu0 0
    %483 = vmatmul.mubr.bf16.gmra.mrb[0].mxu0 %v437
    %v484 = vpop.f32.mrb[0].mxu0
    %v485 = vadd.f32 0.0, %v484
    %v486 = vpop.f32.mrb[0].mxu0
    %v487 = vpop.f32.mrb[0].mxu0
    %v488 = vadd.f32 0.0, %v487
    %v489 = vpop.f32.mrb[0].mxu0
    %490 = vdwg.mxu0
    %v491 = vadd.f32 %v415, %v477
    %v492 = vadd.f32 %v418, %v480
    %v493 = vadd.f32 %v423, %v485
    %v494 = vadd.f32 %v426, %v488
    %v495 = vld [vmem:[#allocation5] sm:$0x1]
    %v497 = vlaneseq
    %v498 = vshrl.u32 %v497, 7
    %v499 = vsub.s32 0, %v498
    %v500 = vrot.slane %v495, %v499
    %v502 = vadd.f32 %v491, %v500
    %v503 = vadd.f32 %v492, %v500
    %v504 = vadd.f32 %v493, %v500
    %v505 = vadd.f32 %v494, %v500
    %v506 = vmax.f32 %v502, 0.0
    %v507 = vmax.f32 %v503, 0.0
    %v508 = vmax.f32 %v504, 0.0
    %v509 = vmax.f32 %v505, 0.0
    %v510 = vrot.slane %v506, 7
    %v511 = vrot.slane %v507, 7
    %v512 = vrot.slane %v508, 7
    %v513 = vrot.slane %v509, 7
    %v514 = vsel %vm266, %v512, %v513
    %v515 = vsel %vm266, %v511, %v512
    %v516 = vsel %vm266, %v510, %v511
    %v517 = vsel %vm266, %v513, %v510
    %v518 = vsel %vm275, 0.0, %v517
    %v519 = vsel %vm276, 0.0, %v516
    %v520 = vsel %vm277, 0.0, %v515
    %v521 = vsel %vm278, 0.0, %v514
    %v522 = vrot.slane %v506, 1
    %v523 = vrot.slane %v507, 1
    %v524 = vrot.slane %v508, 1
    %v525 = vrot.slane %v509, 1
    %v526 = vsel %vm287, %v524, %v525
    %v527 = vsel %vm287, %v523, %v524
    %v528 = vsel %vm287, %v522, %v523
    %v529 = vsel %vm287, %v525, %v522
    %v530 = vsel %vm296, 0.0, %v528
    %v531 = vsel %vm297, 0.0, %v527
    %v532 = vsel %vm298, 0.0, %v526
    %v533 = vsel %vm299, 0.0, %v529
    %v534 = vpack.c.bf16 %v519, %v518
    %v535 = vpack.c.bf16 %v521, %v520
    %v536 = vld [vmem:[#allocation7] sm:$0xf]
    %v537 = vld [vmem:[#allocation7 + $0x4] sm:$0xf]
    %v538 = vld [vmem:[#allocation7 + $0x8] sm:$0xf]
    %v539 = vld [vmem:[#allocation7 + $0xc] sm:$0xf]
    %v540 = vpack.c.bf16 %v507, %v506
    %v541 = vpack.c.bf16 %v509, %v508
    %s542 = scalar_lea.vmem [#allocation7], 16
    %v543 = vld [vmem:[%s542] sm:$0xf]
    %v544 = vld [vmem:[%s542 + $0x4] sm:$0xf]
    %v545 = vld [vmem:[%s542 + $0x8] sm:$0xf]
    %v546 = vld [vmem:[%s542 + $0xc] sm:$0xf]
    %v551 = vunpack.c.l.b16 %v543
    %v552 = vunpack.c.l.b16 %v544
    %v553 = vunpack.c.l.b16 %v545
    %v554 = vunpack.c.l.b16 %v546
    %v555 = vpack.c.b16 %v552, %v551
    %v556 = vpack.c.b16 %v554, %v553
    %vm559 = vcmask 261120
    %v561 = vsel %vm559, %v540, 0
    %v564 = vsel %vm559, %v541, 0
    %566 = vmatprep.subr.bf16.mxu0 0
    %567 = vmatpush1.bf16.msra.mxu0 %v555
    %568 = vmatprep.subr.bf16.mxu0 0
    %569 = vmatpush1.bf16.msra.mxu0 %v556
    %570 = vmatprep.subr.bf16.mxu0 0
    %571 = vmatpush1.bf16.msra.mxu0 0
    %572 = vmatprep.subr.bf16.mxu0 0
    %573 = vmatpush1.bf16.msra.mxu0 0
    %574 = vmatprep.subr.bf16.mxu0 0
    %575 = vmatpush1.bf16.msra.mxu0 0
    %576 = vmatprep.subr.bf16.mxu0 0
    %577 = vmatpush1.bf16.msra.mxu0 0
    %578 = vmatprep.subr.bf16.mxu0 0
    %579 = vmatpush1.bf16.msra.mxu0 0
    %580 = vmatprep.subr.bf16.mxu0 0
    %581 = vmatpush1.bf16.msra.mxu0 0
    %582 = vmatprep.subr.bf16.mxu0 0
    %583 = vmatpush1.bf16.msra.mxu0 0
    %584 = vmatprep.subr.bf16.mxu0 0
    %585 = vmatpush1.bf16.msra.mxu0 0
    %586 = vmatprep.subr.bf16.mxu0 0
    %587 = vmatpush1.bf16.msra.mxu0 0
    %588 = vmatprep.subr.bf16.mxu0 0
    %589 = vmatpush1.bf16.msra.mxu0 0
    %590 = vmatprep.subr.bf16.mxu0 0
    %591 = vmatpush1.bf16.msra.mxu0 0
    %592 = vmatprep.subr.bf16.mxu0 0
    %593 = vmatpush1.bf16.msra.mxu0 0
    %594 = vmatprep.subr.bf16.mxu0 0
    %595 = vmatpush1.bf16.msra.mxu0 0
    %596 = vmatprep.subr.bf16.mxu0 0
    %597 = vmatpush1.bf16.msra.mxu0 0
    %598 = vmatprep.mubr.bf16.mxu0 0
    %599 = vmatmul.mubr.bf16.gmra.mrb[0].mxu0 %v561
    %v600 = vpop.f32.mrb[0].mxu0
    %v601 = vadd.f32 0.0, %v600
    %v602 = vpop.f32.mrb[0].mxu0
    %v603 = vpop.f32.mrb[0].mxu0
    %v604 = vadd.f32 0.0, %v603
    %v605 = vpop.f32.mrb[0].mxu0
    %606 = vmatprep.mubr.bf16.mxu0 0
    %607 = vmatmul.mubr.bf16.gmra.mrb[0].mxu0 %v564
    %v608 = vpop.f32.mrb[0].mxu0
    %v609 = vadd.f32 0.0, %v608
    %v610 = vpop.f32.mrb[0].mxu0
    %v611 = vpop.f32.mrb[0].mxu0
    %v612 = vadd.f32 0.0, %v611
    %v613 = vpop.f32.mrb[0].mxu0
    %614 = vdwg.mxu0
    %v619 = vunpack.c.l.b16 %v536
    %v620 = vunpack.c.l.b16 %v537
    %v621 = vunpack.c.l.b16 %v538
    %v622 = vunpack.c.l.b16 %v539
    %v623 = vpack.c.b16 %v620, %v619
    %v624 = vpack.c.b16 %v622, %v621
    %v628 = vsel %vm559, %v534, 0
    %v631 = vsel %vm559, %v535, 0
    %633 = vmatprep.subr.bf16.mxu0 0
    %634 = vmatpush1.bf16.msra.mxu0 %v623
    %635 = vmatprep.subr.bf16.mxu0 0
    %636 = vmatpush1.bf16.msra.mxu0 %v624
    %637 = vmatprep.subr.bf16.mxu0 0
    %638 = vmatpush1.bf16.msra.mxu0 0
    %639 = vmatprep.subr.bf16.mxu0 0
    %640 = vmatpush1.bf16.msra.mxu0 0
    %641 = vmatprep.subr.bf16.mxu0 0
    %642 = vmatpush1.bf16.msra.mxu0 0
    %643 = vmatprep.subr.bf16.mxu0 0
    %644 = vmatpush1.bf16.msra.mxu0 0
    %645 = vmatprep.subr.bf16.mxu0 0
    %646 = vmatpush1.bf16.msra.mxu0 0
    %647 = vmatprep.subr.bf16.mxu0 0
    %648 = vmatpush1.bf16.msra.mxu0 0
    %649 = vmatprep.subr.bf16.mxu0 0
    %650 = vmatpush1.bf16.msra.mxu0 0
    %651 = vmatprep.subr.bf16.mxu0 0
    %652 = vmatpush1.bf16.msra.mxu0 0
    %653 = vmatprep.subr.bf16.mxu0 0
    %654 = vmatpush1.bf16.msra.mxu0 0
    %655 = vmatprep.subr.bf16.mxu0 0
    %656 = vmatpush1.bf16.msra.mxu0 0
    %657 = vmatprep.subr.bf16.mxu0 0
    %658 = vmatpush1.bf16.msra.mxu0 0
    %659 = vmatprep.subr.bf16.mxu0 0
    %660 = vmatpush1.bf16.msra.mxu0 0
    %661 = vmatprep.subr.bf16.mxu0 0
    %662 = vmatpush1.bf16.msra.mxu0 0
    %663 = vmatprep.subr.bf16.mxu0 0
    %664 = vmatpush1.bf16.msra.mxu0 0
    %665 = vmatprep.mubr.bf16.mxu0 0
    %666 = vmatmul.mubr.bf16.gmra.mrb[0].mxu0 %v628
    %v667 = vpop.f32.mrb[0].mxu0
    %v668 = vadd.f32 %v601, %v667
    %v669 = vpop.f32.mrb[0].mxu0
    %v670 = vpop.f32.mrb[0].mxu0
    %v671 = vadd.f32 %v604, %v670
    %v672 = vpop.f32.mrb[0].mxu0
    %673 = vmatprep.mubr.bf16.mxu0 0
    %674 = vmatmul.mubr.bf16.gmra.mrb[0].mxu0 %v631
    %v675 = vpop.f32.mrb[0].mxu0
    %v676 = vadd.f32 %v609, %v675
    %v677 = vpop.f32.mrb[0].mxu0
    %v678 = vpop.f32.mrb[0].mxu0
    %v679 = vadd.f32 %v612, %v678
    %v680 = vpop.f32.mrb[0].mxu0
    %681 = vdwg.mxu0
    %v682 = vpack.c.bf16 %v531, %v530
    %v683 = vpack.c.bf16 %v533, %v532
    %s684 = scalar_lea.vmem [#allocation7], 32
    %v685 = vld [vmem:[%s684] sm:$0xf]
    %v686 = vld [vmem:[%s684 + $0x4] sm:$0xf]
    %v687 = vld [vmem:[%s684 + $0x8] sm:$0xf]
    %v688 = vld [vmem:[%s684 + $0xc] sm:$0xf]
    %v693 = vunpack.c.l.b16 %v685
    %v694 = vunpack.c.l.b16 %v686
    %v695 = vunpack.c.l.b16 %v687
    %v696 = vunpack.c.l.b16 %v688
    %v697 = vpack.c.b16 %v694, %v693
    %v698 = vpack.c.b16 %v696, %v695
    %v702 = vsel %vm559, %v682, 0
    %v705 = vsel %vm559, %v683, 0
    %707 = vmatprep.subr.bf16.mxu0 0
    %708 = vmatpush1.bf16.msra.mxu0 %v697
    %709 = vmatprep.subr.bf16.mxu0 0
    %710 = vmatpush1.bf16.msra.mxu0 %v698
    %711 = vmatprep.subr.bf16.mxu0 0
    %712 = vmatpush1.bf16.msra.mxu0 0
    %713 = vmatprep.subr.bf16.mxu0 0
    %714 = vmatpush1.bf16.msra.mxu0 0
    %715 = vmatprep.subr.bf16.mxu0 0
    %716 = vmatpush1.bf16.msra.mxu0 0
    %717 = vmatprep.subr.bf16.mxu0 0
    %718 = vmatpush1.bf16.msra.mxu0 0
    %719 = vmatprep.subr.bf16.mxu0 0
    %720 = vmatpush1.bf16.msra.mxu0 0
    %721 = vmatprep.subr.bf16.mxu0 0
    %722 = vmatpush1.bf16.msra.mxu0 0
    %723 = vmatprep.subr.bf16.mxu0 0
    %724 = vmatpush1.bf16.msra.mxu0 0
    %725 = vmatprep.subr.bf16.mxu0 0
    %726 = vmatpush1.bf16.msra.mxu0 0
    %727 = vmatprep.subr.bf16.mxu0 0
    %728 = vmatpush1.bf16.msra.mxu0 0
    %729 = vmatprep.subr.bf16.mxu0 0
    %730 = vmatpush1.bf16.msra.mxu0 0
    %731 = vmatprep.subr.bf16.mxu0 0
    %732 = vmatpush1.bf16.msra.mxu0 0
    %733 = vmatprep.subr.bf16.mxu0 0
    %734 = vmatpush1.bf16.msra.mxu0 0
    %735 = vmatprep.subr.bf16.mxu0 0
    %736 = vmatpush1.bf16.msra.mxu0 0
    %737 = vmatprep.subr.bf16.mxu0 0
    %738 = vmatpush1.bf16.msra.mxu0 0
    %739 = vmatprep.mubr.bf16.mxu0 0
    %740 = vmatmul.mubr.bf16.gmra.mrb[0].mxu0 %v702
    %v741 = vpop.f32.mrb[0].mxu0
    %v742 = vadd.f32 0.0, %v741
    %v743 = vpop.f32.mrb[0].mxu0
    %v744 = vpop.f32.mrb[0].mxu0
    %v745 = vadd.f32 0.0, %v744
    %v746 = vpop.f32.mrb[0].mxu0
    %747 = vmatprep.mubr.bf16.mxu0 0
    %748 = vmatmul.mubr.bf16.gmra.mrb[0].mxu0 %v705
    %v749 = vpop.f32.mrb[0].mxu0
    %v750 = vadd.f32 0.0, %v749
    %v751 = vpop.f32.mrb[0].mxu0
    %v752 = vpop.f32.mrb[0].mxu0
    %v753 = vadd.f32 0.0, %v752
    %v754 = vpop.f32.mrb[0].mxu0
    %755 = vdwg.mxu0
    %v756 = vadd.f32 %v668, %v742
    %v757 = vadd.f32 %v671, %v745
    %v758 = vadd.f32 %v676, %v750
    %v759 = vadd.f32 %v679, %v753
    %v760 = vld [vmem:[#allocation8] sm:$0x1]
    %v762 = vlaneseq
    %v763 = vshrl.u32 %v762, 7
    %v764 = vsub.s32 0, %v763
    %v765 = vrot.slane %v760, %v764
    %v767 = vadd.f32 %v756, %v765
    %v768 = vadd.f32 %v757, %v765
    %v769 = vadd.f32 %v758, %v765
    %v770 = vadd.f32 %v759, %v765
    %v771 = vmax.f32 %v767, 0.0
    %v772 = vmax.f32 %v768, 0.0
    %v773 = vmax.f32 %v769, 0.0
    %v774 = vmax.f32 %v770, 0.0
    %v775 = vrot.slane %v771, 7
    %v776 = vrot.slane %v772, 7
    %v777 = vrot.slane %v773, 7
    %v778 = vrot.slane %v774, 7
    %v779 = vsel %vm266, %v777, %v778
    %v780 = vsel %vm266, %v776, %v777
    %v781 = vsel %vm266, %v775, %v776
    %v782 = vsel %vm266, %v778, %v775
    %v783 = vsel %vm275, 0.0, %v782
    %v784 = vsel %vm276, 0.0, %v781
    %v785 = vsel %vm277, 0.0, %v780
    %v786 = vsel %vm278, 0.0, %v779
    %v787 = vrot.slane %v771, 1
    %v788 = vrot.slane %v772, 1
    %v789 = vrot.slane %v773, 1
    %v790 = vrot.slane %v774, 1
    %v791 = vsel %vm287, %v789, %v790
    %v792 = vsel %vm287, %v788, %v789
    %v793 = vsel %vm287, %v787, %v788
    %v794 = vsel %vm287, %v790, %v787
    %v795 = vsel %vm296, 0.0, %v793
    %v796 = vsel %vm297, 0.0, %v792
    %v797 = vsel %vm298, 0.0, %v791
    %v798 = vsel %vm299, 0.0, %v794
    %v799 = vpack.c.bf16 %v784, %v783
    %v800 = vpack.c.bf16 %v786, %v785
    %v801 = vld [vmem:[#allocation10] sm:$0xf]
    %v802 = vld [vmem:[#allocation10 + $0x4] sm:$0xf]
    %v803 = vld [vmem:[#allocation10 + $0x8] sm:$0xf]
    %v804 = vld [vmem:[#allocation10 + $0xc] sm:$0xf]
    %v805 = vld [vmem:[#allocation10 + $0x10] sm:$0xf]
    %v806 = vld [vmem:[#allocation10 + $0x14] sm:$0xf]
    %v807 = vld [vmem:[#allocation10 + $0x18] sm:$0xf]
    %v808 = vld [vmem:[#allocation10 + $0x1c] sm:$0xf]
    %v809 = vpack.c.bf16 %v772, %v771
    %v810 = vpack.c.bf16 %v774, %v773
    %s811 = scalar_lea.vmem [#allocation10], 32
    %v812 = vld [vmem:[%s811] sm:$0xf]
    %v813 = vld [vmem:[%s811 + $0x4] sm:$0xf]
    %v814 = vld [vmem:[%s811 + $0x8] sm:$0xf]
    %v815 = vld [vmem:[%s811 + $0xc] sm:$0xf]
    %v816 = vld [vmem:[%s811 + $0x10] sm:$0xf]
    %v817 = vld [vmem:[%s811 + $0x14] sm:$0xf]
    %v818 = vld [vmem:[%s811 + $0x18] sm:$0xf]
    %v819 = vld [vmem:[%s811 + $0x1c] sm:$0xf]
    %v828 = vunpack.c.l.b16 %v812
    %v829 = vunpack.c.l.b16 %v813
    %v830 = vunpack.c.l.b16 %v814
    %v831 = vunpack.c.l.b16 %v815
    %v832 = vunpack.c.l.b16 %v816
    %v833 = vunpack.c.l.b16 %v817
    %v834 = vunpack.c.l.b16 %v818
    %v835 = vunpack.c.l.b16 %v819
    %v836 = vpack.c.b16 %v829, %v828
    %v837 = vpack.c.b16 %v831, %v830
    %v838 = vpack.c.b16 %v833, %v832
    %v839 = vpack.c.b16 %v835, %v834
    %vm844 = vcmask 523264
    %v846 = vsel %vm844, %v809, 0
    %v849 = vsel %vm844, %v810, 0
    %851 = vmatprep.subr.bf16.mxu0 0
    %852 = vmatpush1.bf16.msra.mxu0 %v836
    %853 = vmatprep.subr.bf16.mxu0 0
    %854 = vmatpush1.bf16.msra.mxu0 %v837
    %855 = vmatprep.subr.bf16.mxu0 0
    %856 = vmatpush1.bf16.msra.mxu0 %v838
    %857 = vmatprep.subr.bf16.mxu0 0
    %858 = vmatpush1.bf16.msra.mxu0 %v839
    %859 = vmatprep.subr.bf16.mxu0 0
    %860 = vmatpush1.bf16.msra.mxu0 0
    %861 = vmatprep.subr.bf16.mxu0 0
    %862 = vmatpush1.bf16.msra.mxu0 0
    %863 = vmatprep.subr.bf16.mxu0 0
    %864 = vmatpush1.bf16.msra.mxu0 0
    %865 = vmatprep.subr.bf16.mxu0 0
    %866 = vmatpush1.bf16.msra.mxu0 0
    %867 = vmatprep.subr.bf16.mxu0 0
    %868 = vmatpush1.bf16.msra.mxu0 0
    %869 = vmatprep.subr.bf16.mxu0 0
    %870 = vmatpush1.bf16.msra.mxu0 0
    %871 = vmatprep.subr.bf16.mxu0 0
    %872 = vmatpush1.bf16.msra.mxu0 0
    %873 = vmatprep.subr.bf16.mxu0 0
    %874 = vmatpush1.bf16.msra.mxu0 0
    %875 = vmatprep.subr.bf16.mxu0 0
    %876 = vmatpush1.bf16.msra.mxu0 0
    %877 = vmatprep.subr.bf16.mxu0 0
    %878 = vmatpush1.bf16.msra.mxu0 0
    %879 = vmatprep.subr.bf16.mxu0 0
    %880 = vmatpush1.bf16.msra.mxu0 0
    %881 = vmatprep.subr.bf16.mxu0 0
    %882 = vmatpush1.bf16.msra.mxu0 0
    %883 = vmatprep.mubr.bf16.mxu0 0
    %884 = vmatmul.mubr.bf16.gmra.mrb[0].mxu0 %v846
    %v885 = vpop.f32.mrb[0].mxu0
    %v886 = vadd.f32 0.0, %v885
    %v887 = vpop.f32.mrb[0].mxu0
    %v888 = vpop.f32.mrb[0].mxu0
    %v889 = vadd.f32 0.0, %v888
    %v890 = vpop.f32.mrb[0].mxu0
    %891 = vmatprep.mubr.bf16.mxu0 0
    %892 = vmatmul.mubr.bf16.gmra.mrb[0].mxu0 %v849
    %v893 = vpop.f32.mrb[0].mxu0
    %v894 = vadd.f32 0.0, %v893
    %v895 = vpop.f32.mrb[0].mxu0
    %v896 = vpop.f32.mrb[0].mxu0
    %v897 = vadd.f32 0.0, %v896
    %v898 = vpop.f32.mrb[0].mxu0
    %899 = vdwg.mxu0
    %v908 = vunpack.c.l.b16 %v801
    %v909 = vunpack.c.l.b16 %v802
    %v910 = vunpack.c.l.b16 %v803
    %v911 = vunpack.c.l.b16 %v804
    %v912 = vunpack.c.l.b16 %v805
    %v913 = vunpack.c.l.b16 %v806
    %v914 = vunpack.c.l.b16 %v807
    %v915 = vunpack.c.l.b16 %v808
    %v916 = vpack.c.b16 %v909, %v908
    %v917 = vpack.c.b16 %v911, %v910
    %v918 = vpack.c.b16 %v913, %v912
    %v919 = vpack.c.b16 %v915, %v914
    %v925 = vsel %vm844, %v799, 0
    %v928 = vsel %vm844, %v800, 0
    %930 = vmatprep.subr.bf16.mxu0 0
    %931 = vmatpush1.bf16.msra.mxu0 %v916
    %932 = vmatprep.subr.bf16.mxu0 0
    %933 = vmatpush1.bf16.msra.mxu0 %v917
    %934 = vmatprep.subr.bf16.mxu0 0
    %935 = vmatpush1.bf16.msra.mxu0 %v918
    %936 = vmatprep.subr.bf16.mxu0 0
    %937 = vmatpush1.bf16.msra.mxu0 %v919
    %938 = vmatprep.subr.bf16.mxu0 0
    %939 = vmatpush1.bf16.msra.mxu0 0
    %940 = vmatprep.subr.bf16.mxu0 0
    %941 = vmatpush1.bf16.msra.mxu0 0
    %942 = vmatprep.subr.bf16.mxu0 0
    %943 = vmatpush1.bf16.msra.mxu0 0
    %944 = vmatprep.subr.bf16.mxu0 0
    %945 = vmatpush1.bf16.msra.mxu0 0
    %946 = vmatprep.subr.bf16.mxu0 0
    %947 = vmatpush1.bf16.msra.mxu0 0
    %948 = vmatprep.subr.bf16.mxu0 0
    %949 = vmatpush1.bf16.msra.mxu0 0
    %950 = vmatprep.subr.bf16.mxu0 0
    %951 = vmatpush1.bf16.msra.mxu0 0
    %952 = vmatprep.subr.bf16.mxu0 0
    %953 = vmatpush1.bf16.msra.mxu0 0
    %954 = vmatprep.subr.bf16.mxu0 0
    %955 = vmatpush1.bf16.msra.mxu0 0
    %956 = vmatprep.subr.bf16.mxu0 0
    %957 = vmatpush1.bf16.msra.mxu0 0
    %958 = vmatprep.subr.bf16.mxu0 0
    %959 = vmatpush1.bf16.msra.mxu0 0
    %960 = vmatprep.subr.bf16.mxu0 0
    %961 = vmatpush1.bf16.msra.mxu0 0
    %962 = vmatprep.mubr.bf16.mxu0 0
    %963 = vmatmul.mubr.bf16.gmra.mrb[0].mxu0 %v925
    %v964 = vpop.f32.mrb[0].mxu0
    %v965 = vadd.f32 %v886, %v964
    %v966 = vpop.f32.mrb[0].mxu0
    %v967 = vpop.f32.mrb[0].mxu0
    %v968 = vadd.f32 %v889, %v967
    %v969 = vpop.f32.mrb[0].mxu0
    %970 = vmatprep.mubr.bf16.mxu0 0
    %971 = vmatmul.mubr.bf16.gmra.mrb[0].mxu0 %v928
    %v972 = vpop.f32.mrb[0].mxu0
    %v973 = vadd.f32 %v894, %v972
    %v974 = vpop.f32.mrb[0].mxu0
    %v975 = vpop.f32.mrb[0].mxu0
    %v976 = vadd.f32 %v897, %v975
    %v977 = vpop.f32.mrb[0].mxu0
    %978 = vdwg.mxu0
    %v979 = vpack.c.bf16 %v796, %v795
    %v980 = vpack.c.bf16 %v798, %v797
    %s981 = scalar_lea.vmem [#allocation10], 64
    %v982 = vld [vmem:[%s981] sm:$0xf]
    %v983 = vld [vmem:[%s981 + $0x4] sm:$0xf]
    %v984 = vld [vmem:[%s981 + $0x8] sm:$0xf]
    %v985 = vld [vmem:[%s981 + $0xc] sm:$0xf]
    %v986 = vld [vmem:[%s981 + $0x10] sm:$0xf]
    %v987 = vld [vmem:[%s981 + $0x14] sm:$0xf]
    %v988 = vld [vmem:[%s981 + $0x18] sm:$0xf]
    %v989 = vld [vmem:[%s981 + $0x1c] sm:$0xf]
    %v998 = vunpack.c.l.b16 %v982
    %v999 = vunpack.c.l.b16 %v983
    %v1000 = vunpack.c.l.b16 %v984
    %v1001 = vunpack.c.l.b16 %v985
    %v1002 = vunpack.c.l.b16 %v986
    %v1003 = vunpack.c.l.b16 %v987
    %v1004 = vunpack.c.l.b16 %v988
    %v1005 = vunpack.c.l.b16 %v989
    %v1006 = vpack.c.b16 %v999, %v998
    %v1007 = vpack.c.b16 %v1001, %v1000
    %v1008 = vpack.c.b16 %v1003, %v1002
    %v1009 = vpack.c.b16 %v1005, %v1004
    %v1015 = vsel %vm844, %v979, 0
    %v1018 = vsel %vm844, %v980, 0
    %1020 = vmatprep.subr.bf16.mxu0 0
    %1021 = vmatpush1.bf16.msra.mxu0 %v1006
    %1022 = vmatprep.subr.bf16.mxu0 0
    %1023 = vmatpush1.bf16.msra.mxu0 %v1007
    %1024 = vmatprep.subr.bf16.mxu0 0
    %1025 = vmatpush1.bf16.msra.mxu0 %v1008
    %1026 = vmatprep.subr.bf16.mxu0 0
    %1027 = vmatpush1.bf16.msra.mxu0 %v1009
    %1028 = vmatprep.subr.bf16.mxu0 0
    %1029 = vmatpush1.bf16.msra.mxu0 0
    %1030 = vmatprep.subr.bf16.mxu0 0
    %1031 = vmatpush1.bf16.msra.mxu0 0
    %1032 = vmatprep.subr.bf16.mxu0 0
    %1033 = vmatpush1.bf16.msra.mxu0 0
    %1034 = vmatprep.subr.bf16.mxu0 0
    %1035 = vmatpush1.bf16.msra.mxu0 0
    %1036 = vmatprep.subr.bf16.mxu0 0
    %1037 = vmatpush1.bf16.msra.mxu0 0
    %1038 = vmatprep.subr.bf16.mxu0 0
    %1039 = vmatpush1.bf16.msra.mxu0 0
    %1040 = vmatprep.subr.bf16.mxu0 0
    %1041 = vmatpush1.bf16.msra.mxu0 0
    %1042 = vmatprep.subr.bf16.mxu0 0
    %1043 = vmatpush1.bf16.msra.mxu0 0
    %1044 = vmatprep.subr.bf16.mxu0 0
    %1045 = vmatpush1.bf16.msra.mxu0 0
    %1046 = vmatprep.subr.bf16.mxu0 0
    %1047 = vmatpush1.bf16.msra.mxu0 0
    %1048 = vmatprep.subr.bf16.mxu0 0
    %1049 = vmatpush1.bf16.msra.mxu0 0
    %1050 = vmatprep.subr.bf16.mxu0 0
    %1051 = vmatpush1.bf16.msra.mxu0 0
    %1052 = vmatprep.mubr.bf16.mxu0 0
    %1053 = vmatmul.mubr.bf16.gmra.mrb[0].mxu0 %v1015
    %v1054 = vpop.f32.mrb[0].mxu0
    %v1055 = vadd.f32 0.0, %v1054
    %v1056 = vpop.f32.mrb[0].mxu0
    %v1057 = vpop.f32.mrb[0].mxu0
    %v1058 = vadd.f32 0.0, %v1057
    %v1059 = vpop.f32.mrb[0].mxu0
    %1060 = vmatprep.mubr.bf16.mxu0 0
    %1061 = vmatmul.mubr.bf16.gmra.mrb[0].mxu0 %v1018
    %v1062 = vpop.f32.mrb[0].mxu0
    %v1063 = vadd.f32 0.0, %v1062
    %v1064 = vpop.f32.mrb[0].mxu0
    %v1065 = vpop.f32.mrb[0].mxu0
    %v1066 = vadd.f32 0.0, %v1065
    %v1067 = vpop.f32.mrb[0].mxu0
    %1068 = vdwg.mxu0
    %v1069 = vadd.f32 %v965, %v1055
    %v1070 = vadd.f32 %v968, %v1058
    %v1071 = vadd.f32 %v973, %v1063
    %v1072 = vadd.f32 %v976, %v1066
    %v1073 = vld [vmem:[#allocation11] sm:$0x1]
    %v1075 = vlaneseq
    %v1076 = vshrl.u32 %v1075, 7
    %v1077 = vsub.s32 0, %v1076
    %v1078 = vrot.slane %v1073, %v1077
    %v1080 = vadd.f32 %v1069, %v1078
    %v1081 = vadd.f32 %v1070, %v1078
    %v1082 = vadd.f32 %v1071, %v1078
    %v1083 = vadd.f32 %v1072, %v1078
    %v1084 = vmax.f32 %v1080, 0.0
    %v1085 = vmax.f32 %v1081, 0.0
    %v1086 = vmax.f32 %v1082, 0.0
    %v1087 = vmax.f32 %v1083, 0.0
    %v1088 = vrot.slane %v1084, 7
    %v1089 = vrot.slane %v1085, 7
    %v1090 = vrot.slane %v1086, 7
    %v1091 = vrot.slane %v1087, 7
    %v1092 = vsel %vm266, %v1090, %v1091
    %v1093 = vsel %vm266, %v1089, %v1090
    %v1094 = vsel %vm266, %v1088, %v1089
    %v1095 = vsel %vm266, %v1091, %v1088
    %v1096 = vsel %vm275, 0.0, %v1095
    %v1097 = vsel %vm276, 0.0, %v1094
    %v1098 = vsel %vm277, 0.0, %v1093
    %v1099 = vsel %vm278, 0.0, %v1092
    %v1100 = vrot.slane %v1084, 1
    %v1101 = vrot.slane %v1085, 1
    %v1102 = vrot.slane %v1086, 1
    %v1103 = vrot.slane %v1087, 1
    %v1104 = vsel %vm287, %v1102, %v1103
    %v1105 = vsel %vm287, %v1101, %v1102
    %v1106 = vsel %vm287, %v1100, %v1101
    %v1107 = vsel %vm287, %v1103, %v1100
    %v1108 = vsel %vm296, 0.0, %v1106
    %v1109 = vsel %vm297, 0.0, %v1105
    %v1110 = vsel %vm298, 0.0, %v1104
    %v1111 = vsel %vm299, 0.0, %v1107
    %v1112 = vpack.c.bf16 %v1097, %v1096
    %v1113 = vpack.c.bf16 %v1099, %v1098
    %v1114 = vld [vmem:[#allocation13] sm:$0xff]
    %v1115 = vld [vmem:[#allocation13 + $0x8] sm:$0xff]
    %v1116 = vld [vmem:[#allocation13 + $0x10] sm:$0xff]
    %v1117 = vld [vmem:[#allocation13 + $0x18] sm:$0xff]
    %v1118 = vld [vmem:[#allocation13 + $0x20] sm:$0xff]
    %v1119 = vld [vmem:[#allocation13 + $0x28] sm:$0xff]
    %v1120 = vld [vmem:[#allocation13 + $0x30] sm:$0xff]
    %v1121 = vld [vmem:[#allocation13 + $0x38] sm:$0xff]
    %v1122 = vld [vmem:[#allocation13 + $0x40] sm:$0xff]
    %v1123 = vld [vmem:[#allocation13 + $0x48] sm:$0xff]
    %v1124 = vld [vmem:[#allocation13 + $0x50] sm:$0xff]
    %v1125 = vld [vmem:[#allocation13 + $0x58] sm:$0xff]
    %v1126 = vld [vmem:[#allocation13 + $0x60] sm:$0xff]
    %v1127 = vld [vmem:[#allocation13 + $0x68] sm:$0xff]
    %v1128 = vld [vmem:[#allocation13 + $0x70] sm:$0xff]
    %v1129 = vld [vmem:[#allocation13 + $0x78] sm:$0xff]
    %v1130 = vpack.c.bf16 %v1085, %v1084
    %v1131 = vpack.c.bf16 %v1087, %v1086
    %s1132 = scalar_lea.vmem [#allocation13], 128
    %v1133 = vld [vmem:[%s1132] sm:$0xff]
    %v1134 = vld [vmem:[%s1132 + $0x8] sm:$0xff]
    %v1135 = vld [vmem:[%s1132 + $0x10] sm:$0xff]
    %v1136 = vld [vmem:[%s1132 + $0x18] sm:$0xff]
    %v1137 = vld [vmem:[%s1132 + $0x20] sm:$0xff]
    %v1138 = vld [vmem:[%s1132 + $0x28] sm:$0xff]
    %v1139 = vld [vmem:[%s1132 + $0x30] sm:$0xff]
    %v1140 = vld [vmem:[%s1132 + $0x38] sm:$0xff]
    %v1141 = vld [vmem:[%s1132 + $0x40] sm:$0xff]
    %v1142 = vld [vmem:[%s1132 + $0x48] sm:$0xff]
    %v1143 = vld [vmem:[%s1132 + $0x50] sm:$0xff]
    %v1144 = vld [vmem:[%s1132 + $0x58] sm:$0xff]
    %v1145 = vld [vmem:[%s1132 + $0x60] sm:$0xff]
    %v1146 = vld [vmem:[%s1132 + $0x68] sm:$0xff]
    %v1147 = vld [vmem:[%s1132 + $0x70] sm:$0xff]
    %v1148 = vld [vmem:[%s1132 + $0x78] sm:$0xff]
    %v1165 = vunpack.c.l.b16 %v1133
    %v1166 = vunpack.c.h.b16 %v1133
    %v1167 = vunpack.c.l.b16 %v1134
    %v1168 = vunpack.c.h.b16 %v1134
    %v1169 = vunpack.c.l.b16 %v1135
    %v1170 = vunpack.c.h.b16 %v1135
    %v1171 = vunpack.c.l.b16 %v1136
    %v1172 = vunpack.c.h.b16 %v1136
    %v1173 = vunpack.c.l.b16 %v1137
    %v1174 = vunpack.c.h.b16 %v1137
    %v1175 = vunpack.c.l.b16 %v1138
    %v1176 = vunpack.c.h.b16 %v1138
    %v1177 = vunpack.c.l.b16 %v1139
    %v1178 = vunpack.c.h.b16 %v1139
    %v1179 = vunpack.c.l.b16 %v1140
    %v1180 = vunpack.c.h.b16 %v1140
    %v1181 = vunpack.c.l.b16 %v1141
    %v1182 = vunpack.c.h.b16 %v1141
    %v1183 = vunpack.c.l.b16 %v1142
    %v1184 = vunpack.c.h.b16 %v1142
    %v1185 = vunpack.c.l.b16 %v1143
    %v1186 = vunpack.c.h.b16 %v1143
    %v1187 = vunpack.c.l.b16 %v1144
    %v1188 = vunpack.c.h.b16 %v1144
    %v1189 = vunpack.c.l.b16 %v1145
    %v1190 = vunpack.c.h.b16 %v1145
    %v1191 = vunpack.c.l.b16 %v1146
    %v1192 = vunpack.c.h.b16 %v1146
    %v1193 = vunpack.c.l.b16 %v1147
    %v1194 = vunpack.c.h.b16 %v1147
    %v1195 = vunpack.c.l.b16 %v1148
    %v1196 = vunpack.c.h.b16 %v1148
    %v1197 = vpack.c.b16 %v1167, %v1165
    %v1198 = vpack.c.b16 %v1168, %v1166
    %v1199 = vpack.c.b16 %v1171, %v1169
    %v1200 = vpack.c.b16 %v1172, %v1170
    %v1201 = vpack.c.b16 %v1175, %v1173
    %v1202 = vpack.c.b16 %v1176, %v1174
    %v1203 = vpack.c.b16 %v1179, %v1177
    %v1204 = vpack.c.b16 %v1180, %v1178
    %v1205 = vpack.c.b16 %v1183, %v1181
    %v1206 = vpack.c.b16 %v1184, %v1182
    %v1207 = vpack.c.b16 %v1187, %v1185
    %v1208 = vpack.c.b16 %v1188, %v1186
    %v1209 = vpack.c.b16 %v1191, %v1189
    %v1210 = vpack.c.b16 %v1192, %v1190
    %v1211 = vpack.c.b16 %v1195, %v1193
    %v1212 = vpack.c.b16 %v1196, %v1194
    %1229 = vmatprep.subr.bf16.mxu0 %v1198
    %1230 = vmatpush1.bf16.msra.mxu0 %v1197
    %1231 = vmatprep.subr.bf16.mxu0 %v1200
    %1232 = vmatpush1.bf16.msra.mxu0 %v1199
    %1233 = vmatprep.subr.bf16.mxu0 %v1202
    %1234 = vmatpush1.bf16.msra.mxu0 %v1201
    %1235 = vmatprep.subr.bf16.mxu0 %v1204
    %1236 = vmatpush1.bf16.msra.mxu0 %v1203
    %1237 = vmatprep.subr.bf16.mxu0 %v1206
    %1238 = vmatpush1.bf16.msra.mxu0 %v1205
    %1239 = vmatprep.subr.bf16.mxu0 %v1208
    %1240 = vmatpush1.bf16.msra.mxu0 %v1207
    %1241 = vmatprep.subr.bf16.mxu0 %v1210
    %1242 = vmatpush1.bf16.msra.mxu0 %v1209
    %1243 = vmatprep.subr.bf16.mxu0 %v1212
    %1244 = vmatpush1.bf16.msra.mxu0 %v1211
    %1245 = vmatprep.subr.bf16.mxu0 0
    %1246 = vmatpush1.bf16.msra.mxu0 0
    %1247 = vmatprep.subr.bf16.mxu0 0
    %1248 = vmatpush1.bf16.msra.mxu0 0
    %1249 = vmatprep.subr.bf16.mxu0 0
    %1250 = vmatpush1.bf16.msra.mxu0 0
    %1251 = vmatprep.subr.bf16.mxu0 0
    %1252 = vmatpush1.bf16.msra.mxu0 0
    %1253 = vmatprep.subr.bf16.mxu0 0
    %1254 = vmatpush1.bf16.msra.mxu0 0
    %1255 = vmatprep.subr.bf16.mxu0 0
    %1256 = vmatpush1.bf16.msra.mxu0 0
    %1257 = vmatprep.subr.bf16.mxu0 0
    %1258 = vmatpush1.bf16.msra.mxu0 0
    %1259 = vmatprep.subr.bf16.mxu0 0
    %1260 = vmatpush1.bf16.msra.mxu0 0
    %1261 = vmatprep.mubr.bf16.mxu0 0
    %1262 = vmatmul.mubr.bf16.gmra.mrb[0].mxu0 %v1130
    %v1263 = vpop.f32.mrb[0].mxu0
    %v1264 = vadd.f32 0.0, %v1263
    %v1265 = vpop.f32.mrb[0].mxu0
    %v1266 = vadd.f32 0.0, %v1265
    %v1267 = vpop.f32.mrb[0].mxu0
    %v1268 = vadd.f32 0.0, %v1267
    %v1269 = vpop.f32.mrb[0].mxu0
    %v1270 = vadd.f32 0.0, %v1269
    %1271 = vmatprep.mubr.bf16.mxu0 0
    %1272 = vmatmul.mubr.bf16.gmra.mrb[0].mxu0 %v1131
    %v1273 = vpop.f32.mrb[0].mxu0
    %v1274 = vadd.f32 0.0, %v1273
    %v1275 = vpop.f32.mrb[0].mxu0
    %v1276 = vadd.f32 0.0, %v1275
    %v1277 = vpop.f32.mrb[0].mxu0
    %v1278 = vadd.f32 0.0, %v1277
    %v1279 = vpop.f32.mrb[0].mxu0
    %v1280 = vadd.f32 0.0, %v1279
    %1281 = vdwg.mxu0
    %v1298 = vunpack.c.l.b16 %v1114
    %v1299 = vunpack.c.h.b16 %v1114
    %v1300 = vunpack.c.l.b16 %v1115
    %v1301 = vunpack.c.h.b16 %v1115
    %v1302 = vunpack.c.l.b16 %v1116
    %v1303 = vunpack.c.h.b16 %v1116
    %v1304 = vunpack.c.l.b16 %v1117
    %v1305 = vunpack.c.h.b16 %v1117
    %v1306 = vunpack.c.l.b16 %v1118
    %v1307 = vunpack.c.h.b16 %v1118
    %v1308 = vunpack.c.l.b16 %v1119
    %v1309 = vunpack.c.h.b16 %v1119
    %v1310 = vunpack.c.l.b16 %v1120
    %v1311 = vunpack.c.h.b16 %v1120
    %v1312 = vunpack.c.l.b16 %v1121
    %v1313 = vunpack.c.h.b16 %v1121
    %v1314 = vunpack.c.l.b16 %v1122
    %v1315 = vunpack.c.h.b16 %v1122
    %v1316 = vunpack.c.l.b16 %v1123
    %v1317 = vunpack.c.h.b16 %v1123
    %v1318 = vunpack.c.l.b16 %v1124
    %v1319 = vunpack.c.h.b16 %v1124
    %v1320 = vunpack.c.l.b16 %v1125
    %v1321 = vunpack.c.h.b16 %v1125
    %v1322 = vunpack.c.l.b16 %v1126
    %v1323 = vunpack.c.h.b16 %v1126
    %v1324 = vunpack.c.l.b16 %v1127
    %v1325 = vunpack.c.h.b16 %v1127
    %v1326 = vunpack.c.l.b16 %v1128
    %v1327 = vunpack.c.h.b16 %v1128
    %v1328 = vunpack.c.l.b16 %v1129
    %v1329 = vunpack.c.h.b16 %v1129
    %v1330 = vpack.c.b16 %v1300, %v1298
    %v1331 = vpack.c.b16 %v1301, %v1299
    %v1332 = vpack.c.b16 %v1304, %v1302
    %v1333 = vpack.c.b16 %v1305, %v1303
    %v1334 = vpack.c.b16 %v1308, %v1306
    %v1335 = vpack.c.b16 %v1309, %v1307
    %v1336 = vpack.c.b16 %v1312, %v1310
    %v1337 = vpack.c.b16 %v1313, %v1311
    %v1338 = vpack.c.b16 %v1316, %v1314
    %v1339 = vpack.c.b16 %v1317, %v1315
    %v1340 = vpack.c.b16 %v1320, %v1318
    %v1341 = vpack.c.b16 %v1321, %v1319
    %v1342 = vpack.c.b16 %v1324, %v1322
    %v1343 = vpack.c.b16 %v1325, %v1323
    %v1344 = vpack.c.b16 %v1328, %v1326
    %v1345 = vpack.c.b16 %v1329, %v1327
    %1362 = vmatprep.subr.bf16.mxu0 %v1331
    %1363 = vmatpush1.bf16.msra.mxu0 %v1330
    %1364 = vmatprep.subr.bf16.mxu0 %v1333
    %1365 = vmatpush1.bf16.msra.mxu0 %v1332
    %1366 = vmatprep.subr.bf16.mxu0 %v1335
    %1367 = vmatpush1.bf16.msra.mxu0 %v1334
    %1368 = vmatprep.subr.bf16.mxu0 %v1337
    %1369 = vmatpush1.bf16.msra.mxu0 %v1336
    %1370 = vmatprep.subr.bf16.mxu0 %v1339
    %1371 = vmatpush1.bf16.msra.mxu0 %v1338
    %1372 = vmatprep.subr.bf16.mxu0 %v1341
    %1373 = vmatpush1.bf16.msra.mxu0 %v1340
    %1374 = vmatprep.subr.bf16.mxu0 %v1343
    %1375 = vmatpush1.bf16.msra.mxu0 %v1342
    %1376 = vmatprep.subr.bf16.mxu0 %v1345
    %1377 = vmatpush1.bf16.msra.mxu0 %v1344
    %1378 = vmatprep.subr.bf16.mxu0 0
    %1379 = vmatpush1.bf16.msra.mxu0 0
    %1380 = vmatprep.subr.bf16.mxu0 0
    %1381 = vmatpush1.bf16.msra.mxu0 0
    %1382 = vmatprep.subr.bf16.mxu0 0
    %1383 = vmatpush1.bf16.msra.mxu0 0
    %1384 = vmatprep.subr.bf16.mxu0 0
    %1385 = vmatpush1.bf16.msra.mxu0 0
    %1386 = vmatprep.subr.bf16.mxu0 0
    %1387 = vmatpush1.bf16.msra.mxu0 0
    %1388 = vmatprep.subr.bf16.mxu0 0
    %1389 = vmatpush1.bf16.msra.mxu0 0
    %1390 = vmatprep.subr.bf16.mxu0 0
    %1391 = vmatpush1.bf16.msra.mxu0 0
    %1392 = vmatprep.subr.bf16.mxu0 0
    %1393 = vmatpush1.bf16.msra.mxu0 0
    %1394 = vmatprep.mubr.bf16.mxu0 0
    %1395 = vmatmul.mubr.bf16.gmra.mrb[0].mxu0 %v1112
    %v1396 = vpop.f32.mrb[0].mxu0
    %v1397 = vadd.f32 %v1264, %v1396
    %v1398 = vpop.f32.mrb[0].mxu0
    %v1399 = vadd.f32 %v1266, %v1398
    %v1400 = vpop.f32.mrb[0].mxu0
    %v1401 = vadd.f32 %v1268, %v1400
    %v1402 = vpop.f32.mrb[0].mxu0
    %v1403 = vadd.f32 %v1270, %v1402
    %1404 = vmatprep.mubr.bf16.mxu0 0
    %1405 = vmatmul.mubr.bf16.gmra.mrb[0].mxu0 %v1113
    %v1406 = vpop.f32.mrb[0].mxu0
    %v1407 = vadd.f32 %v1274, %v1406
    %v1408 = vpop.f32.mrb[0].mxu0
    %v1409 = vadd.f32 %v1276, %v1408
    %v1410 = vpop.f32.mrb[0].mxu0
    %v1411 = vadd.f32 %v1278, %v1410
    %v1412 = vpop.f32.mrb[0].mxu0
    %v1413 = vadd.f32 %v1280, %v1412
    %1414 = vdwg.mxu0
    %v1415 = vpack.c.bf16 %v1109, %v1108
    %v1416 = vpack.c.bf16 %v1111, %v1110
    %s1417 = scalar_lea.vmem [#allocation13], 256
    %v1418 = vld [vmem:[%s1417] sm:$0xff]
    %v1419 = vld [vmem:[%s1417 + $0x8] sm:$0xff]
    %v1420 = vld [vmem:[%s1417 + $0x10] sm:$0xff]
    %v1421 = vld [vmem:[%s1417 + $0x18] sm:$0xff]
    %v1422 = vld [vmem:[%s1417 + $0x20] sm:$0xff]
    %v1423 = vld [vmem:[%s1417 + $0x28] sm:$0xff]
    %v1424 = vld [vmem:[%s1417 + $0x30] sm:$0xff]
    %v1425 = vld [vmem:[%s1417 + $0x38] sm:$0xff]
    %v1426 = vld [vmem:[%s1417 + $0x40] sm:$0xff]
    %v1427 = vld [vmem:[%s1417 + $0x48] sm:$0xff]
    %v1428 = vld [vmem:[%s1417 + $0x50] sm:$0xff]
    %v1429 = vld [vmem:[%s1417 + $0x58] sm:$0xff]
    %v1430 = vld [vmem:[%s1417 + $0x60] sm:$0xff]
    %v1431 = vld [vmem:[%s1417 + $0x68] sm:$0xff]
    %v1432 = vld [vmem:[%s1417 + $0x70] sm:$0xff]
    %v1433 = vld [vmem:[%s1417 + $0x78] sm:$0xff]
    %v1450 = vunpack.c.l.b16 %v1418
    %v1451 = vunpack.c.h.b16 %v1418
    %v1452 = vunpack.c.l.b16 %v1419
    %v1453 = vunpack.c.h.b16 %v1419
    %v1454 = vunpack.c.l.b16 %v1420
    %v1455 = vunpack.c.h.b16 %v1420
    %v1456 = vunpack.c.l.b16 %v1421
    %v1457 = vunpack.c.h.b16 %v1421
    %v1458 = vunpack.c.l.b16 %v1422
    %v1459 = vunpack.c.h.b16 %v1422
    %v1460 = vunpack.c.l.b16 %v1423
    %v1461 = vunpack.c.h.b16 %v1423
    %v1462 = vunpack.c.l.b16 %v1424
    %v1463 = vunpack.c.h.b16 %v1424
    %v1464 = vunpack.c.l.b16 %v1425
    %v1465 = vunpack.c.h.b16 %v1425
    %v1466 = vunpack.c.l.b16 %v1426
    %v1467 = vunpack.c.h.b16 %v1426
    %v1468 = vunpack.c.l.b16 %v1427
    %v1469 = vunpack.c.h.b16 %v1427
    %v1470 = vunpack.c.l.b16 %v1428
    %v1471 = vunpack.c.h.b16 %v1428
    %v1472 = vunpack.c.l.b16 %v1429
    %v1473 = vunpack.c.h.b16 %v1429
    %v1474 = vunpack.c.l.b16 %v1430
    %v1475 = vunpack.c.h.b16 %v1430
    %v1476 = vunpack.c.l.b16 %v1431
    %v1477 = vunpack.c.h.b16 %v1431
    %v1478 = vunpack.c.l.b16 %v1432
    %v1479 = vunpack.c.h.b16 %v1432
    %v1480 = vunpack.c.l.b16 %v1433
    %v1481 = vunpack.c.h.b16 %v1433
    %v1482 = vpack.c.b16 %v1452, %v1450
    %v1483 = vpack.c.b16 %v1453, %v1451
    %v1484 = vpack.c.b16 %v1456, %v1454
    %v1485 = vpack.c.b16 %v1457, %v1455
    %v1486 = vpack.c.b16 %v1460, %v1458
    %v1487 = vpack.c.b16 %v1461, %v1459
    %v1488 = vpack.c.b16 %v1464, %v1462
    %v1489 = vpack.c.b16 %v1465, %v1463
    %v1490 = vpack.c.b16 %v1468, %v1466
    %v1491 = vpack.c.b16 %v1469, %v1467
    %v1492 = vpack.c.b16 %v1472, %v1470
    %v1493 = vpack.c.b16 %v1473, %v1471
    %v1494 = vpack.c.b16 %v1476, %v1474
    %v1495 = vpack.c.b16 %v1477, %v1475
    %v1496 = vpack.c.b16 %v1480, %v1478
    %v1497 = vpack.c.b16 %v1481, %v1479
    %1514 = vmatprep.subr.bf16.mxu0 %v1483
    %1515 = vmatpush1.bf16.msra.mxu0 %v1482
    %1516 = vmatprep.subr.bf16.mxu0 %v1485
    %1517 = vmatpush1.bf16.msra.mxu0 %v1484
    %1518 = vmatprep.subr.bf16.mxu0 %v1487
    %1519 = vmatpush1.bf16.msra.mxu0 %v1486
    %1520 = vmatprep.subr.bf16.mxu0 %v1489
    %1521 = vmatpush1.bf16.msra.mxu0 %v1488
    %1522 = vmatprep.subr.bf16.mxu0 %v1491
    %1523 = vmatpush1.bf16.msra.mxu0 %v1490
    %1524 = vmatprep.subr.bf16.mxu0 %v1493
    %1525 = vmatpush1.bf16.msra.mxu0 %v1492
    %1526 = vmatprep.subr.bf16.mxu0 %v1495
    %1527 = vmatpush1.bf16.msra.mxu0 %v1494
    %1528 = vmatprep.subr.bf16.mxu0 %v1497
    %1529 = vmatpush1.bf16.msra.mxu0 %v1496
    %1530 = vmatprep.subr.bf16.mxu0 0
    %1531 = vmatpush1.bf16.msra.mxu0 0
    %1532 = vmatprep.subr.bf16.mxu0 0
    %1533 = vmatpush1.bf16.msra.mxu0 0
    %1534 = vmatprep.subr.bf16.mxu0 0
    %1535 = vmatpush1.bf16.msra.mxu0 0
    %1536 = vmatprep.subr.bf16.mxu0 0
    %1537 = vmatpush1.bf16.msra.mxu0 0
    %1538 = vmatprep.subr.bf16.mxu0 0
    %1539 = vmatpush1.bf16.msra.mxu0 0
    %1540 = vmatprep.subr.bf16.mxu0 0
    %1541 = vmatpush1.bf16.msra.mxu0 0
    %1542 = vmatprep.subr.bf16.mxu0 0
    %1543 = vmatpush1.bf16.msra.mxu0 0
    %1544 = vmatprep.subr.bf16.mxu0 0
    %1545 = vmatpush1.bf16.msra.mxu0 0
    %1546 = vmatprep.mubr.bf16.mxu0 0
    %1547 = vmatmul.mubr.bf16.gmra.mrb[0].mxu0 %v1415
    %v1548 = vpop.f32.mrb[0].mxu0
    %v1549 = vadd.f32 0.0, %v1548
    %v1550 = vpop.f32.mrb[0].mxu0
    %v1551 = vadd.f32 0.0, %v1550
    %v1552 = vpop.f32.mrb[0].mxu0
    %v1553 = vadd.f32 0.0, %v1552
    %v1554 = vpop.f32.mrb[0].mxu0
    %v1555 = vadd.f32 0.0, %v1554
    %1556 = vmatprep.mubr.bf16.mxu0 0
    %1557 = vmatmul.mubr.bf16.gmra.mrb[0].mxu0 %v1416
    %v1558 = vpop.f32.mrb[0].mxu0
    %v1559 = vadd.f32 0.0, %v1558
    %v1560 = vpop.f32.mrb[0].mxu0
    %v1561 = vadd.f32 0.0, %v1560
    %v1562 = vpop.f32.mrb[0].mxu0
    %v1563 = vadd.f32 0.0, %v1562
    %v1564 = vpop.f32.mrb[0].mxu0
    %v1565 = vadd.f32 0.0, %v1564
    %1566 = vdwg.mxu0
    %v1567 = vadd.f32 %v1397, %v1549
    %v1568 = vadd.f32 %v1399, %v1551
    %v1569 = vadd.f32 %v1401, %v1553
    %v1570 = vadd.f32 %v1403, %v1555
    %v1571 = vadd.f32 %v1407, %v1559
    %v1572 = vadd.f32 %v1409, %v1561
    %v1573 = vadd.f32 %v1411, %v1563
    %v1574 = vadd.f32 %v1413, %v1565
    %v1575 = vld [vmem:[#allocation14] sm:$0x3]
    %v1577 = vlaneseq
    %v1578 = vshrl.u32 %v1577, 7
    %v1579 = vsub.s32 0, %v1578
    %v1580 = vrot.slane %v1575, %v1579
    %v1581 = vlaneseq
    %v1582 = vshrl.u32 %v1581, 7
    %v1583 = vsub.s32 1, %v1582
    %v1584 = vrot.slane %v1575, %v1583
    %v1587 = vadd.f32 %v1567, %v1580
    %v1588 = vadd.f32 %v1568, %v1584
    %v1589 = vadd.f32 %v1569, %v1580
    %v1590 = vadd.f32 %v1570, %v1584
    %v1591 = vadd.f32 %v1571, %v1580
    %v1592 = vadd.f32 %v1572, %v1584
    %v1593 = vadd.f32 %v1573, %v1580
    %v1594 = vadd.f32 %v1574, %v1584
    %v1595 = vmax.f32 %v1587, 0.0
    %v1596 = vmax.f32 %v1588, 0.0
    %v1597 = vmax.f32 %v1589, 0.0
    %v1598 = vmax.f32 %v1590, 0.0
    %v1599 = vmax.f32 %v1591, 0.0
    %v1600 = vmax.f32 %v1592, 0.0
    %v1601 = vmax.f32 %v1593, 0.0
    %v1602 = vmax.f32 %v1594, 0.0
    %vm1603 = vcmask 1043456
    %v1604 = vsel %vm1603, %v1595, 0.0
    %v1605 = vrot.slane %v1604, 4
    %v1606 = vadd.f32 %v1604, %v1605
    %v1607 = vrot.slane %v1606, 2
    %v1608 = vadd.f32 %v1606, %v1607
    %v1609 = vrot.slane %v1608, 1
    %v1610 = vadd.f32 %v1608, %v1609
    %v1611 = vsel %vm1603, %v1596, 0.0
    %v1612 = vrot.slane %v1611, 4
    %v1613 = vadd.f32 %v1611, %v1612
    %v1614 = vrot.slane %v1613, 2
    %v1615 = vadd.f32 %v1613, %v1614
    %v1616 = vrot.slane %v1615, 1
    %v1617 = vadd.f32 %v1615, %v1616
    %v1618 = vsel %vm1603, %v1599, 0.0
    %v1619 = vrot.slane %v1618, 4
    %v1620 = vadd.f32 %v1618, %v1619
    %v1621 = vrot.slane %v1620, 2
    %v1622 = vadd.f32 %v1620, %v1621
    %v1623 = vrot.slane %v1622, 1
    %v1624 = vadd.f32 %v1622, %v1623
    %v1625 = vsel %vm1603, %v1600, 0.0
    %v1626 = vrot.slane %v1625, 4
    %v1627 = vadd.f32 %v1625, %v1626
    %v1628 = vrot.slane %v1627, 2
    %v1629 = vadd.f32 %v1627, %v1628
    %v1630 = vrot.slane %v1629, 1
    %v1631 = vadd.f32 %v1629, %v1630
    %v1632 = vmul.f32 %v1610, 0.25
    %v1633 = vmul.f32 %v1617, 0.25
    %v1634 = vmul.f32 %v1624, 0.25
    %v1635 = vmul.f32 %v1631, 0.25
    %v1640 = vrot.slane %v1595, 3
    %v1641 = vrot.slane %v1596, 3
    %v1642 = vrot.slane %v1599, 3
    %v1643 = vrot.slane %v1600, 3
    %v1648 = vsel %vm1603, %v1640, 0.0
    %v1649 = vrot.slane %v1648, 4
    %v1650 = vadd.f32 %v1648, %v1649
    %v1651 = vrot.slane %v1650, 2
    %v1652 = vadd.f32 %v1650, %v1651
    %v1653 = vrot.slane %v1652, 1
    %v1654 = vadd.f32 %v1652, %v1653
    %v1655 = vsel %vm1603, %v1641, 0.0
    %v1656 = vrot.slane %v1655, 4
    %v1657 = vadd.f32 %v1655, %v1656
    %v1658 = vrot.slane %v1657, 2
    %v1659 = vadd.f32 %v1657, %v1658
    %v1660 = vrot.slane %v1659, 1
    %v1661 = vadd.f32 %v1659, %v1660
    %v1662 = vsel %vm1603, %v1642, 0.0
    %v1663 = vrot.slane %v1662, 4
    %v1664 = vadd.f32 %v1662, %v1663
    %v1665 = vrot.slane %v1664, 2
    %v1666 = vadd.f32 %v1664, %v1665
    %v1667 = vrot.slane %v1666, 1
    %v1668 = vadd.f32 %v1666, %v1667
    %v1669 = vsel %vm1603, %v1643, 0.0
    %v1670 = vrot.slane %v1669, 4
    %v1671 = vadd.f32 %v1669, %v1670
    %v1672 = vrot.slane %v1671, 2
    %v1673 = vadd.f32 %v1671, %v1672
    %v1674 = vrot.slane %v1673, 1
    %v1675 = vadd.f32 %v1673, %v1674
    %v1676 = vmul.f32 %v1654, 0.25
    %v1677 = vmul.f32 %v1661, 0.25
    %v1678 = vmul.f32 %v1668, 0.25
    %v1679 = vmul.f32 %v1675, 0.25
    %v1684 = vrot.slane %v1595, 6
    %v1685 = vrot.slane %v1597, 6
    %v1686 = vsel %vm318, %v1684, %v1685
    %v1687 = vrot.slane %v1596, 6
    %v1688 = vrot.slane %v1598, 6
    %v1689 = vsel %vm318, %v1687, %v1688
    %v1690 = vrot.slane %v1599, 6
    %v1691 = vrot.slane %v1601, 6
    %v1692 = vsel %vm318, %v1690, %v1691
    %v1693 = vrot.slane %v1600, 6
    %v1694 = vrot.slane %v1602, 6
    %v1695 = vsel %vm318, %v1693, %v1694
    %v1700 = vsel %vm1603, %v1686, 0.0
    %v1701 = vrot.slane %v1700, 4
    %v1702 = vadd.f32 %v1700, %v1701
    %v1703 = vrot.slane %v1702, 2
    %v1704 = vadd.f32 %v1702, %v1703
    %v1705 = vrot.slane %v1704, 1
    %v1706 = vadd.f32 %v1704, %v1705
    %v1707 = vsel %vm1603, %v1689, 0.0
    %v1708 = vrot.slane %v1707, 4
    %v1709 = vadd.f32 %v1707, %v1708
    %v1710 = vrot.slane %v1709, 2
    %v1711 = vadd.f32 %v1709, %v1710
    %v1712 = vrot.slane %v1711, 1
    %v1713 = vadd.f32 %v1711, %v1712
    %v1714 = vsel %vm1603, %v1692, 0.0
    %v1715 = vrot.slane %v1714, 4
    %v1716 = vadd.f32 %v1714, %v1715
    %v1717 = vrot.slane %v1716, 2
    %v1718 = vadd.f32 %v1716, %v1717
    %v1719 = vrot.slane %v1718, 1
    %v1720 = vadd.f32 %v1718, %v1719
    %v1721 = vsel %vm1603, %v1695, 0.0
    %v1722 = vrot.slane %v1721, 4
    %v1723 = vadd.f32 %v1721, %v1722
    %v1724 = vrot.slane %v1723, 2
    %v1725 = vadd.f32 %v1723, %v1724
    %v1726 = vrot.slane %v1725, 1
    %v1727 = vadd.f32 %v1725, %v1726
    %v1728 = vmul.f32 %v1706, 0.25
    %v1729 = vmul.f32 %v1713, 0.25
    %v1730 = vmul.f32 %v1720, 0.25
    %v1731 = vmul.f32 %v1727, 0.25
    %v1732 = vrot.slane %v1597, 1
    %v1733 = vrot.slane %v1598, 1
    %v1734 = vrot.slane %v1601, 1
    %v1735 = vrot.slane %v1602, 1
    %v1740 = vsel %vm1603, %v1732, 0.0
    %v1741 = vrot.slane %v1740, 4
    %v1742 = vadd.f32 %v1740, %v1741
    %v1743 = vrot.slane %v1742, 2
    %v1744 = vadd.f32 %v1742, %v1743
    %v1745 = vrot.slane %v1744, 1
    %v1746 = vadd.f32 %v1744, %v1745
    %v1747 = vsel %vm1603, %v1733, 0.0
    %v1748 = vrot.slane %v1747, 4
    %v1749 = vadd.f32 %v1747, %v1748
    %v1750 = vrot.slane %v1749, 2
    %v1751 = vadd.f32 %v1749, %v1750
    %v1752 = vrot.slane %v1751, 1
    %v1753 = vadd.f32 %v1751, %v1752
    %v1754 = vsel %vm1603, %v1734, 0.0
    %v1755 = vrot.slane %v1754, 4
    %v1756 = vadd.f32 %v1754, %v1755
    %v1757 = vrot.slane %v1756, 2
    %v1758 = vadd.f32 %v1756, %v1757
    %v1759 = vrot.slane %v1758, 1
    %v1760 = vadd.f32 %v1758, %v1759
    %v1761 = vsel %vm1603, %v1735, 0.0
    %v1762 = vrot.slane %v1761, 4
    %v1763 = vadd.f32 %v1761, %v1762
    %v1764 = vrot.slane %v1763, 2
    %v1765 = vadd.f32 %v1763, %v1764
    %v1766 = vrot.slane %v1765, 1
    %v1767 = vadd.f32 %v1765, %v1766
    %v1768 = vmul.f32 %v1746, 0.25
    %v1769 = vmul.f32 %v1753, 0.25
    %v1770 = vmul.f32 %v1760, 0.25
    %v1771 = vmul.f32 %v1767, 0.25
    %v1772 = vrot.slane %v1597, 4
    %v1773 = vrot.slane %v1598, 4
    %v1774 = vrot.slane %v1601, 4
    %v1775 = vrot.slane %v1602, 4
    %v1780 = vsel %vm1603, %v1772, 0.0
    %v1781 = vrot.slane %v1780, 4
    %v1782 = vadd.f32 %v1780, %v1781
    %v1783 = vrot.slane %v1782, 2
    %v1784 = vadd.f32 %v1782, %v1783
    %v1785 = vrot.slane %v1784, 1
    %v1786 = vadd.f32 %v1784, %v1785
    %v1787 = vsel %vm1603, %v1773, 0.0
    %v1788 = vrot.slane %v1787, 4
    %v1789 = vadd.f32 %v1787, %v1788
    %v1790 = vrot.slane %v1789, 2
    %v1791 = vadd.f32 %v1789, %v1790
    %v1792 = vrot.slane %v1791, 1
    %v1793 = vadd.f32 %v1791, %v1792
    %v1794 = vsel %vm1603, %v1774, 0.0
    %v1795 = vrot.slane %v1794, 4
    %v1796 = vadd.f32 %v1794, %v1795
    %v1797 = vrot.slane %v1796, 2
    %v1798 = vadd.f32 %v1796, %v1797
    %v1799 = vrot.slane %v1798, 1
    %v1800 = vadd.f32 %v1798, %v1799
    %v1801 = vsel %vm1603, %v1775, 0.0
    %v1802 = vrot.slane %v1801, 4
    %v1803 = vadd.f32 %v1801, %v1802
    %v1804 = vrot.slane %v1803, 2
    %v1805 = vadd.f32 %v1803, %v1804
    %v1806 = vrot.slane %v1805, 1
    %v1807 = vadd.f32 %v1805, %v1806
    %v1808 = vmul.f32 %v1786, 0.25
    %v1809 = vmul.f32 %v1793, 0.25
    %v1810 = vmul.f32 %v1800, 0.25
    %v1811 = vmul.f32 %v1807, 0.25
    %vm1816 = vcmask 1041409
    %v1817 = vsel %vm1816, %v1634, %v1632
    %v1818 = vsel %vm1816, %v1635, %v1633
    %v1825 = vsel %vm1816, %v1678, %v1676
    %v1826 = vsel %vm1816, %v1679, %v1677
    %v1833 = vsel %vm1816, %v1730, %v1728
    %v1834 = vsel %vm1816, %v1731, %v1729
    %v1841 = vsel %vm1816, %v1770, %v1768
    %v1842 = vsel %vm1816, %v1771, %v1769
    %v1849 = vsel %vm1816, %v1810, %v1808
    %v1850 = vsel %vm1816, %v1811, %v1809
    %v1853 = vpack.c.bf16 %v1817, %v1817
    %v1854 = vpack.c.bf16 %v1818, %v1818
    %v1855 = vpack.c.bf16 %v1825, %v1825
    %v1856 = vpack.c.bf16 %v1826, %v1826
    %v1857 = vpack.c.bf16 %v1833, %v1833
    %v1858 = vpack.c.bf16 %v1834, %v1834
    %v1859 = vpack.c.bf16 %v1841, %v1841
    %v1860 = vpack.c.bf16 %v1842, %v1842
    %v1861 = vpack.c.bf16 %v1849, %v1849
    %v1862 = vpack.c.bf16 %v1850, %v1850
    %v1863 = vld [vmem:[#allocation16] sm:$0xff]
    %v1864 = vld [vmem:[#allocation16 + $0x8] sm:$0xff]
    %v1865 = vld [vmem:[#allocation16 + $0x10] sm:$0xff]
    %v1866 = vld [vmem:[#allocation16 + $0x18] sm:$0xff]
    %v1867 = vld [vmem:[#allocation16 + $0x20] sm:$0xff]
    %v1868 = vld [vmem:[#allocation16 + $0x28] sm:$0xff]
    %v1869 = vld [vmem:[#allocation16 + $0x30] sm:$0xff]
    %v1870 = vld [vmem:[#allocation16 + $0x38] sm:$0xff]
    %v1871 = vld [vmem:[#allocation16 + $0x40] sm:$0xff]
    %v1872 = vld [vmem:[#allocation16 + $0x48] sm:$0xff]
    %v1873 = vld [vmem:[#allocation16 + $0x50] sm:$0xff]
    %v1874 = vld [vmem:[#allocation16 + $0x58] sm:$0xff]
    %v1875 = vld [vmem:[#allocation16 + $0x60] sm:$0xff]
    %v1876 = vld [vmem:[#allocation16 + $0x68] sm:$0xff]
    %v1877 = vld [vmem:[#allocation16 + $0x70] sm:$0xff]
    %v1878 = vld [vmem:[#allocation16 + $0x78] sm:$0xff]
    %v1879 = vld [vmem:[#allocation16 + $0x80] sm:$0xff]
    %v1880 = vld [vmem:[#allocation16 + $0x88] sm:$0xff]
    %v1881 = vld [vmem:[#allocation16 + $0x90] sm:$0xff]
    %v1882 = vld [vmem:[#allocation16 + $0x98] sm:$0xff]
    %v1883 = vld [vmem:[#allocation16 + $0xa0] sm:$0xff]
    %v1884 = vld [vmem:[#allocation16 + $0xa8] sm:$0xff]
    %v1885 = vld [vmem:[#allocation16 + $0xb0] sm:$0xff]
    %v1886 = vld [vmem:[#allocation16 + $0xb8] sm:$0xff]
    %v1887 = vld [vmem:[#allocation16 + $0xc0] sm:$0xff]
    %v1888 = vld [vmem:[#allocation16 + $0xc8] sm:$0xff]
    %v1889 = vld [vmem:[#allocation16 + $0xd0] sm:$0xff]
    %v1890 = vld [vmem:[#allocation16 + $0xd8] sm:$0xff]
    %v1891 = vld [vmem:[#allocation16 + $0xe0] sm:$0xff]
    %v1892 = vld [vmem:[#allocation16 + $0xe8] sm:$0xff]
    %v1893 = vld [vmem:[#allocation16 + $0xf0] sm:$0xff]
    %v1894 = vld [vmem:[#allocation16 + $0xf8] sm:$0xff]
    %v1895 = vld [vmem:[#allocation16 + $0x100] sm:$0xff]
    %v1896 = vld [vmem:[#allocation16 + $0x108] sm:$0xff]
    %v1897 = vld [vmem:[#allocation16 + $0x110] sm:$0xff]
    %v1898 = vld [vmem:[#allocation16 + $0x118] sm:$0xff]
    %v1899 = vld [vmem:[#allocation16 + $0x120] sm:$0xff]
    %v1900 = vld [vmem:[#allocation16 + $0x128] sm:$0xff]
    %v1901 = vld [vmem:[#allocation16 + $0x130] sm:$0xff]
    %v1902 = vld [vmem:[#allocation16 + $0x138] sm:$0xff]
    %v1903 = vld [vmem:[#allocation16 + $0x140] sm:$0xff]
    %v1904 = vld [vmem:[#allocation16 + $0x148] sm:$0xff]
    %v1905 = vld [vmem:[#allocation16 + $0x150] sm:$0xff]
    %v1906 = vld [vmem:[#allocation16 + $0x158] sm:$0xff]
    %v1907 = vld [vmem:[#allocation16 + $0x160] sm:$0xff]
    %v1908 = vld [vmem:[#allocation16 + $0x168] sm:$0xff]
    %v1909 = vld [vmem:[#allocation16 + $0x170] sm:$0xff]
    %v1910 = vld [vmem:[#allocation16 + $0x178] sm:$0xff]
    %v1911 = vld [vmem:[#allocation16 + $0x180] sm:$0xff]
    %v1912 = vld [vmem:[#allocation16 + $0x188] sm:$0xff]
    %v1913 = vld [vmem:[#allocation16 + $0x190] sm:$0xff]
    %v1914 = vld [vmem:[#allocation16 + $0x198] sm:$0xff]
    %v1915 = vld [vmem:[#allocation16 + $0x1a0] sm:$0xff]
    %v1916 = vld [vmem:[#allocation16 + $0x1a8] sm:$0xff]
    %v1917 = vld [vmem:[#allocation16 + $0x1b0] sm:$0xff]
    %v1918 = vld [vmem:[#allocation16 + $0x1b8] sm:$0xff]
    %v1919 = vld [vmem:[#allocation16 + $0x1c0] sm:$0xff]
    %v1920 = vld [vmem:[#allocation16 + $0x1c8] sm:$0xff]
    %v1921 = vld [vmem:[#allocation16 + $0x1d0] sm:$0xff]
    %v1922 = vld [vmem:[#allocation16 + $0x1d8] sm:$0xff]
    %v1923 = vld [vmem:[#allocation16 + $0x1e0] sm:$0xff]
    %v1924 = vld [vmem:[#allocation16 + $0x1e8] sm:$0xff]
    %v1925 = vld [vmem:[#allocation16 + $0x1f0] sm:$0xff]
    %v1926 = vld [vmem:[#allocation16 + $0x1f8] sm:$0xff]
    %v1927 = vld [vmem:[#allocation16 + $0x200] sm:$0xff]
    %v1928 = vld [vmem:[#allocation16 + $0x208] sm:$0xff]
    %v1929 = vld [vmem:[#allocation16 + $0x210] sm:$0xff]
    %v1930 = vld [vmem:[#allocation16 + $0x218] sm:$0xff]
    %v1931 = vld [vmem:[#allocation16 + $0x220] sm:$0xff]
    %v1932 = vld [vmem:[#allocation16 + $0x228] sm:$0xff]
    %v1933 = vld [vmem:[#allocation16 + $0x230] sm:$0xff]
    %v1934 = vld [vmem:[#allocation16 + $0x238] sm:$0xff]
    %v1935 = vld [vmem:[#allocation16 + $0x240] sm:$0xff]
    %v1936 = vld [vmem:[#allocation16 + $0x248] sm:$0xff]
    %v1937 = vld [vmem:[#allocation16 + $0x250] sm:$0xff]
    %v1938 = vld [vmem:[#allocation16 + $0x258] sm:$0xff]
    %v1939 = vld [vmem:[#allocation16 + $0x260] sm:$0xff]
    %v1940 = vld [vmem:[#allocation16 + $0x268] sm:$0xff]
    %v1941 = vld [vmem:[#allocation16 + $0x270] sm:$0xff]
    %v1942 = vld [vmem:[#allocation16 + $0x278] sm:$0xff]
    %v1943 = vld [vmem:[#allocation16 + $0x280] sm:$0xff]
    %v1944 = vld [vmem:[#allocation16 + $0x288] sm:$0xff]
    %v1945 = vld [vmem:[#allocation16 + $0x290] sm:$0xff]
    %v1946 = vld [vmem:[#allocation16 + $0x298] sm:$0xff]
    %v1947 = vld [vmem:[#allocation16 + $0x2a0] sm:$0xff]
    %v1948 = vld [vmem:[#allocation16 + $0x2a8] sm:$0xff]
    %v1949 = vld [vmem:[#allocation16 + $0x2b0] sm:$0xff]
    %v1950 = vld [vmem:[#allocation16 + $0x2b8] sm:$0xff]
    %v1951 = vld [vmem:[#allocation16 + $0x2c0] sm:$0xff]
    %v1952 = vld [vmem:[#allocation16 + $0x2c8] sm:$0xff]
    %v1953 = vld [vmem:[#allocation16 + $0x2d0] sm:$0xff]
    %v1954 = vld [vmem:[#allocation16 + $0x2d8] sm:$0xff]
    %v1955 = vld [vmem:[#allocation16 + $0x2e0] sm:$0xff]
    %v1956 = vld [vmem:[#allocation16 + $0x2e8] sm:$0xff]
    %v1957 = vld [vmem:[#allocation16 + $0x2f0] sm:$0xff]
    %v1958 = vld [vmem:[#allocation16 + $0x2f8] sm:$0xff]
    %v1959 = vld [vmem:[#allocation16 + $0x300] sm:$0xff]
    %v1960 = vld [vmem:[#allocation16 + $0x308] sm:$0xff]
    %v1961 = vld [vmem:[#allocation16 + $0x310] sm:$0xff]
    %v1962 = vld [vmem:[#allocation16 + $0x318] sm:$0xff]
    %v1963 = vld [vmem:[#allocation16 + $0x320] sm:$0xff]
    %v1964 = vld [vmem:[#allocation16 + $0x328] sm:$0xff]
    %v1965 = vld [vmem:[#allocation16 + $0x330] sm:$0xff]
    %v1966 = vld [vmem:[#allocation16 + $0x338] sm:$0xff]
    %v1967 = vld [vmem:[#allocation16 + $0x340] sm:$0xff]
    %v1968 = vld [vmem:[#allocation16 + $0x348] sm:$0xff]
    %v1969 = vld [vmem:[#allocation16 + $0x350] sm:$0xff]
    %v1970 = vld [vmem:[#allocation16 + $0x358] sm:$0xff]
    %v1971 = vld [vmem:[#allocation16 + $0x360] sm:$0xff]
    %v1972 = vld [vmem:[#allocation16 + $0x368] sm:$0xff]
    %v1973 = vld [vmem:[#allocation16 + $0x370] sm:$0xff]
    %v1974 = vld [vmem:[#allocation16 + $0x378] sm:$0xff]
    %v1975 = vld [vmem:[#allocation16 + $0x380] sm:$0xff]
    %v1976 = vld [vmem:[#allocation16 + $0x388] sm:$0xff]
    %v1977 = vld [vmem:[#allocation16 + $0x390] sm:$0xff]
    %v1978 = vld [vmem:[#allocation16 + $0x398] sm:$0xff]
    %v1979 = vld [vmem:[#allocation16 + $0x3a0] sm:$0xff]
    %v1980 = vld [vmem:[#allocation16 + $0x3a8] sm:$0xff]
    %v1981 = vld [vmem:[#allocation16 + $0x3b0] sm:$0xff]
    %v1982 = vld [vmem:[#allocation16 + $0x3b8] sm:$0xff]
    %v1983 = vld [vmem:[#allocation16 + $0x3c0] sm:$0xff]
    %v1984 = vld [vmem:[#allocation16 + $0x3c8] sm:$0xff]
    %v1985 = vld [vmem:[#allocation16 + $0x3d0] sm:$0xff]
    %v1986 = vld [vmem:[#allocation16 + $0x3d8] sm:$0xff]
    %v1987 = vld [vmem:[#allocation16 + $0x3e0] sm:$0xff]
    %v1988 = vld [vmem:[#allocation16 + $0x3e8] sm:$0xff]
    %v1989 = vld [vmem:[#allocation16 + $0x3f0] sm:$0xff]
    %v1990 = vld [vmem:[#allocation16 + $0x3f8] sm:$0xff]
    %v1991 = vld [vmem:[#allocation16 + $0x400] sm:$0xff]
    %v1992 = vld [vmem:[#allocation16 + $0x408] sm:$0xff]
    %v1993 = vld [vmem:[#allocation16 + $0x410] sm:$0xff]
    %v1994 = vld [vmem:[#allocation16 + $0x418] sm:$0xff]
    %v1995 = vld [vmem:[#allocation16 + $0x420] sm:$0xff]
    %v1996 = vld [vmem:[#allocation16 + $0x428] sm:$0xff]
    %v1997 = vld [vmem:[#allocation16 + $0x430] sm:$0xff]
    %v1998 = vld [vmem:[#allocation16 + $0x438] sm:$0xff]
    %v1999 = vld [vmem:[#allocation16 + $0x440] sm:$0xff]
    %v2000 = vld [vmem:[#allocation16 + $0x448] sm:$0xff]
    %v2001 = vld [vmem:[#allocation16 + $0x450] sm:$0xff]
    %v2002 = vld [vmem:[#allocation16 + $0x458] sm:$0xff]
    %v2003 = vld [vmem:[#allocation16 + $0x460] sm:$0xff]
    %v2004 = vld [vmem:[#allocation16 + $0x468] sm:$0xff]
    %v2005 = vld [vmem:[#allocation16 + $0x470] sm:$0xff]
    %v2006 = vld [vmem:[#allocation16 + $0x478] sm:$0xff]
    %v2007 = vld [vmem:[#allocation16 + $0x480] sm:$0xff]
    %v2008 = vld [vmem:[#allocation16 + $0x488] sm:$0xff]
    %v2009 = vld [vmem:[#allocation16 + $0x490] sm:$0xff]
    %v2010 = vld [vmem:[#allocation16 + $0x498] sm:$0xff]
    %v2011 = vld [vmem:[#allocation16 + $0x4a0] sm:$0xff]
    %v2012 = vld [vmem:[#allocation16 + $0x4a8] sm:$0xff]
    %v2013 = vld [vmem:[#allocation16 + $0x4b0] sm:$0xff]
    %v2014 = vld [vmem:[#allocation16 + $0x4b8] sm:$0xff]
    %v2015 = vld [vmem:[#allocation16 + $0x4c0] sm:$0xff]
    %v2016 = vld [vmem:[#allocation16 + $0x4c8] sm:$0xff]
    %v2017 = vld [vmem:[#allocation16 + $0x4d0] sm:$0xff]
    %v2018 = vld [vmem:[#allocation16 + $0x4d8] sm:$0xff]
    %v2019 = vld [vmem:[#allocation16 + $0x4e0] sm:$0xff]
    %v2020 = vld [vmem:[#allocation16 + $0x4e8] sm:$0xff]
    %v2021 = vld [vmem:[#allocation16 + $0x4f0] sm:$0xff]
    %v2022 = vld [vmem:[#allocation16 + $0x4f8] sm:$0xff]
    %v2023 = vld [vmem:[#allocation16 + $0x500] sm:$0xff]
    %v2024 = vld [vmem:[#allocation16 + $0x508] sm:$0xff]
    %v2025 = vld [vmem:[#allocation16 + $0x510] sm:$0xff]
    %v2026 = vld [vmem:[#allocation16 + $0x518] sm:$0xff]
    %v2027 = vld [vmem:[#allocation16 + $0x520] sm:$0xff]
    %v2028 = vld [vmem:[#allocation16 + $0x528] sm:$0xff]
    %v2029 = vld [vmem:[#allocation16 + $0x530] sm:$0xff]
    %v2030 = vld [vmem:[#allocation16 + $0x538] sm:$0xff]
    %v2031 = vld [vmem:[#allocation16 + $0x540] sm:$0xff]
    %v2032 = vld [vmem:[#allocation16 + $0x548] sm:$0xff]
    %v2033 = vld [vmem:[#allocation16 + $0x550] sm:$0xff]
    %v2034 = vld [vmem:[#allocation16 + $0x558] sm:$0xff]
    %v2035 = vld [vmem:[#allocation16 + $0x560] sm:$0xff]
    %v2036 = vld [vmem:[#allocation16 + $0x568] sm:$0xff]
    %v2037 = vld [vmem:[#allocation16 + $0x570] sm:$0xff]
    %v2038 = vld [vmem:[#allocation16 + $0x578] sm:$0xff]
    %v2039 = vld [vmem:[#allocation16 + $0x580] sm:$0xff]
    %v2040 = vld [vmem:[#allocation16 + $0x588] sm:$0xff]
    %v2041 = vld [vmem:[#allocation16 + $0x590] sm:$0xff]
    %v2042 = vld [vmem:[#allocation16 + $0x598] sm:$0xff]
    %v2043 = vld [vmem:[#allocation16 + $0x5a0] sm:$0xff]
    %v2044 = vld [vmem:[#allocation16 + $0x5a8] sm:$0xff]
    %v2045 = vld [vmem:[#allocation16 + $0x5b0] sm:$0xff]
    %v2046 = vld [vmem:[#allocation16 + $0x5b8] sm:$0xff]
    %v2047 = vld [vmem:[#allocation16 + $0x5c0] sm:$0xff]
    %v2048 = vld [vmem:[#allocation16 + $0x5c8] sm:$0xff]
    %v2049 = vld [vmem:[#allocation16 + $0x5d0] sm:$0xff]
    %v2050 = vld [vmem:[#allocation16 + $0x5d8] sm:$0xff]
    %v2051 = vld [vmem:[#allocation16 + $0x5e0] sm:$0xff]
    %v2052 = vld [vmem:[#allocation16 + $0x5e8] sm:$0xff]
    %v2053 = vld [vmem:[#allocation16 + $0x5f0] sm:$0xff]
    %v2054 = vld [vmem:[#allocation16 + $0x5f8] sm:$0xff]
    %v2055 = vld [vmem:[#allocation16 + $0x600] sm:$0xff]
    %v2056 = vld [vmem:[#allocation16 + $0x608] sm:$0xff]
    %v2057 = vld [vmem:[#allocation16 + $0x610] sm:$0xff]
    %v2058 = vld [vmem:[#allocation16 + $0x618] sm:$0xff]
    %v2059 = vld [vmem:[#allocation16 + $0x620] sm:$0xff]
    %v2060 = vld [vmem:[#allocation16 + $0x628] sm:$0xff]
    %v2061 = vld [vmem:[#allocation16 + $0x630] sm:$0xff]
    %v2062 = vld [vmem:[#allocation16 + $0x638] sm:$0xff]
    %v2063 = vld [vmem:[#allocation16 + $0x640] sm:$0xff]
    %v2064 = vld [vmem:[#allocation16 + $0x648] sm:$0xff]
    %v2065 = vld [vmem:[#allocation16 + $0x650] sm:$0xff]
    %v2066 = vld [vmem:[#allocation16 + $0x658] sm:$0xff]
    %v2067 = vld [vmem:[#allocation16 + $0x660] sm:$0xff]
    %v2068 = vld [vmem:[#allocation16 + $0x668] sm:$0xff]
    %v2069 = vld [vmem:[#allocation16 + $0x670] sm:$0xff]
    %v2070 = vld [vmem:[#allocation16 + $0x678] sm:$0xff]
    %v2071 = vld [vmem:[#allocation16 + $0x680] sm:$0xff]
    %v2072 = vld [vmem:[#allocation16 + $0x688] sm:$0xff]
    %v2073 = vld [vmem:[#allocation16 + $0x690] sm:$0xff]
    %v2074 = vld [vmem:[#allocation16 + $0x698] sm:$0xff]
    %v2075 = vld [vmem:[#allocation16 + $0x6a0] sm:$0xff]
    %v2076 = vld [vmem:[#allocation16 + $0x6a8] sm:$0xff]
    %v2077 = vld [vmem:[#allocation16 + $0x6b0] sm:$0xff]
    %v2078 = vld [vmem:[#allocation16 + $0x6b8] sm:$0xff]
    %v2079 = vld [vmem:[#allocation16 + $0x6c0] sm:$0xff]
    %v2080 = vld [vmem:[#allocation16 + $0x6c8] sm:$0xff]
    %v2081 = vld [vmem:[#allocation16 + $0x6d0] sm:$0xff]
    %v2082 = vld [vmem:[#allocation16 + $0x6d8] sm:$0xff]
    %v2083 = vld [vmem:[#allocation16 + $0x6e0] sm:$0xff]
    %v2084 = vld [vmem:[#allocation16 + $0x6e8] sm:$0xff]
    %v2085 = vld [vmem:[#allocation16 + $0x6f0] sm:$0xff]
    %v2086 = vld [vmem:[#allocation16 + $0x6f8] sm:$0xff]
    %v2087 = vld [vmem:[#allocation16 + $0x700] sm:$0xff]
    %v2088 = vld [vmem:[#allocation16 + $0x708] sm:$0xff]
    %v2089 = vld [vmem:[#allocation16 + $0x710] sm:$0xff]
    %v2090 = vld [vmem:[#allocation16 + $0x718] sm:$0xff]
    %v2091 = vld [vmem:[#allocation16 + $0x720] sm:$0xff]
    %v2092 = vld [vmem:[#allocation16 + $0x728] sm:$0xff]
    %v2093 = vld [vmem:[#allocation16 + $0x730] sm:$0xff]
    %v2094 = vld [vmem:[#allocation16 + $0x738] sm:$0xff]
    %v2095 = vld [vmem:[#allocation16 + $0x740] sm:$0xff]
    %v2096 = vld [vmem:[#allocation16 + $0x748] sm:$0xff]
    %v2097 = vld [vmem:[#allocation16 + $0x750] sm:$0xff]
    %v2098 = vld [vmem:[#allocation16 + $0x758] sm:$0xff]
    %v2099 = vld [vmem:[#allocation16 + $0x760] sm:$0xff]
    %v2100 = vld [vmem:[#allocation16 + $0x768] sm:$0xff]
    %v2101 = vld [vmem:[#allocation16 + $0x770] sm:$0xff]
    %v2102 = vld [vmem:[#allocation16 + $0x778] sm:$0xff]
    %v2103 = vld [vmem:[#allocation16 + $0x780] sm:$0xff]
    %v2104 = vld [vmem:[#allocation16 + $0x788] sm:$0xff]
    %v2105 = vld [vmem:[#allocation16 + $0x790] sm:$0xff]
    %v2106 = vld [vmem:[#allocation16 + $0x798] sm:$0xff]
    %v2107 = vld [vmem:[#allocation16 + $0x7a0] sm:$0xff]
    %v2108 = vld [vmem:[#allocation16 + $0x7a8] sm:$0xff]
    %v2109 = vld [vmem:[#allocation16 + $0x7b0] sm:$0xff]
    %v2110 = vld [vmem:[#allocation16 + $0x7b8] sm:$0xff]
    %v2111 = vld [vmem:[#allocation16 + $0x7c0] sm:$0xff]
    %v2112 = vld [vmem:[#allocation16 + $0x7c8] sm:$0xff]
    %v2113 = vld [vmem:[#allocation16 + $0x7d0] sm:$0xff]
    %v2114 = vld [vmem:[#allocation16 + $0x7d8] sm:$0xff]
    %v2115 = vld [vmem:[#allocation16 + $0x7e0] sm:$0xff]
    %v2116 = vld [vmem:[#allocation16 + $0x7e8] sm:$0xff]
    %v2117 = vld [vmem:[#allocation16 + $0x7f0] sm:$0xff]
    %v2118 = vld [vmem:[#allocation16 + $0x7f8] sm:$0xff]
    %v2119 = vld [vmem:[#allocation16 + $0x800] sm:$0xff]
    %v2120 = vld [vmem:[#allocation16 + $0x808] sm:$0xff]
    %v2121 = vld [vmem:[#allocation16 + $0x810] sm:$0xff]
    %v2122 = vld [vmem:[#allocation16 + $0x818] sm:$0xff]
    %v2123 = vld [vmem:[#allocation16 + $0x820] sm:$0xff]
    %v2124 = vld [vmem:[#allocation16 + $0x828] sm:$0xff]
    %v2125 = vld [vmem:[#allocation16 + $0x830] sm:$0xff]
    %v2126 = vld [vmem:[#allocation16 + $0x838] sm:$0xff]
    %v2127 = vld [vmem:[#allocation16 + $0x840] sm:$0xff]
    %v2128 = vld [vmem:[#allocation16 + $0x848] sm:$0xff]
    %v2129 = vld [vmem:[#allocation16 + $0x850] sm:$0xff]
    %v2130 = vld [vmem:[#allocation16 + $0x858] sm:$0xff]
    %v2131 = vld [vmem:[#allocation16 + $0x860] sm:$0xff]
    %v2132 = vld [vmem:[#allocation16 + $0x868] sm:$0xff]
    %v2133 = vld [vmem:[#allocation16 + $0x870] sm:$0xff]
    %v2134 = vld [vmem:[#allocation16 + $0x878] sm:$0xff]
    %v2135 = vld [vmem:[#allocation16 + $0x880] sm:$0xff]
    %v2136 = vld [vmem:[#allocation16 + $0x888] sm:$0xff]
    %v2137 = vld [vmem:[#allocation16 + $0x890] sm:$0xff]
    %v2138 = vld [vmem:[#allocation16 + $0x898] sm:$0xff]
    %v2139 = vld [vmem:[#allocation16 + $0x8a0] sm:$0xff]
    %v2140 = vld [vmem:[#allocation16 + $0x8a8] sm:$0xff]
    %v2141 = vld [vmem:[#allocation16 + $0x8b0] sm:$0xff]
    %v2142 = vld [vmem:[#allocation16 + $0x8b8] sm:$0xff]
    %v2143 = vld [vmem:[#allocation16 + $0x8c0] sm:$0xff]
    %v2144 = vld [vmem:[#allocation16 + $0x8c8] sm:$0xff]
    %v2145 = vld [vmem:[#allocation16 + $0x8d0] sm:$0xff]
    %v2146 = vld [vmem:[#allocation16 + $0x8d8] sm:$0xff]
    %v2147 = vld [vmem:[#allocation16 + $0x8e0] sm:$0xff]
    %v2148 = vld [vmem:[#allocation16 + $0x8e8] sm:$0xff]
    %v2149 = vld [vmem:[#allocation16 + $0x8f0] sm:$0xff]
    %v2150 = vld [vmem:[#allocation16 + $0x8f8] sm:$0xff]
    %v2151 = vld [vmem:[#allocation16 + $0x900] sm:$0xff]
    %v2152 = vld [vmem:[#allocation16 + $0x908] sm:$0xff]
    %v2153 = vld [vmem:[#allocation16 + $0x910] sm:$0xff]
    %v2154 = vld [vmem:[#allocation16 + $0x918] sm:$0xff]
    %v2155 = vld [vmem:[#allocation16 + $0x920] sm:$0xff]
    %v2156 = vld [vmem:[#allocation16 + $0x928] sm:$0xff]
    %v2157 = vld [vmem:[#allocation16 + $0x930] sm:$0xff]
    %v2158 = vld [vmem:[#allocation16 + $0x938] sm:$0xff]
    %v2159 = vld [vmem:[#allocation16 + $0x940] sm:$0xff]
    %v2160 = vld [vmem:[#allocation16 + $0x948] sm:$0xff]
    %v2161 = vld [vmem:[#allocation16 + $0x950] sm:$0xff]
    %v2162 = vld [vmem:[#allocation16 + $0x958] sm:$0xff]
    %v2163 = vld [vmem:[#allocation16 + $0x960] sm:$0xff]
    %v2164 = vld [vmem:[#allocation16 + $0x968] sm:$0xff]
    %v2165 = vld [vmem:[#allocation16 + $0x970] sm:$0xff]
    %v2166 = vld [vmem:[#allocation16 + $0x978] sm:$0xff]
    %v2167 = vld [vmem:[#allocation16 + $0x980] sm:$0xff]
    %v2168 = vld [vmem:[#allocation16 + $0x988] sm:$0xff]
    %v2169 = vld [vmem:[#allocation16 + $0x990] sm:$0xff]
    %v2170 = vld [vmem:[#allocation16 + $0x998] sm:$0xff]
    %v2171 = vld [vmem:[#allocation16 + $0x9a0] sm:$0xff]
    %v2172 = vld [vmem:[#allocation16 + $0x9a8] sm:$0xff]
    %v2173 = vld [vmem:[#allocation16 + $0x9b0] sm:$0xff]
    %v2174 = vld [vmem:[#allocation16 + $0x9b8] sm:$0xff]
    %v2175 = vld [vmem:[#allocation16 + $0x9c0] sm:$0xff]
    %v2176 = vld [vmem:[#allocation16 + $0x9c8] sm:$0xff]
    %v2177 = vld [vmem:[#allocation16 + $0x9d0] sm:$0xff]
    %v2178 = vld [vmem:[#allocation16 + $0x9d8] sm:$0xff]
    %v2179 = vld [vmem:[#allocation16 + $0x9e0] sm:$0xff]
    %v2180 = vld [vmem:[#allocation16 + $0x9e8] sm:$0xff]
    %v2181 = vld [vmem:[#allocation16 + $0x9f0] sm:$0xff]
    %v2182 = vld [vmem:[#allocation16 + $0x9f8] sm:$0xff]
    %v2183 = vld [vmem:[#allocation17] sm:$0xf]
    %v2185 = vlaneseq
    %v2186 = vshrl.u32 %v2185, 7
    %v2187 = vsub.s32 0, %v2186
    %v2188 = vrot.slane %v2183, %v2187
    %v2189 = vlaneseq
    %v2190 = vshrl.u32 %v2189, 7
    %v2191 = vsub.s32 1, %v2190
    %v2192 = vrot.slane %v2183, %v2191
    %v2193 = vlaneseq
    %v2194 = vshrl.u32 %v2193, 7
    %v2195 = vsub.s32 2, %v2194
    %v2196 = vrot.slane %v2183, %v2195
    %v2197 = vlaneseq
    %v2198 = vshrl.u32 %v2197, 7
    %v2199 = vsub.s32 3, %v2198
    %v2200 = vrot.slane %v2183, %v2199
    %v2525 = vunpack.c.l.b16 %v1863
    %v2526 = vunpack.c.h.b16 %v1863
    %v2527 = vunpack.c.l.b16 %v1864
    %v2528 = vunpack.c.h.b16 %v1864
    %v2529 = vunpack.c.l.b16 %v1865
    %v2530 = vunpack.c.h.b16 %v1865
    %v2531 = vunpack.c.l.b16 %v1866
    %v2532 = vunpack.c.h.b16 %v1866
    %v2533 = vunpack.c.l.b16 %v1867
    %v2534 = vunpack.c.h.b16 %v1867
    %v2535 = vunpack.c.l.b16 %v1868
    %v2536 = vunpack.c.h.b16 %v1868
    %v2537 = vunpack.c.l.b16 %v1869
    %v2538 = vunpack.c.h.b16 %v1869
    %v2539 = vunpack.c.l.b16 %v1870
    %v2540 = vunpack.c.h.b16 %v1870
    %v2541 = vunpack.c.l.b16 %v1871
    %v2542 = vunpack.c.h.b16 %v1871
    %v2543 = vunpack.c.l.b16 %v1872
    %v2544 = vunpack.c.h.b16 %v1872
    %v2545 = vunpack.c.l.b16 %v1873
    %v2546 = vunpack.c.h.b16 %v1873
    %v2547 = vunpack.c.l.b16 %v1874
    %v2548 = vunpack.c.h.b16 %v1874
    %v2549 = vunpack.c.l.b16 %v1875
    %v2550 = vunpack.c.h.b16 %v1875
    %v2551 = vunpack.c.l.b16 %v1876
    %v2552 = vunpack.c.h.b16 %v1876
    %v2553 = vunpack.c.l.b16 %v1877
    %v2554 = vunpack.c.h.b16 %v1877
    %v2555 = vunpack.c.l.b16 %v1878
    %v2556 = vunpack.c.h.b16 %v1878
    %v2557 = vunpack.c.l.b16 %v1879
    %v2558 = vunpack.c.h.b16 %v1879
    %v2559 = vunpack.c.l.b16 %v1880
    %v2560 = vunpack.c.h.b16 %v1880
    %v2561 = vunpack.c.l.b16 %v1881
    %v2562 = vunpack.c.h.b16 %v1881
    %v2563 = vunpack.c.l.b16 %v1882
    %v2564 = vunpack.c.h.b16 %v1882
    %v2565 = vunpack.c.l.b16 %v1883
    %v2566 = vunpack.c.h.b16 %v1883
    %v2567 = vunpack.c.l.b16 %v1884
    %v2568 = vunpack.c.h.b16 %v1884
    %v2569 = vunpack.c.l.b16 %v1885
    %v2570 = vunpack.c.h.b16 %v1885
    %v2571 = vunpack.c.l.b16 %v1886
    %v2572 = vunpack.c.h.b16 %v1886
    %v2573 = vunpack.c.l.b16 %v1887
    %v2574 = vunpack.c.h.b16 %v1887
    %v2575 = vunpack.c.l.b16 %v1888
    %v2576 = vunpack.c.h.b16 %v1888
    %v2577 = vunpack.c.l.b16 %v1889
    %v2578 = vunpack.c.h.b16 %v1889
    %v2579 = vunpack.c.l.b16 %v1890
    %v2580 = vunpack.c.h.b16 %v1890
    %v2581 = vunpack.c.l.b16 %v1891
    %v2582 = vunpack.c.h.b16 %v1891
    %v2583 = vunpack.c.l.b16 %v1892
    %v2584 = vunpack.c.h.b16 %v1892
    %v2585 = vunpack.c.l.b16 %v1893
    %v2586 = vunpack.c.h.b16 %v1893
    %v2587 = vunpack.c.l.b16 %v1894
    %v2588 = vunpack.c.h.b16 %v1894
    %v2589 = vunpack.c.l.b16 %v1895
    %v2590 = vunpack.c.h.b16 %v1895
    %v2591 = vunpack.c.l.b16 %v1896
    %v2592 = vunpack.c.h.b16 %v1896
    %v2593 = vunpack.c.l.b16 %v1897
    %v2594 = vunpack.c.h.b16 %v1897
    %v2595 = vunpack.c.l.b16 %v1898
    %v2596 = vunpack.c.h.b16 %v1898
    %v2597 = vunpack.c.l.b16 %v1899
    %v2598 = vunpack.c.h.b16 %v1899
    %v2599 = vunpack.c.l.b16 %v1900
    %v2600 = vunpack.c.h.b16 %v1900
    %v2601 = vunpack.c.l.b16 %v1901
    %v2602 = vunpack.c.h.b16 %v1901
    %v2603 = vunpack.c.l.b16 %v1902
    %v2604 = vunpack.c.h.b16 %v1902
    %v2605 = vunpack.c.l.b16 %v1903
    %v2606 = vunpack.c.h.b16 %v1903
    %v2607 = vunpack.c.l.b16 %v1904
    %v2608 = vunpack.c.h.b16 %v1904
    %v2609 = vunpack.c.l.b16 %v1905
    %v2610 = vunpack.c.h.b16 %v1905
    %v2611 = vunpack.c.l.b16 %v1906
    %v2612 = vunpack.c.h.b16 %v1906
    %v2613 = vunpack.c.l.b16 %v1907
    %v2614 = vunpack.c.h.b16 %v1907
    %v2615 = vunpack.c.l.b16 %v1908
    %v2616 = vunpack.c.h.b16 %v1908
    %v2617 = vunpack.c.l.b16 %v1909
    %v2618 = vunpack.c.h.b16 %v1909
    %v2619 = vunpack.c.l.b16 %v1910
    %v2620 = vunpack.c.h.b16 %v1910
    %v2621 = vunpack.c.l.b16 %v1911
    %v2622 = vunpack.c.h.b16 %v1911
    %v2623 = vunpack.c.l.b16 %v1912
    %v2624 = vunpack.c.h.b16 %v1912
    %v2625 = vunpack.c.l.b16 %v1913
    %v2626 = vunpack.c.h.b16 %v1913
    %v2627 = vunpack.c.l.b16 %v1914
    %v2628 = vunpack.c.h.b16 %v1914
    %v2629 = vunpack.c.l.b16 %v1915
    %v2630 = vunpack.c.h.b16 %v1915
    %v2631 = vunpack.c.l.b16 %v1916
    %v2632 = vunpack.c.h.b16 %v1916
    %v2633 = vunpack.c.l.b16 %v1917
    %v2634 = vunpack.c.h.b16 %v1917
    %v2635 = vunpack.c.l.b16 %v1918
    %v2636 = vunpack.c.h.b16 %v1918
    %v2637 = vunpack.c.l.b16 %v1919
    %v2638 = vunpack.c.h.b16 %v1919
    %v2639 = vunpack.c.l.b16 %v1920
    %v2640 = vunpack.c.h.b16 %v1920
    %v2641 = vunpack.c.l.b16 %v1921
    %v2642 = vunpack.c.h.b16 %v1921
    %v2643 = vunpack.c.l.b16 %v1922
    %v2644 = vunpack.c.h.b16 %v1922
    %v2645 = vunpack.c.l.b16 %v1923
    %v2646 = vunpack.c.h.b16 %v1923
    %v2647 = vunpack.c.l.b16 %v1924
    %v2648 = vunpack.c.h.b16 %v1924
    %v2649 = vunpack.c.l.b16 %v1925
    %v2650 = vunpack.c.h.b16 %v1925
    %v2651 = vunpack.c.l.b16 %v1926
    %v2652 = vunpack.c.h.b16 %v1926
    %v2653 = vunpack.c.l.b16 %v1927
    %v2654 = vunpack.c.h.b16 %v1927
    %v2655 = vunpack.c.l.b16 %v1928
    %v2656 = vunpack.c.h.b16 %v1928
    %v2657 = vunpack.c.l.b16 %v1929
    %v2658 = vunpack.c.h.b16 %v1929
    %v2659 = vunpack.c.l.b16 %v1930
    %v2660 = vunpack.c.h.b16 %v1930
    %v2661 = vunpack.c.l.b16 %v1931
    %v2662 = vunpack.c.h.b16 %v1931
    %v2663 = vunpack.c.l.b16 %v1932
    %v2664 = vunpack.c.h.b16 %v1932
    %v2665 = vunpack.c.l.b16 %v1933
    %v2666 = vunpack.c.h.b16 %v1933
    %v2667 = vunpack.c.l.b16 %v1934
    %v2668 = vunpack.c.h.b16 %v1934
    %v2669 = vunpack.c.l.b16 %v1935
    %v2670 = vunpack.c.h.b16 %v1935
    %v2671 = vunpack.c.l.b16 %v1936
    %v2672 = vunpack.c.h.b16 %v1936
    %v2673 = vunpack.c.l.b16 %v1937
    %v2674 = vunpack.c.h.b16 %v1937
    %v2675 = vunpack.c.l.b16 %v1938
    %v2676 = vunpack.c.h.b16 %v1938
    %v2677 = vunpack.c.l.b16 %v1939
    %v2678 = vunpack.c.h.b16 %v1939
    %v2679 = vunpack.c.l.b16 %v1940
    %v2680 = vunpack.c.h.b16 %v1940
    %v2681 = vunpack.c.l.b16 %v1941
    %v2682 = vunpack.c.h.b16 %v1941
    %v2683 = vunpack.c.l.b16 %v1942
    %v2684 = vunpack.c.h.b16 %v1942
    %v2685 = vunpack.c.l.b16 %v1943
    %v2686 = vunpack.c.h.b16 %v1943
    %v2687 = vunpack.c.l.b16 %v1944
    %v2688 = vunpack.c.h.b16 %v1944
    %v2689 = vunpack.c.l.b16 %v1945
    %v2690 = vunpack.c.h.b16 %v1945
    %v2691 = vunpack.c.l.b16 %v1946
    %v2692 = vunpack.c.h.b16 %v1946
    %v2693 = vunpack.c.l.b16 %v1947
    %v2694 = vunpack.c.h.b16 %v1947
    %v2695 = vunpack.c.l.b16 %v1948
    %v2696 = vunpack.c.h.b16 %v1948
    %v2697 = vunpack.c.l.b16 %v1949
    %v2698 = vunpack.c.h.b16 %v1949
    %v2699 = vunpack.c.l.b16 %v1950
    %v2700 = vunpack.c.h.b16 %v1950
    %v2701 = vunpack.c.l.b16 %v1951
    %v2702 = vunpack.c.h.b16 %v1951
    %v2703 = vunpack.c.l.b16 %v1952
    %v2704 = vunpack.c.h.b16 %v1952
    %v2705 = vunpack.c.l.b16 %v1953
    %v2706 = vunpack.c.h.b16 %v1953
    %v2707 = vunpack.c.l.b16 %v1954
    %v2708 = vunpack.c.h.b16 %v1954
    %v2709 = vunpack.c.l.b16 %v1955
    %v2710 = vunpack.c.h.b16 %v1955
    %v2711 = vunpack.c.l.b16 %v1956
    %v2712 = vunpack.c.h.b16 %v1956
    %v2713 = vunpack.c.l.b16 %v1957
    %v2714 = vunpack.c.h.b16 %v1957
    %v2715 = vunpack.c.l.b16 %v1958
    %v2716 = vunpack.c.h.b16 %v1958
    %v2717 = vunpack.c.l.b16 %v1959
    %v2718 = vunpack.c.h.b16 %v1959
    %v2719 = vunpack.c.l.b16 %v1960
    %v2720 = vunpack.c.h.b16 %v1960
    %v2721 = vunpack.c.l.b16 %v1961
    %v2722 = vunpack.c.h.b16 %v1961
    %v2723 = vunpack.c.l.b16 %v1962
    %v2724 = vunpack.c.h.b16 %v1962
    %v2725 = vunpack.c.l.b16 %v1963
    %v2726 = vunpack.c.h.b16 %v1963
    %v2727 = vunpack.c.l.b16 %v1964
    %v2728 = vunpack.c.h.b16 %v1964
    %v2729 = vunpack.c.l.b16 %v1965
    %v2730 = vunpack.c.h.b16 %v1965
    %v2731 = vunpack.c.l.b16 %v1966
    %v2732 = vunpack.c.h.b16 %v1966
    %v2733 = vunpack.c.l.b16 %v1967
    %v2734 = vunpack.c.h.b16 %v1967
    %v2735 = vunpack.c.l.b16 %v1968
    %v2736 = vunpack.c.h.b16 %v1968
    %v2737 = vunpack.c.l.b16 %v1969
    %v2738 = vunpack.c.h.b16 %v1969
    %v2739 = vunpack.c.l.b16 %v1970
    %v2740 = vunpack.c.h.b16 %v1970
    %v2741 = vunpack.c.l.b16 %v1971
    %v2742 = vunpack.c.h.b16 %v1971
    %v2743 = vunpack.c.l.b16 %v1972
    %v2744 = vunpack.c.h.b16 %v1972
    %v2745 = vunpack.c.l.b16 %v1973
    %v2746 = vunpack.c.h.b16 %v1973
    %v2747 = vunpack.c.l.b16 %v1974
    %v2748 = vunpack.c.h.b16 %v1974
    %v2749 = vunpack.c.l.b16 %v1975
    %v2750 = vunpack.c.h.b16 %v1975
    %v2751 = vunpack.c.l.b16 %v1976
    %v2752 = vunpack.c.h.b16 %v1976
    %v2753 = vunpack.c.l.b16 %v1977
    %v2754 = vunpack.c.h.b16 %v1977
    %v2755 = vunpack.c.l.b16 %v1978
    %v2756 = vunpack.c.h.b16 %v1978
    %v2757 = vunpack.c.l.b16 %v1979
    %v2758 = vunpack.c.h.b16 %v1979
    %v2759 = vunpack.c.l.b16 %v1980
    %v2760 = vunpack.c.h.b16 %v1980
    %v2761 = vunpack.c.l.b16 %v1981
    %v2762 = vunpack.c.h.b16 %v1981
    %v2763 = vunpack.c.l.b16 %v1982
    %v2764 = vunpack.c.h.b16 %v1982
    %v2765 = vunpack.c.l.b16 %v1983
    %v2766 = vunpack.c.h.b16 %v1983
    %v2767 = vunpack.c.l.b16 %v1984
    %v2768 = vunpack.c.h.b16 %v1984
    %v2769 = vunpack.c.l.b16 %v1985
    %v2770 = vunpack.c.h.b16 %v1985
    %v2771 = vunpack.c.l.b16 %v1986
    %v2772 = vunpack.c.h.b16 %v1986
    %v2773 = vunpack.c.l.b16 %v1987
    %v2774 = vunpack.c.h.b16 %v1987
    %v2775 = vunpack.c.l.b16 %v1988
    %v2776 = vunpack.c.h.b16 %v1988
    %v2777 = vunpack.c.l.b16 %v1989
    %v2778 = vunpack.c.h.b16 %v1989
    %v2779 = vunpack.c.l.b16 %v1990
    %v2780 = vunpack.c.h.b16 %v1990
    %v2781 = vunpack.c.l.b16 %v1991
    %v2782 = vunpack.c.h.b16 %v1991
    %v2783 = vunpack.c.l.b16 %v1992
    %v2784 = vunpack.c.h.b16 %v1992
    %v2785 = vunpack.c.l.b16 %v1993
    %v2786 = vunpack.c.h.b16 %v1993
    %v2787 = vunpack.c.l.b16 %v1994
    %v2788 = vunpack.c.h.b16 %v1994
    %v2789 = vunpack.c.l.b16 %v1995
    %v2790 = vunpack.c.h.b16 %v1995
    %v2791 = vunpack.c.l.b16 %v1996
    %v2792 = vunpack.c.h.b16 %v1996
    %v2793 = vunpack.c.l.b16 %v1997
    %v2794 = vunpack.c.h.b16 %v1997
    %v2795 = vunpack.c.l.b16 %v1998
    %v2796 = vunpack.c.h.b16 %v1998
    %v2797 = vunpack.c.l.b16 %v1999
    %v2798 = vunpack.c.h.b16 %v1999
    %v2799 = vunpack.c.l.b16 %v2000
    %v2800 = vunpack.c.h.b16 %v2000
    %v2801 = vunpack.c.l.b16 %v2001
    %v2802 = vunpack.c.h.b16 %v2001
    %v2803 = vunpack.c.l.b16 %v2002
    %v2804 = vunpack.c.h.b16 %v2002
    %v2805 = vunpack.c.l.b16 %v2003
    %v2806 = vunpack.c.h.b16 %v2003
    %v2807 = vunpack.c.l.b16 %v2004
    %v2808 = vunpack.c.h.b16 %v2004
    %v2809 = vunpack.c.l.b16 %v2005
    %v2810 = vunpack.c.h.b16 %v2005
    %v2811 = vunpack.c.l.b16 %v2006
    %v2812 = vunpack.c.h.b16 %v2006
    %v2813 = vunpack.c.l.b16 %v2007
    %v2814 = vunpack.c.h.b16 %v2007
    %v2815 = vunpack.c.l.b16 %v2008
    %v2816 = vunpack.c.h.b16 %v2008
    %v2817 = vunpack.c.l.b16 %v2009
    %v2818 = vunpack.c.h.b16 %v2009
    %v2819 = vunpack.c.l.b16 %v2010
    %v2820 = vunpack.c.h.b16 %v2010
    %v2821 = vunpack.c.l.b16 %v2011
    %v2822 = vunpack.c.h.b16 %v2011
    %v2823 = vunpack.c.l.b16 %v2012
    %v2824 = vunpack.c.h.b16 %v2012
    %v2825 = vunpack.c.l.b16 %v2013
    %v2826 = vunpack.c.h.b16 %v2013
    %v2827 = vunpack.c.l.b16 %v2014
    %v2828 = vunpack.c.h.b16 %v2014
    %v2829 = vunpack.c.l.b16 %v2015
    %v2830 = vunpack.c.h.b16 %v2015
    %v2831 = vunpack.c.l.b16 %v2016
    %v2832 = vunpack.c.h.b16 %v2016
    %v2833 = vunpack.c.l.b16 %v2017
    %v2834 = vunpack.c.h.b16 %v2017
    %v2835 = vunpack.c.l.b16 %v2018
    %v2836 = vunpack.c.h.b16 %v2018
    %v2837 = vunpack.c.l.b16 %v2019
    %v2838 = vunpack.c.h.b16 %v2019
    %v2839 = vunpack.c.l.b16 %v2020
    %v2840 = vunpack.c.h.b16 %v2020
    %v2841 = vunpack.c.l.b16 %v2021
    %v2842 = vunpack.c.h.b16 %v2021
    %v2843 = vunpack.c.l.b16 %v2022
    %v2844 = vunpack.c.h.b16 %v2022
    %v2845 = vunpack.c.l.b16 %v2023
    %v2846 = vunpack.c.h.b16 %v2023
    %v2847 = vunpack.c.l.b16 %v2024
    %v2848 = vunpack.c.h.b16 %v2024
    %v2849 = vunpack.c.l.b16 %v2025
    %v2850 = vunpack.c.h.b16 %v2025
    %v2851 = vunpack.c.l.b16 %v2026
    %v2852 = vunpack.c.h.b16 %v2026
    %v2853 = vunpack.c.l.b16 %v2027
    %v2854 = vunpack.c.h.b16 %v2027
    %v2855 = vunpack.c.l.b16 %v2028
    %v2856 = vunpack.c.h.b16 %v2028
    %v2857 = vunpack.c.l.b16 %v2029
    %v2858 = vunpack.c.h.b16 %v2029
    %v2859 = vunpack.c.l.b16 %v2030
    %v2860 = vunpack.c.h.b16 %v2030
    %v2861 = vunpack.c.l.b16 %v2031
    %v2862 = vunpack.c.h.b16 %v2031
    %v2863 = vunpack.c.l.b16 %v2032
    %v2864 = vunpack.c.h.b16 %v2032
    %v2865 = vunpack.c.l.b16 %v2033
    %v2866 = vunpack.c.h.b16 %v2033
    %v2867 = vunpack.c.l.b16 %v2034
    %v2868 = vunpack.c.h.b16 %v2034
    %v2869 = vunpack.c.l.b16 %v2035
    %v2870 = vunpack.c.h.b16 %v2035
    %v2871 = vunpack.c.l.b16 %v2036
    %v2872 = vunpack.c.h.b16 %v2036
    %v2873 = vunpack.c.l.b16 %v2037
    %v2874 = vunpack.c.h.b16 %v2037
    %v2875 = vunpack.c.l.b16 %v2038
    %v2876 = vunpack.c.h.b16 %v2038
    %v2877 = vunpack.c.l.b16 %v2039
    %v2878 = vunpack.c.h.b16 %v2039
    %v2879 = vunpack.c.l.b16 %v2040
    %v2880 = vunpack.c.h.b16 %v2040
    %v2881 = vunpack.c.l.b16 %v2041
    %v2882 = vunpack.c.h.b16 %v2041
    %v2883 = vunpack.c.l.b16 %v2042
    %v2884 = vunpack.c.h.b16 %v2042
    %v2885 = vunpack.c.l.b16 %v2043
    %v2886 = vunpack.c.h.b16 %v2043
    %v2887 = vunpack.c.l.b16 %v2044
    %v2888 = vunpack.c.h.b16 %v2044
    %v2889 = vunpack.c.l.b16 %v2045
    %v2890 = vunpack.c.h.b16 %v2045
    %v2891 = vunpack.c.l.b16 %v2046
    %v2892 = vunpack.c.h.b16 %v2046
    %v2893 = vunpack.c.l.b16 %v2047
    %v2894 = vunpack.c.h.b16 %v2047
    %v2895 = vunpack.c.l.b16 %v2048
    %v2896 = vunpack.c.h.b16 %v2048
    %v2897 = vunpack.c.l.b16 %v2049
    %v2898 = vunpack.c.h.b16 %v2049
    %v2899 = vunpack.c.l.b16 %v2050
    %v2900 = vunpack.c.h.b16 %v2050
    %v2901 = vunpack.c.l.b16 %v2051
    %v2902 = vunpack.c.h.b16 %v2051
    %v2903 = vunpack.c.l.b16 %v2052
    %v2904 = vunpack.c.h.b16 %v2052
    %v2905 = vunpack.c.l.b16 %v2053
    %v2906 = vunpack.c.h.b16 %v2053
    %v2907 = vunpack.c.l.b16 %v2054
    %v2908 = vunpack.c.h.b16 %v2054
    %v2909 = vunpack.c.l.b16 %v2055
    %v2910 = vunpack.c.h.b16 %v2055
    %v2911 = vunpack.c.l.b16 %v2056
    %v2912 = vunpack.c.h.b16 %v2056
    %v2913 = vunpack.c.l.b16 %v2057
    %v2914 = vunpack.c.h.b16 %v2057
    %v2915 = vunpack.c.l.b16 %v2058
    %v2916 = vunpack.c.h.b16 %v2058
    %v2917 = vunpack.c.l.b16 %v2059
    %v2918 = vunpack.c.h.b16 %v2059
    %v2919 = vunpack.c.l.b16 %v2060
    %v2920 = vunpack.c.h.b16 %v2060
    %v2921 = vunpack.c.l.b16 %v2061
    %v2922 = vunpack.c.h.b16 %v2061
    %v2923 = vunpack.c.l.b16 %v2062
    %v2924 = vunpack.c.h.b16 %v2062
    %v2925 = vunpack.c.l.b16 %v2063
    %v2926 = vunpack.c.h.b16 %v2063
    %v2927 = vunpack.c.l.b16 %v2064
    %v2928 = vunpack.c.h.b16 %v2064
    %v2929 = vunpack.c.l.b16 %v2065
    %v2930 = vunpack.c.h.b16 %v2065
    %v2931 = vunpack.c.l.b16 %v2066
    %v2932 = vunpack.c.h.b16 %v2066
    %v2933 = vunpack.c.l.b16 %v2067
    %v2934 = vunpack.c.h.b16 %v2067
    %v2935 = vunpack.c.l.b16 %v2068
    %v2936 = vunpack.c.h.b16 %v2068
    %v2937 = vunpack.c.l.b16 %v2069
    %v2938 = vunpack.c.h.b16 %v2069
    %v2939 = vunpack.c.l.b16 %v2070
    %v2940 = vunpack.c.h.b16 %v2070
    %v2941 = vunpack.c.l.b16 %v2071
    %v2942 = vunpack.c.h.b16 %v2071
    %v2943 = vunpack.c.l.b16 %v2072
    %v2944 = vunpack.c.h.b16 %v2072
    %v2945 = vunpack.c.l.b16 %v2073
    %v2946 = vunpack.c.h.b16 %v2073
    %v2947 = vunpack.c.l.b16 %v2074
    %v2948 = vunpack.c.h.b16 %v2074
    %v2949 = vunpack.c.l.b16 %v2075
    %v2950 = vunpack.c.h.b16 %v2075
    %v2951 = vunpack.c.l.b16 %v2076
    %v2952 = vunpack.c.h.b16 %v2076
    %v2953 = vunpack.c.l.b16 %v2077
    %v2954 = vunpack.c.h.b16 %v2077
    %v2955 = vunpack.c.l.b16 %v2078
    %v2956 = vunpack.c.h.b16 %v2078
    %v2957 = vunpack.c.l.b16 %v2079
    %v2958 = vunpack.c.h.b16 %v2079
    %v2959 = vunpack.c.l.b16 %v2080
    %v2960 = vunpack.c.h.b16 %v2080
    %v2961 = vunpack.c.l.b16 %v2081
    %v2962 = vunpack.c.h.b16 %v2081
    %v2963 = vunpack.c.l.b16 %v2082
    %v2964 = vunpack.c.h.b16 %v2082
    %v2965 = vunpack.c.l.b16 %v2083
    %v2966 = vunpack.c.h.b16 %v2083
    %v2967 = vunpack.c.l.b16 %v2084
    %v2968 = vunpack.c.h.b16 %v2084
    %v2969 = vunpack.c.l.b16 %v2085
    %v2970 = vunpack.c.h.b16 %v2085
    %v2971 = vunpack.c.l.b16 %v2086
    %v2972 = vunpack.c.h.b16 %v2086
    %v2973 = vunpack.c.l.b16 %v2087
    %v2974 = vunpack.c.h.b16 %v2087
    %v2975 = vunpack.c.l.b16 %v2088
    %v2976 = vunpack.c.h.b16 %v2088
    %v2977 = vunpack.c.l.b16 %v2089
    %v2978 = vunpack.c.h.b16 %v2089
    %v2979 = vunpack.c.l.b16 %v2090
    %v2980 = vunpack.c.h.b16 %v2090
    %v2981 = vunpack.c.l.b16 %v2091
    %v2982 = vunpack.c.h.b16 %v2091
    %v2983 = vunpack.c.l.b16 %v2092
    %v2984 = vunpack.c.h.b16 %v2092
    %v2985 = vunpack.c.l.b16 %v2093
    %v2986 = vunpack.c.h.b16 %v2093
    %v2987 = vunpack.c.l.b16 %v2094
    %v2988 = vunpack.c.h.b16 %v2094
    %v2989 = vunpack.c.l.b16 %v2095
    %v2990 = vunpack.c.h.b16 %v2095
    %v2991 = vunpack.c.l.b16 %v2096
    %v2992 = vunpack.c.h.b16 %v2096
    %v2993 = vunpack.c.l.b16 %v2097
    %v2994 = vunpack.c.h.b16 %v2097
    %v2995 = vunpack.c.l.b16 %v2098
    %v2996 = vunpack.c.h.b16 %v2098
    %v2997 = vunpack.c.l.b16 %v2099
    %v2998 = vunpack.c.h.b16 %v2099
    %v2999 = vunpack.c.l.b16 %v2100
    %v3000 = vunpack.c.h.b16 %v2100
    %v3001 = vunpack.c.l.b16 %v2101
    %v3002 = vunpack.c.h.b16 %v2101
    %v3003 = vunpack.c.l.b16 %v2102
    %v3004 = vunpack.c.h.b16 %v2102
    %v3005 = vunpack.c.l.b16 %v2103
    %v3006 = vunpack.c.h.b16 %v2103
    %v3007 = vunpack.c.l.b16 %v2104
    %v3008 = vunpack.c.h.b16 %v2104
    %v3009 = vunpack.c.l.b16 %v2105
    %v3010 = vunpack.c.h.b16 %v2105
    %v3011 = vunpack.c.l.b16 %v2106
    %v3012 = vunpack.c.h.b16 %v2106
    %v3013 = vunpack.c.l.b16 %v2107
    %v3014 = vunpack.c.h.b16 %v2107
    %v3015 = vunpack.c.l.b16 %v2108
    %v3016 = vunpack.c.h.b16 %v2108
    %v3017 = vunpack.c.l.b16 %v2109
    %v3018 = vunpack.c.h.b16 %v2109
    %v3019 = vunpack.c.l.b16 %v2110
    %v3020 = vunpack.c.h.b16 %v2110
    %v3021 = vunpack.c.l.b16 %v2111
    %v3022 = vunpack.c.h.b16 %v2111
    %v3023 = vunpack.c.l.b16 %v2112
    %v3024 = vunpack.c.h.b16 %v2112
    %v3025 = vunpack.c.l.b16 %v2113
    %v3026 = vunpack.c.h.b16 %v2113
    %v3027 = vunpack.c.l.b16 %v2114
    %v3028 = vunpack.c.h.b16 %v2114
    %v3029 = vunpack.c.l.b16 %v2115
    %v3030 = vunpack.c.h.b16 %v2115
    %v3031 = vunpack.c.l.b16 %v2116
    %v3032 = vunpack.c.h.b16 %v2116
    %v3033 = vunpack.c.l.b16 %v2117
    %v3034 = vunpack.c.h.b16 %v2117
    %v3035 = vunpack.c.l.b16 %v2118
    %v3036 = vunpack.c.h.b16 %v2118
    %v3037 = vunpack.c.l.b16 %v2119
    %v3038 = vunpack.c.h.b16 %v2119
    %v3039 = vunpack.c.l.b16 %v2120
    %v3040 = vunpack.c.h.b16 %v2120
    %v3041 = vunpack.c.l.b16 %v2121
    %v3042 = vunpack.c.h.b16 %v2121
    %v3043 = vunpack.c.l.b16 %v2122
    %v3044 = vunpack.c.h.b16 %v2122
    %v3045 = vunpack.c.l.b16 %v2123
    %v3046 = vunpack.c.h.b16 %v2123
    %v3047 = vunpack.c.l.b16 %v2124
    %v3048 = vunpack.c.h.b16 %v2124
    %v3049 = vunpack.c.l.b16 %v2125
    %v3050 = vunpack.c.h.b16 %v2125
    %v3051 = vunpack.c.l.b16 %v2126
    %v3052 = vunpack.c.h.b16 %v2126
    %v3053 = vunpack.c.l.b16 %v2127
    %v3054 = vunpack.c.h.b16 %v2127
    %v3055 = vunpack.c.l.b16 %v2128
    %v3056 = vunpack.c.h.b16 %v2128
    %v3057 = vunpack.c.l.b16 %v2129
    %v3058 = vunpack.c.h.b16 %v2129
    %v3059 = vunpack.c.l.b16 %v2130
    %v3060 = vunpack.c.h.b16 %v2130
    %v3061 = vunpack.c.l.b16 %v2131
    %v3062 = vunpack.c.h.b16 %v2131
    %v3063 = vunpack.c.l.b16 %v2132
    %v3064 = vunpack.c.h.b16 %v2132
    %v3065 = vunpack.c.l.b16 %v2133
    %v3066 = vunpack.c.h.b16 %v2133
    %v3067 = vunpack.c.l.b16 %v2134
    %v3068 = vunpack.c.h.b16 %v2134
    %v3069 = vunpack.c.l.b16 %v2135
    %v3070 = vunpack.c.h.b16 %v2135
    %v3071 = vunpack.c.l.b16 %v2136
    %v3072 = vunpack.c.h.b16 %v2136
    %v3073 = vunpack.c.l.b16 %v2137
    %v3074 = vunpack.c.h.b16 %v2137
    %v3075 = vunpack.c.l.b16 %v2138
    %v3076 = vunpack.c.h.b16 %v2138
    %v3077 = vunpack.c.l.b16 %v2139
    %v3078 = vunpack.c.h.b16 %v2139
    %v3079 = vunpack.c.l.b16 %v2140
    %v3080 = vunpack.c.h.b16 %v2140
    %v3081 = vunpack.c.l.b16 %v2141
    %v3082 = vunpack.c.h.b16 %v2141
    %v3083 = vunpack.c.l.b16 %v2142
    %v3084 = vunpack.c.h.b16 %v2142
    %v3085 = vunpack.c.l.b16 %v2143
    %v3086 = vunpack.c.h.b16 %v2143
    %v3087 = vunpack.c.l.b16 %v2144
    %v3088 = vunpack.c.h.b16 %v2144
    %v3089 = vunpack.c.l.b16 %v2145
    %v3090 = vunpack.c.h.b16 %v2145
    %v3091 = vunpack.c.l.b16 %v2146
    %v3092 = vunpack.c.h.b16 %v2146
    %v3093 = vunpack.c.l.b16 %v2147
    %v3094 = vunpack.c.h.b16 %v2147
    %v3095 = vunpack.c.l.b16 %v2148
    %v3096 = vunpack.c.h.b16 %v2148
    %v3097 = vunpack.c.l.b16 %v2149
    %v3098 = vunpack.c.h.b16 %v2149
    %v3099 = vunpack.c.l.b16 %v2150
    %v3100 = vunpack.c.h.b16 %v2150
    %v3101 = vunpack.c.l.b16 %v2151
    %v3102 = vunpack.c.h.b16 %v2151
    %v3103 = vunpack.c.l.b16 %v2152
    %v3104 = vunpack.c.h.b16 %v2152
    %v3105 = vunpack.c.l.b16 %v2153
    %v3106 = vunpack.c.h.b16 %v2153
    %v3107 = vunpack.c.l.b16 %v2154
    %v3108 = vunpack.c.h.b16 %v2154
    %v3109 = vunpack.c.l.b16 %v2155
    %v3110 = vunpack.c.h.b16 %v2155
    %v3111 = vunpack.c.l.b16 %v2156
    %v3112 = vunpack.c.h.b16 %v2156
    %v3113 = vunpack.c.l.b16 %v2157
    %v3114 = vunpack.c.h.b16 %v2157
    %v3115 = vunpack.c.l.b16 %v2158
    %v3116 = vunpack.c.h.b16 %v2158
    %v3117 = vunpack.c.l.b16 %v2159
    %v3118 = vunpack.c.h.b16 %v2159
    %v3119 = vunpack.c.l.b16 %v2160
    %v3120 = vunpack.c.h.b16 %v2160
    %v3121 = vunpack.c.l.b16 %v2161
    %v3122 = vunpack.c.h.b16 %v2161
    %v3123 = vunpack.c.l.b16 %v2162
    %v3124 = vunpack.c.h.b16 %v2162
    %v3125 = vunpack.c.l.b16 %v2163
    %v3126 = vunpack.c.h.b16 %v2163
    %v3127 = vunpack.c.l.b16 %v2164
    %v3128 = vunpack.c.h.b16 %v2164
    %v3129 = vunpack.c.l.b16 %v2165
    %v3130 = vunpack.c.h.b16 %v2165
    %v3131 = vunpack.c.l.b16 %v2166
    %v3132 = vunpack.c.h.b16 %v2166
    %v3133 = vunpack.c.l.b16 %v2167
    %v3134 = vunpack.c.h.b16 %v2167
    %v3135 = vunpack.c.l.b16 %v2168
    %v3136 = vunpack.c.h.b16 %v2168
    %v3137 = vunpack.c.l.b16 %v2169
    %v3138 = vunpack.c.h.b16 %v2169
    %v3139 = vunpack.c.l.b16 %v2170
    %v3140 = vunpack.c.h.b16 %v2170
    %v3141 = vunpack.c.l.b16 %v2171
    %v3142 = vunpack.c.h.b16 %v2171
    %v3143 = vunpack.c.l.b16 %v2172
    %v3144 = vunpack.c.h.b16 %v2172
    %v3145 = vunpack.c.l.b16 %v2173
    %v3146 = vunpack.c.h.b16 %v2173
    %v3147 = vunpack.c.l.b16 %v2174
    %v3148 = vunpack.c.h.b16 %v2174
    %v3149 = vunpack.c.l.b16 %v2175
    %v3150 = vunpack.c.h.b16 %v2175
    %v3151 = vunpack.c.l.b16 %v2176
    %v3152 = vunpack.c.h.b16 %v2176
    %v3153 = vunpack.c.l.b16 %v2177
    %v3154 = vunpack.c.h.b16 %v2177
    %v3155 = vunpack.c.l.b16 %v2178
    %v3156 = vunpack.c.h.b16 %v2178
    %v3157 = vunpack.c.l.b16 %v2179
    %v3158 = vunpack.c.h.b16 %v2179
    %v3159 = vunpack.c.l.b16 %v2180
    %v3160 = vunpack.c.h.b16 %v2180
    %v3161 = vunpack.c.l.b16 %v2181
    %v3162 = vunpack.c.h.b16 %v2181
    %v3163 = vunpack.c.l.b16 %v2182
    %v3164 = vunpack.c.h.b16 %v2182
    %v3165 = vpack.c.b16 %v2529, %v2525
    %v3166 = vpack.c.b16 %v2530, %v2526
    %v3167 = vpack.c.b16 %v2531, %v2527
    %v3168 = vpack.c.b16 %v2532, %v2528
    %v3169 = vpack.c.b16 %v2537, %v2533
    %v3170 = vpack.c.b16 %v2538, %v2534
    %v3171 = vpack.c.b16 %v2539, %v2535
    %v3172 = vpack.c.b16 %v2540, %v2536
    %v3173 = vpack.c.b16 %v2545, %v2541
    %v3174 = vpack.c.b16 %v2546, %v2542
    %v3175 = vpack.c.b16 %v2547, %v2543
    %v3176 = vpack.c.b16 %v2548, %v2544
    %v3177 = vpack.c.b16 %v2553, %v2549
    %v3178 = vpack.c.b16 %v2554, %v2550
    %v3179 = vpack.c.b16 %v2555, %v2551
    %v3180 = vpack.c.b16 %v2556, %v2552
    %v3181 = vpack.c.b16 %v2561, %v2557
    %v3182 = vpack.c.b16 %v2562, %v2558
    %v3183 = vpack.c.b16 %v2563, %v2559
    %v3184 = vpack.c.b16 %v2564, %v2560
    %v3185 = vpack.c.b16 %v2569, %v2565
    %v3186 = vpack.c.b16 %v2570, %v2566
    %v3187 = vpack.c.b16 %v2571, %v2567
    %v3188 = vpack.c.b16 %v2572, %v2568
    %v3189 = vpack.c.b16 %v2577, %v2573
    %v3190 = vpack.c.b16 %v2578, %v2574
    %v3191 = vpack.c.b16 %v2579, %v2575
    %v3192 = vpack.c.b16 %v2580, %v2576
    %v3193 = vpack.c.b16 %v2585, %v2581
    %v3194 = vpack.c.b16 %v2586, %v2582
    %v3195 = vpack.c.b16 %v2587, %v2583
    %v3196 = vpack.c.b16 %v2588, %v2584
    %v3197 = vpack.c.b16 %v2593, %v2589
    %v3198 = vpack.c.b16 %v2594, %v2590
    %v3199 = vpack.c.b16 %v2595, %v2591
    %v3200 = vpack.c.b16 %v2596, %v2592
    %v3201 = vpack.c.b16 %v2601, %v2597
    %v3202 = vpack.c.b16 %v2602, %v2598
    %v3203 = vpack.c.b16 %v2603, %v2599
    %v3204 = vpack.c.b16 %v2604, %v2600
    %v3205 = vpack.c.b16 %v2609, %v2605
    %v3206 = vpack.c.b16 %v2610, %v2606
    %v3207 = vpack.c.b16 %v2611, %v2607
    %v3208 = vpack.c.b16 %v2612, %v2608
    %v3209 = vpack.c.b16 %v2617, %v2613
    %v3210 = vpack.c.b16 %v2618, %v2614
    %v3211 = vpack.c.b16 %v2619, %v2615
    %v3212 = vpack.c.b16 %v2620, %v2616
    %v3213 = vpack.c.b16 %v2625, %v2621
    %v3214 = vpack.c.b16 %v2626, %v2622
    %v3215 = vpack.c.b16 %v2627, %v2623
    %v3216 = vpack.c.b16 %v2628, %v2624
    %v3217 = vpack.c.b16 %v2633, %v2629
    %v3218 = vpack.c.b16 %v2634, %v2630
    %v3219 = vpack.c.b16 %v2635, %v2631
    %v3220 = vpack.c.b16 %v2636, %v2632
    %v3221 = vpack.c.b16 %v2641, %v2637
    %v3222 = vpack.c.b16 %v2642, %v2638
    %v3223 = vpack.c.b16 %v2643, %v2639
    %v3224 = vpack.c.b16 %v2644, %v2640
    %v3225 = vpack.c.b16 %v2649, %v2645
    %v3226 = vpack.c.b16 %v2650, %v2646
    %v3227 = vpack.c.b16 %v2651, %v2647
    %v3228 = vpack.c.b16 %v2652, %v2648
    %v3229 = vpack.c.b16 %v2657, %v2653
    %v3230 = vpack.c.b16 %v2658, %v2654
    %v3231 = vpack.c.b16 %v2659, %v2655
    %v3232 = vpack.c.b16 %v2660, %v2656
    %v3233 = vpack.c.b16 %v2665, %v2661
    %v3234 = vpack.c.b16 %v2666, %v2662
    %v3235 = vpack.c.b16 %v2667, %v2663
    %v3236 = vpack.c.b16 %v2668, %v2664
    %v3237 = vpack.c.b16 %v2673, %v2669
    %v3238 = vpack.c.b16 %v2674, %v2670
    %v3239 = vpack.c.b16 %v2675, %v2671
    %v3240 = vpack.c.b16 %v2676, %v2672
    %v3241 = vpack.c.b16 %v2681, %v2677
    %v3242 = vpack.c.b16 %v2682, %v2678
    %v3243 = vpack.c.b16 %v2683, %v2679
    %v3244 = vpack.c.b16 %v2684, %v2680
    %v3245 = vpack.c.b16 %v2689, %v2685
    %v3246 = vpack.c.b16 %v2690, %v2686
    %v3247 = vpack.c.b16 %v2691, %v2687
    %v3248 = vpack.c.b16 %v2692, %v2688
    %v3249 = vpack.c.b16 %v2697, %v2693
    %v3250 = vpack.c.b16 %v2698, %v2694
    %v3251 = vpack.c.b16 %v2699, %v2695
    %v3252 = vpack.c.b16 %v2700, %v2696
    %v3253 = vpack.c.b16 %v2705, %v2701
    %v3254 = vpack.c.b16 %v2706, %v2702
    %v3255 = vpack.c.b16 %v2707, %v2703
    %v3256 = vpack.c.b16 %v2708, %v2704
    %v3257 = vpack.c.b16 %v2713, %v2709
    %v3258 = vpack.c.b16 %v2714, %v2710
    %v3259 = vpack.c.b16 %v2715, %v2711
    %v3260 = vpack.c.b16 %v2716, %v2712
    %v3261 = vpack.c.b16 %v2721, %v2717
    %v3262 = vpack.c.b16 %v2722, %v2718
    %v3263 = vpack.c.b16 %v2723, %v2719
    %v3264 = vpack.c.b16 %v2724, %v2720
    %v3265 = vpack.c.b16 %v2729, %v2725
    %v3266 = vpack.c.b16 %v2730, %v2726
    %v3267 = vpack.c.b16 %v2731, %v2727
    %v3268 = vpack.c.b16 %v2732, %v2728
    %v3269 = vpack.c.b16 %v2737, %v2733
    %v3270 = vpack.c.b16 %v2738, %v2734
    %v3271 = vpack.c.b16 %v2739, %v2735
    %v3272 = vpack.c.b16 %v2740, %v2736
    %v3273 = vpack.c.b16 %v2745, %v2741
    %v3274 = vpack.c.b16 %v2746, %v2742
    %v3275 = vpack.c.b16 %v2747, %v2743
    %v3276 = vpack.c.b16 %v2748, %v2744
    %v3277 = vpack.c.b16 %v2753, %v2749
    %v3278 = vpack.c.b16 %v2754, %v2750
    %v3279 = vpack.c.b16 %v2755, %v2751
    %v3280 = vpack.c.b16 %v2756, %v2752
    %v3281 = vpack.c.b16 %v2761, %v2757
    %v3282 = vpack.c.b16 %v2762, %v2758
    %v3283 = vpack.c.b16 %v2763, %v2759
    %v3284 = vpack.c.b16 %v2764, %v2760
    %v3285 = vpack.c.b16 %v2769, %v2765
    %v3286 = vpack.c.b16 %v2770, %v2766
    %v3287 = vpack.c.b16 %v2771, %v2767
    %v3288 = vpack.c.b16 %v2772, %v2768
    %v3289 = vpack.c.b16 %v2777, %v2773
    %v3290 = vpack.c.b16 %v2778, %v2774
    %v3291 = vpack.c.b16 %v2779, %v2775
    %v3292 = vpack.c.b16 %v2780, %v2776
    %v3293 = vpack.c.b16 %v2785, %v2781
    %v3294 = vpack.c.b16 %v2786, %v2782
    %v3295 = vpack.c.b16 %v2787, %v2783
    %v3296 = vpack.c.b16 %v2788, %v2784
    %v3297 = vpack.c.b16 %v2793, %v2789
    %v3298 = vpack.c.b16 %v2794, %v2790
    %v3299 = vpack.c.b16 %v2795, %v2791
    %v3300 = vpack.c.b16 %v2796, %v2792
    %v3301 = vpack.c.b16 %v2801, %v2797
    %v3302 = vpack.c.b16 %v2802, %v2798
    %v3303 = vpack.c.b16 %v2803, %v2799
    %v3304 = vpack.c.b16 %v2804, %v2800
    %v3305 = vpack.c.b16 %v2809, %v2805
    %v3306 = vpack.c.b16 %v2810, %v2806
    %v3307 = vpack.c.b16 %v2811, %v2807
    %v3308 = vpack.c.b16 %v2812, %v2808
    %v3309 = vpack.c.b16 %v2817, %v2813
    %v3310 = vpack.c.b16 %v2818, %v2814
    %v3311 = vpack.c.b16 %v2819, %v2815
    %v3312 = vpack.c.b16 %v2820, %v2816
    %v3313 = vpack.c.b16 %v2825, %v2821
    %v3314 = vpack.c.b16 %v2826, %v2822
    %v3315 = vpack.c.b16 %v2827, %v2823
    %v3316 = vpack.c.b16 %v2828, %v2824
    %v3317 = vpack.c.b16 %v2833, %v2829
    %v3318 = vpack.c.b16 %v2834, %v2830
    %v3319 = vpack.c.b16 %v2835, %v2831
    %v3320 = vpack.c.b16 %v2836, %v2832
    %v3321 = vpack.c.b16 %v2841, %v2837
    %v3322 = vpack.c.b16 %v2842, %v2838
    %v3323 = vpack.c.b16 %v2843, %v2839
    %v3324 = vpack.c.b16 %v2844, %v2840
    %v3325 = vpack.c.b16 %v2849, %v2845
    %v3326 = vpack.c.b16 %v2850, %v2846
    %v3327 = vpack.c.b16 %v2851, %v2847
    %v3328 = vpack.c.b16 %v2852, %v2848
    %v3329 = vpack.c.b16 %v2857, %v2853
    %v3330 = vpack.c.b16 %v2858, %v2854
    %v3331 = vpack.c.b16 %v2859, %v2855
    %v3332 = vpack.c.b16 %v2860, %v2856
    %v3333 = vpack.c.b16 %v2865, %v2861
    %v3334 = vpack.c.b16 %v2866, %v2862
    %v3335 = vpack.c.b16 %v2867, %v2863
    %v3336 = vpack.c.b16 %v2868, %v2864
    %v3337 = vpack.c.b16 %v2873, %v2869
    %v3338 = vpack.c.b16 %v2874, %v2870
    %v3339 = vpack.c.b16 %v2875, %v2871
    %v3340 = vpack.c.b16 %v2876, %v2872
    %v3341 = vpack.c.b16 %v2881, %v2877
    %v3342 = vpack.c.b16 %v2882, %v2878
    %v3343 = vpack.c.b16 %v2883, %v2879
    %v3344 = vpack.c.b16 %v2884, %v2880
    %v3345 = vpack.c.b16 %v2889, %v2885
    %v3346 = vpack.c.b16 %v2890, %v2886
    %v3347 = vpack.c.b16 %v2891, %v2887
    %v3348 = vpack.c.b16 %v2892, %v2888
    %v3349 = vpack.c.b16 %v2897, %v2893
    %v3350 = vpack.c.b16 %v2898, %v2894
    %v3351 = vpack.c.b16 %v2899, %v2895
    %v3352 = vpack.c.b16 %v2900, %v2896
    %v3353 = vpack.c.b16 %v2905, %v2901
    %v3354 = vpack.c.b16 %v2906, %v2902
    %v3355 = vpack.c.b16 %v2907, %v2903
    %v3356 = vpack.c.b16 %v2908, %v2904
    %v3357 = vpack.c.b16 %v2913, %v2909
    %v3358 = vpack.c.b16 %v2914, %v2910
    %v3359 = vpack.c.b16 %v2915, %v2911
    %v3360 = vpack.c.b16 %v2916, %v2912
    %v3361 = vpack.c.b16 %v2921, %v2917
    %v3362 = vpack.c.b16 %v2922, %v2918
    %v3363 = vpack.c.b16 %v2923, %v2919
    %v3364 = vpack.c.b16 %v2924, %v2920
    %v3365 = vpack.c.b16 %v2929, %v2925
    %v3366 = vpack.c.b16 %v2930, %v2926
    %v3367 = vpack.c.b16 %v2931, %v2927
    %v3368 = vpack.c.b16 %v2932, %v2928
    %v3369 = vpack.c.b16 %v2937, %v2933
    %v3370 = vpack.c.b16 %v2938, %v2934
    %v3371 = vpack.c.b16 %v2939, %v2935
    %v3372 = vpack.c.b16 %v2940, %v2936
    %v3373 = vpack.c.b16 %v2945, %v2941
    %v3374 = vpack.c.b16 %v2946, %v2942
    %v3375 = vpack.c.b16 %v2947, %v2943
    %v3376 = vpack.c.b16 %v2948, %v2944
    %v3377 = vpack.c.b16 %v2953, %v2949
    %v3378 = vpack.c.b16 %v2954, %v2950
    %v3379 = vpack.c.b16 %v2955, %v2951
    %v3380 = vpack.c.b16 %v2956, %v2952
    %v3381 = vpack.c.b16 %v2961, %v2957
    %v3382 = vpack.c.b16 %v2962, %v2958
    %v3383 = vpack.c.b16 %v2963, %v2959
    %v3384 = vpack.c.b16 %v2964, %v2960
    %v3385 = vpack.c.b16 %v2969, %v2965
    %v3386 = vpack.c.b16 %v2970, %v2966
    %v3387 = vpack.c.b16 %v2971, %v2967
    %v3388 = vpack.c.b16 %v2972, %v2968
    %v3389 = vpack.c.b16 %v2977, %v2973
    %v3390 = vpack.c.b16 %v2978, %v2974
    %v3391 = vpack.c.b16 %v2979, %v2975
    %v3392 = vpack.c.b16 %v2980, %v2976
    %v3393 = vpack.c.b16 %v2985, %v2981
    %v3394 = vpack.c.b16 %v2986, %v2982
    %v3395 = vpack.c.b16 %v2987, %v2983
    %v3396 = vpack.c.b16 %v2988, %v2984
    %v3397 = vpack.c.b16 %v2993, %v2989
    %v3398 = vpack.c.b16 %v2994, %v2990
    %v3399 = vpack.c.b16 %v2995, %v2991
    %v3400 = vpack.c.b16 %v2996, %v2992
    %v3401 = vpack.c.b16 %v3001, %v2997
    %v3402 = vpack.c.b16 %v3002, %v2998
    %v3403 = vpack.c.b16 %v3003, %v2999
    %v3404 = vpack.c.b16 %v3004, %v3000
    %v3405 = vpack.c.b16 %v3009, %v3005
    %v3406 = vpack.c.b16 %v3010, %v3006
    %v3407 = vpack.c.b16 %v3011, %v3007
    %v3408 = vpack.c.b16 %v3012, %v3008
    %v3409 = vpack.c.b16 %v3017, %v3013
    %v3410 = vpack.c.b16 %v3018, %v3014
    %v3411 = vpack.c.b16 %v3019, %v3015
    %v3412 = vpack.c.b16 %v3020, %v3016
    %v3413 = vpack.c.b16 %v3025, %v3021
    %v3414 = vpack.c.b16 %v3026, %v3022
    %v3415 = vpack.c.b16 %v3027, %v3023
    %v3416 = vpack.c.b16 %v3028, %v3024
    %v3417 = vpack.c.b16 %v3033, %v3029
    %v3418 = vpack.c.b16 %v3034, %v3030
    %v3419 = vpack.c.b16 %v3035, %v3031
    %v3420 = vpack.c.b16 %v3036, %v3032
    %v3421 = vpack.c.b16 %v3041, %v3037
    %v3422 = vpack.c.b16 %v3042, %v3038
    %v3423 = vpack.c.b16 %v3043, %v3039
    %v3424 = vpack.c.b16 %v3044, %v3040
    %v3425 = vpack.c.b16 %v3049, %v3045
    %v3426 = vpack.c.b16 %v3050, %v3046
    %v3427 = vpack.c.b16 %v3051, %v3047
    %v3428 = vpack.c.b16 %v3052, %v3048
    %v3429 = vpack.c.b16 %v3057, %v3053
    %v3430 = vpack.c.b16 %v3058, %v3054
    %v3431 = vpack.c.b16 %v3059, %v3055
    %v3432 = vpack.c.b16 %v3060, %v3056
    %v3433 = vpack.c.b16 %v3065, %v3061
    %v3434 = vpack.c.b16 %v3066, %v3062
    %v3435 = vpack.c.b16 %v3067, %v3063
    %v3436 = vpack.c.b16 %v3068, %v3064
    %v3437 = vpack.c.b16 %v3073, %v3069
    %v3438 = vpack.c.b16 %v3074, %v3070
    %v3439 = vpack.c.b16 %v3075, %v3071
    %v3440 = vpack.c.b16 %v3076, %v3072
    %v3441 = vpack.c.b16 %v3081, %v3077
    %v3442 = vpack.c.b16 %v3082, %v3078
    %v3443 = vpack.c.b16 %v3083, %v3079
    %v3444 = vpack.c.b16 %v3084, %v3080
    %v3445 = vpack.c.b16 %v3089, %v3085
    %v3446 = vpack.c.b16 %v3090, %v3086
    %v3447 = vpack.c.b16 %v3091, %v3087
    %v3448 = vpack.c.b16 %v3092, %v3088
    %v3449 = vpack.c.b16 %v3097, %v3093
    %v3450 = vpack.c.b16 %v3098, %v3094
    %v3451 = vpack.c.b16 %v3099, %v3095
    %v3452 = vpack.c.b16 %v3100, %v3096
    %v3453 = vpack.c.b16 %v3105, %v3101
    %v3454 = vpack.c.b16 %v3106, %v3102
    %v3455 = vpack.c.b16 %v3107, %v3103
    %v3456 = vpack.c.b16 %v3108, %v3104
    %v3457 = vpack.c.b16 %v3113, %v3109
    %v3458 = vpack.c.b16 %v3114, %v3110
    %v3459 = vpack.c.b16 %v3115, %v3111
    %v3460 = vpack.c.b16 %v3116, %v3112
    %v3461 = vpack.c.b16 %v3121, %v3117
    %v3462 = vpack.c.b16 %v3122, %v3118
    %v3463 = vpack.c.b16 %v3123, %v3119
    %v3464 = vpack.c.b16 %v3124, %v3120
    %v3465 = vpack.c.b16 %v3129, %v3125
    %v3466 = vpack.c.b16 %v3130, %v3126
    %v3467 = vpack.c.b16 %v3131, %v3127
    %v3468 = vpack.c.b16 %v3132, %v3128
    %v3469 = vpack.c.b16 %v3137, %v3133
    %v3470 = vpack.c.b16 %v3138, %v3134
    %v3471 = vpack.c.b16 %v3139, %v3135
    %v3472 = vpack.c.b16 %v3140, %v3136
    %v3473 = vpack.c.b16 %v3145, %v3141
    %v3474 = vpack.c.b16 %v3146, %v3142
    %v3475 = vpack.c.b16 %v3147, %v3143
    %v3476 = vpack.c.b16 %v3148, %v3144
    %v3477 = vpack.c.b16 %v3153, %v3149
    %v3478 = vpack.c.b16 %v3154, %v3150
    %v3479 = vpack.c.b16 %v3155, %v3151
    %v3480 = vpack.c.b16 %v3156, %v3152
    %v3481 = vpack.c.b16 %v3161, %v3157
    %v3482 = vpack.c.b16 %v3162, %v3158
    %v3483 = vpack.c.b16 %v3163, %v3159
    %v3484 = vpack.c.b16 %v3164, %v3160
    %3805 = vmatprep.subr.bf16.mxu0 %v3166
    %3806 = vmatpush1.bf16.msra.mxu0 %v3165
    %3807 = vmatprep.subr.bf16.mxu0 %v3170
    %3808 = vmatpush1.bf16.msra.mxu0 %v3169
    %3809 = vmatprep.subr.bf16.mxu0 %v3174
    %3810 = vmatpush1.bf16.msra.mxu0 %v3173
    %3811 = vmatprep.subr.bf16.mxu0 %v3178
    %3812 = vmatpush1.bf16.msra.mxu0 %v3177
    %3813 = vmatprep.subr.bf16.mxu0 %v3182
    %3814 = vmatpush1.bf16.msra.mxu0 %v3181
    %3815 = vmatprep.subr.bf16.mxu0 %v3186
    %3816 = vmatpush1.bf16.msra.mxu0 %v3185
    %3817 = vmatprep.subr.bf16.mxu0 %v3190
    %3818 = vmatpush1.bf16.msra.mxu0 %v3189
    %3819 = vmatprep.subr.bf16.mxu0 %v3194
    %3820 = vmatpush1.bf16.msra.mxu0 %v3193
    %3821 = vmatprep.subr.bf16.mxu0 %v3198
    %3822 = vmatpush1.bf16.msra.mxu0 %v3197
    %3823 = vmatprep.subr.bf16.mxu0 %v3202
    %3824 = vmatpush1.bf16.msra.mxu0 %v3201
    %3825 = vmatprep.subr.bf16.mxu0 %v3206
    %3826 = vmatpush1.bf16.msra.mxu0 %v3205
    %3827 = vmatprep.subr.bf16.mxu0 %v3210
    %3828 = vmatpush1.bf16.msra.mxu0 %v3209
    %3829 = vmatprep.subr.bf16.mxu0 %v3214
    %3830 = vmatpush1.bf16.msra.mxu0 %v3213
    %3831 = vmatprep.subr.bf16.mxu0 %v3218
    %3832 = vmatpush1.bf16.msra.mxu0 %v3217
    %3833 = vmatprep.subr.bf16.mxu0 %v3222
    %3834 = vmatpush1.bf16.msra.mxu0 %v3221
    %3835 = vmatprep.subr.bf16.mxu0 %v3226
    %3836 = vmatpush1.bf16.msra.mxu0 %v3225
    %3837 = vmatprep.mubr.bf16.mxu0 %v1854
    %3838 = vmatmul.mubr.bf16.gmra.mrb[0].mxu0 %v1853
    %v3839 = vpop.f32.mrb[0].mxu0
    %v3840 = vadd.f32 %v2188, %v3839
    %v3841 = vpop.f32.mrb[0].mxu0
    %v3842 = vadd.f32 %v2192, %v3841
    %v3843 = vpop.f32.mrb[0].mxu0
    %v3844 = vpop.f32.mrb[0].mxu0
    %3845 = vdwg.mxu0
    %3846 = vmatprep.subr.bf16.mxu0 %v3230
    %3847 = vmatpush1.bf16.msra.mxu0 %v3229
    %3848 = vmatprep.subr.bf16.mxu0 %v3234
    %3849 = vmatpush1.bf16.msra.mxu0 %v3233
    %3850 = vmatprep.subr.bf16.mxu0 %v3238
    %3851 = vmatpush1.bf16.msra.mxu0 %v3237
    %3852 = vmatprep.subr.bf16.mxu0 %v3242
    %3853 = vmatpush1.bf16.msra.mxu0 %v3241
    %3854 = vmatprep.subr.bf16.mxu0 %v3246
    %3855 = vmatpush1.bf16.msra.mxu0 %v3245
    %3856 = vmatprep.subr.bf16.mxu0 %v3250
    %3857 = vmatpush1.bf16.msra.mxu0 %v3249
    %3858 = vmatprep.subr.bf16.mxu0 %v3254
    %3859 = vmatpush1.bf16.msra.mxu0 %v3253
    %3860 = vmatprep.subr.bf16.mxu0 %v3258
    %3861 = vmatpush1.bf16.msra.mxu0 %v3257
    %3862 = vmatprep.subr.bf16.mxu0 %v3262
    %3863 = vmatpush1.bf16.msra.mxu0 %v3261
    %3864 = vmatprep.subr.bf16.mxu0 %v3266
    %3865 = vmatpush1.bf16.msra.mxu0 %v3265
    %3866 = vmatprep.subr.bf16.mxu0 %v3270
    %3867 = vmatpush1.bf16.msra.mxu0 %v3269
    %3868 = vmatprep.subr.bf16.mxu0 %v3274
    %3869 = vmatpush1.bf16.msra.mxu0 %v3273
    %3870 = vmatprep.subr.bf16.mxu0 %v3278
    %3871 = vmatpush1.bf16.msra.mxu0 %v3277
    %3872 = vmatprep.subr.bf16.mxu0 %v3282
    %3873 = vmatpush1.bf16.msra.mxu0 %v3281
    %3874 = vmatprep.subr.bf16.mxu0 %v3286
    %3875 = vmatpush1.bf16.msra.mxu0 %v3285
    %3876 = vmatprep.subr.bf16.mxu0 %v3290
    %3877 = vmatpush1.bf16.msra.mxu0 %v3289
    %3878 = vmatprep.mubr.bf16.mxu0 %v1856
    %3879 = vmatmul.mubr.bf16.gmra.mrb[0].mxu0 %v1855
    %v3880 = vpop.f32.mrb[0].mxu0
    %v3881 = vadd.f32 %v3840, %v3880
    %v3882 = vpop.f32.mrb[0].mxu0
    %v3883 = vadd.f32 %v3842, %v3882
    %v3884 = vpop.f32.mrb[0].mxu0
    %v3885 = vpop.f32.mrb[0].mxu0
    %3886 = vdwg.mxu0
    %3887 = vmatprep.subr.bf16.mxu0 %v3294
    %3888 = vmatpush1.bf16.msra.mxu0 %v3293
    %3889 = vmatprep.subr.bf16.mxu0 %v3298
    %3890 = vmatpush1.bf16.msra.mxu0 %v3297
    %3891 = vmatprep.subr.bf16.mxu0 %v3302
    %3892 = vmatpush1.bf16.msra.mxu0 %v3301
    %3893 = vmatprep.subr.bf16.mxu0 %v3306
    %3894 = vmatpush1.bf16.msra.mxu0 %v3305
    %3895 = vmatprep.subr.bf16.mxu0 %v3310
    %3896 = vmatpush1.bf16.msra.mxu0 %v3309
    %3897 = vmatprep.subr.bf16.mxu0 %v3314
    %3898 = vmatpush1.bf16.msra.mxu0 %v3313
    %3899 = vmatprep.subr.bf16.mxu0 %v3318
    %3900 = vmatpush1.bf16.msra.mxu0 %v3317
    %3901 = vmatprep.subr.bf16.mxu0 %v3322
    %3902 = vmatpush1.bf16.msra.mxu0 %v3321
    %3903 = vmatprep.subr.bf16.mxu0 %v3326
    %3904 = vmatpush1.bf16.msra.mxu0 %v3325
    %3905 = vmatprep.subr.bf16.mxu0 %v3330
    %3906 = vmatpush1.bf16.msra.mxu0 %v3329
    %3907 = vmatprep.subr.bf16.mxu0 %v3334
    %3908 = vmatpush1.bf16.msra.mxu0 %v3333
    %3909 = vmatprep.subr.bf16.mxu0 %v3338
    %3910 = vmatpush1.bf16.msra.mxu0 %v3337
    %3911 = vmatprep.subr.bf16.mxu0 %v3342
    %3912 = vmatpush1.bf16.msra.mxu0 %v3341
    %3913 = vmatprep.subr.bf16.mxu0 %v3346
    %3914 = vmatpush1.bf16.msra.mxu0 %v3345
    %3915 = vmatprep.subr.bf16.mxu0 %v3350
    %3916 = vmatpush1.bf16.msra.mxu0 %v3349
    %3917 = vmatprep.subr.bf16.mxu0 %v3354
    %3918 = vmatpush1.bf16.msra.mxu0 %v3353
    %3919 = vmatprep.mubr.bf16.mxu0 %v1858
    %3920 = vmatmul.mubr.bf16.gmra.mrb[0].mxu0 %v1857
    %v3921 = vpop.f32.mrb[0].mxu0
    %v3922 = vadd.f32 %v3881, %v3921
    %v3923 = vpop.f32.mrb[0].mxu0
    %v3924 = vadd.f32 %v3883, %v3923
    %v3925 = vpop.f32.mrb[0].mxu0
    %v3926 = vpop.f32.mrb[0].mxu0
    %3927 = vdwg.mxu0
    %3928 = vmatprep.subr.bf16.mxu0 %v3358
    %3929 = vmatpush1.bf16.msra.mxu0 %v3357
    %3930 = vmatprep.subr.bf16.mxu0 %v3362
    %3931 = vmatpush1.bf16.msra.mxu0 %v3361
    %3932 = vmatprep.subr.bf16.mxu0 %v3366
    %3933 = vmatpush1.bf16.msra.mxu0 %v3365
    %3934 = vmatprep.subr.bf16.mxu0 %v3370
    %3935 = vmatpush1.bf16.msra.mxu0 %v3369
    %3936 = vmatprep.subr.bf16.mxu0 %v3374
    %3937 = vmatpush1.bf16.msra.mxu0 %v3373
    %3938 = vmatprep.subr.bf16.mxu0 %v3378
    %3939 = vmatpush1.bf16.msra.mxu0 %v3377
    %3940 = vmatprep.subr.bf16.mxu0 %v3382
    %3941 = vmatpush1.bf16.msra.mxu0 %v3381
    %3942 = vmatprep.subr.bf16.mxu0 %v3386
    %3943 = vmatpush1.bf16.msra.mxu0 %v3385
    %3944 = vmatprep.subr.bf16.mxu0 %v3390
    %3945 = vmatpush1.bf16.msra.mxu0 %v3389
    %3946 = vmatprep.subr.bf16.mxu0 %v3394
    %3947 = vmatpush1.bf16.msra.mxu0 %v3393
    %3948 = vmatprep.subr.bf16.mxu0 %v3398
    %3949 = vmatpush1.bf16.msra.mxu0 %v3397
    %3950 = vmatprep.subr.bf16.mxu0 %v3402
    %3951 = vmatpush1.bf16.msra.mxu0 %v3401
    %3952 = vmatprep.subr.bf16.mxu0 %v3406
    %3953 = vmatpush1.bf16.msra.mxu0 %v3405
    %3954 = vmatprep.subr.bf16.mxu0 %v3410
    %3955 = vmatpush1.bf16.msra.mxu0 %v3409
    %3956 = vmatprep.subr.bf16.mxu0 %v3414
    %3957 = vmatpush1.bf16.msra.mxu0 %v3413
    %3958 = vmatprep.subr.bf16.mxu0 %v3418
    %3959 = vmatpush1.bf16.msra.mxu0 %v3417
    %3960 = vmatprep.mubr.bf16.mxu0 %v1860
    %3961 = vmatmul.mubr.bf16.gmra.mrb[0].mxu0 %v1859
    %v3962 = vpop.f32.mrb[0].mxu0
    %v3963 = vadd.f32 %v3922, %v3962
    %v3964 = vpop.f32.mrb[0].mxu0
    %v3965 = vadd.f32 %v3924, %v3964
    %v3966 = vpop.f32.mrb[0].mxu0
    %v3967 = vpop.f32.mrb[0].mxu0
    %3968 = vdwg.mxu0
    %3969 = vmatprep.subr.bf16.mxu0 %v3422
    %3970 = vmatpush1.bf16.msra.mxu0 %v3421
    %3971 = vmatprep.subr.bf16.mxu0 %v3426
    %3972 = vmatpush1.bf16.msra.mxu0 %v3425
    %3973 = vmatprep.subr.bf16.mxu0 %v3430
    %3974 = vmatpush1.bf16.msra.mxu0 %v3429
    %3975 = vmatprep.subr.bf16.mxu0 %v3434
    %3976 = vmatpush1.bf16.msra.mxu0 %v3433
    %3977 = vmatprep.subr.bf16.mxu0 %v3438
    %3978 = vmatpush1.bf16.msra.mxu0 %v3437
    %3979 = vmatprep.subr.bf16.mxu0 %v3442
    %3980 = vmatpush1.bf16.msra.mxu0 %v3441
    %3981 = vmatprep.subr.bf16.mxu0 %v3446
    %3982 = vmatpush1.bf16.msra.mxu0 %v3445
    %3983 = vmatprep.subr.bf16.mxu0 %v3450
    %3984 = vmatpush1.bf16.msra.mxu0 %v3449
    %3985 = vmatprep.subr.bf16.mxu0 %v3454
    %3986 = vmatpush1.bf16.msra.mxu0 %v3453
    %3987 = vmatprep.subr.bf16.mxu0 %v3458
    %3988 = vmatpush1.bf16.msra.mxu0 %v3457
    %3989 = vmatprep.subr.bf16.mxu0 %v3462
    %3990 = vmatpush1.bf16.msra.mxu0 %v3461
    %3991 = vmatprep.subr.bf16.mxu0 %v3466
    %3992 = vmatpush1.bf16.msra.mxu0 %v3465
    %3993 = vmatprep.subr.bf16.mxu0 %v3470
    %3994 = vmatpush1.bf16.msra.mxu0 %v3469
    %3995 = vmatprep.subr.bf16.mxu0 %v3474
    %3996 = vmatpush1.bf16.msra.mxu0 %v3473
    %3997 = vmatprep.subr.bf16.mxu0 %v3478
    %3998 = vmatpush1.bf16.msra.mxu0 %v3477
    %3999 = vmatprep.subr.bf16.mxu0 %v3482
    %4000 = vmatpush1.bf16.msra.mxu0 %v3481
    %4001 = vmatprep.mubr.bf16.mxu0 %v1862
    %4002 = vmatmul.mubr.bf16.gmra.mrb[0].mxu0 %v1861
    %v4003 = vpop.f32.mrb[0].mxu0
    %v4004 = vadd.f32 %v3963, %v4003
    %v4005 = vpop.f32.mrb[0].mxu0
    %v4006 = vadd.f32 %v3965, %v4005
    %v4007 = vpop.f32.mrb[0].mxu0
    %v4008 = vpop.f32.mrb[0].mxu0
    %4009 = vdwg.mxu0
    %4010 = vmatprep.subr.bf16.mxu0 %v3168
    %4011 = vmatpush1.bf16.msra.mxu0 %v3167
    %4012 = vmatprep.subr.bf16.mxu0 %v3172
    %4013 = vmatpush1.bf16.msra.mxu0 %v3171
    %4014 = vmatprep.subr.bf16.mxu0 %v3176
    %4015 = vmatpush1.bf16.msra.mxu0 %v3175
    %4016 = vmatprep.subr.bf16.mxu0 %v3180
    %4017 = vmatpush1.bf16.msra.mxu0 %v3179
    %4018 = vmatprep.subr.bf16.mxu0 %v3184
    %4019 = vmatpush1.bf16.msra.mxu0 %v3183
    %4020 = vmatprep.subr.bf16.mxu0 %v3188
    %4021 = vmatpush1.bf16.msra.mxu0 %v3187
    %4022 = vmatprep.subr.bf16.mxu0 %v3192
    %4023 = vmatpush1.bf16.msra.mxu0 %v3191
    %4024 = vmatprep.subr.bf16.mxu0 %v3196
    %4025 = vmatpush1.bf16.msra.mxu0 %v3195
    %4026 = vmatprep.subr.bf16.mxu0 %v3200
    %4027 = vmatpush1.bf16.msra.mxu0 %v3199
    %4028 = vmatprep.subr.bf16.mxu0 %v3204
    %4029 = vmatpush1.bf16.msra.mxu0 %v3203
    %4030 = vmatprep.subr.bf16.mxu0 %v3208
    %4031 = vmatpush1.bf16.msra.mxu0 %v3207
    %4032 = vmatprep.subr.bf16.mxu0 %v3212
    %4033 = vmatpush1.bf16.msra.mxu0 %v3211
    %4034 = vmatprep.subr.bf16.mxu0 %v3216
    %4035 = vmatpush1.bf16.msra.mxu0 %v3215
    %4036 = vmatprep.subr.bf16.mxu0 %v3220
    %4037 = vmatpush1.bf16.msra.mxu0 %v3219
    %4038 = vmatprep.subr.bf16.mxu0 %v3224
    %4039 = vmatpush1.bf16.msra.mxu0 %v3223
    %4040 = vmatprep.subr.bf16.mxu0 %v3228
    %4041 = vmatpush1.bf16.msra.mxu0 %v3227
    %4042 = vmatprep.mubr.bf16.mxu0 %v1854
    %4043 = vmatmul.mubr.bf16.gmra.mrb[0].mxu0 %v1853
    %v4044 = vpop.f32.mrb[0].mxu0
    %v4045 = vadd.f32 %v2196, %v4044
    %v4046 = vpop.f32.mrb[0].mxu0
    %v4047 = vadd.f32 %v2200, %v4046
    %v4048 = vpop.f32.mrb[0].mxu0
    %v4049 = vpop.f32.mrb[0].mxu0
    %4050 = vdwg.mxu0
    %4051 = vmatprep.subr.bf16.mxu0 %v3232
    %4052 = vmatpush1.bf16.msra.mxu0 %v3231
    %4053 = vmatprep.subr.bf16.mxu0 %v3236
    %4054 = vmatpush1.bf16.msra.mxu0 %v3235
    %4055 = vmatprep.subr.bf16.mxu0 %v3240
    %4056 = vmatpush1.bf16.msra.mxu0 %v3239
    %4057 = vmatprep.subr.bf16.mxu0 %v3244
    %4058 = vmatpush1.bf16.msra.mxu0 %v3243
    %4059 = vmatprep.subr.bf16.mxu0 %v3248
    %4060 = vmatpush1.bf16.msra.mxu0 %v3247
    %4061 = vmatprep.subr.bf16.mxu0 %v3252
    %4062 = vmatpush1.bf16.msra.mxu0 %v3251
    %4063 = vmatprep.subr.bf16.mxu0 %v3256
    %4064 = vmatpush1.bf16.msra.mxu0 %v3255
    %4065 = vmatprep.subr.bf16.mxu0 %v3260
    %4066 = vmatpush1.bf16.msra.mxu0 %v3259
    %4067 = vmatprep.subr.bf16.mxu0 %v3264
    %4068 = vmatpush1.bf16.msra.mxu0 %v3263
    %4069 = vmatprep.subr.bf16.mxu0 %v3268
    %4070 = vmatpush1.bf16.msra.mxu0 %v3267
    %4071 = vmatprep.subr.bf16.mxu0 %v3272
    %4072 = vmatpush1.bf16.msra.mxu0 %v3271
    %4073 = vmatprep.subr.bf16.mxu0 %v3276
    %4074 = vmatpush1.bf16.msra.mxu0 %v3275
    %4075 = vmatprep.subr.bf16.mxu0 %v3280
    %4076 = vmatpush1.bf16.msra.mxu0 %v3279
    %4077 = vmatprep.subr.bf16.mxu0 %v3284
    %4078 = vmatpush1.bf16.msra.mxu0 %v3283
    %4079 = vmatprep.subr.bf16.mxu0 %v3288
    %4080 = vmatpush1.bf16.msra.mxu0 %v3287
    %4081 = vmatprep.subr.bf16.mxu0 %v3292
    %4082 = vmatpush1.bf16.msra.mxu0 %v3291
    %4083 = vmatprep.mubr.bf16.mxu0 %v1856
    %4084 = vmatmul.mubr.bf16.gmra.mrb[0].mxu0 %v1855
    %v4085 = vpop.f32.mrb[0].mxu0
    %v4086 = vadd.f32 %v4045, %v4085
    %v4087 = vpop.f32.mrb[0].mxu0
    %v4088 = vadd.f32 %v4047, %v4087
    %v4089 = vpop.f32.mrb[0].mxu0
    %v4090 = vpop.f32.mrb[0].mxu0
    %4091 = vdwg.mxu0
    %4092 = vmatprep.subr.bf16.mxu0 %v3296
    %4093 = vmatpush1.bf16.msra.mxu0 %v3295
    %4094 = vmatprep.subr.bf16.mxu0 %v3300
    %4095 = vmatpush1.bf16.msra.mxu0 %v3299
    %4096 = vmatprep.subr.bf16.mxu0 %v3304
    %4097 = vmatpush1.bf16.msra.mxu0 %v3303
    %4098 = vmatprep.subr.bf16.mxu0 %v3308
    %4099 = vmatpush1.bf16.msra.mxu0 %v3307
    %4100 = vmatprep.subr.bf16.mxu0 %v3312
    %4101 = vmatpush1.bf16.msra.mxu0 %v3311
    %4102 = vmatprep.subr.bf16.mxu0 %v3316
    %4103 = vmatpush1.bf16.msra.mxu0 %v3315
    %4104 = vmatprep.subr.bf16.mxu0 %v3320
    %4105 = vmatpush1.bf16.msra.mxu0 %v3319
    %4106 = vmatprep.subr.bf16.mxu0 %v3324
    %4107 = vmatpush1.bf16.msra.mxu0 %v3323
    %4108 = vmatprep.subr.bf16.mxu0 %v3328
    %4109 = vmatpush1.bf16.msra.mxu0 %v3327
    %4110 = vmatprep.subr.bf16.mxu0 %v3332
    %4111 = vmatpush1.bf16.msra.mxu0 %v3331
    %4112 = vmatprep.subr.bf16.mxu0 %v3336
    %4113 = vmatpush1.bf16.msra.mxu0 %v3335
    %4114 = vmatprep.subr.bf16.mxu0 %v3340
    %4115 = vmatpush1.bf16.msra.mxu0 %v3339
    %4116 = vmatprep.subr.bf16.mxu0 %v3344
    %4117 = vmatpush1.bf16.msra.mxu0 %v3343
    %4118 = vmatprep.subr.bf16.mxu0 %v3348
    %4119 = vmatpush1.bf16.msra.mxu0 %v3347
    %4120 = vmatprep.subr.bf16.mxu0 %v3352
    %4121 = vmatpush1.bf16.msra.mxu0 %v3351
    %4122 = vmatprep.subr.bf16.mxu0 %v3356
    %4123 = vmatpush1.bf16.msra.mxu0 %v3355
    %4124 = vmatprep.mubr.bf16.mxu0 %v1858
    %4125 = vmatmul.mubr.bf16.gmra.mrb[0].mxu0 %v1857
    %v4126 = vpop.f32.mrb[0].mxu0
    %v4127 = vadd.f32 %v4086, %v4126
    %v4128 = vpop.f32.mrb[0].mxu0
    %v4129 = vadd.f32 %v4088, %v4128
    %v4130 = vpop.f32.mrb[0].mxu0
    %v4131 = vpop.f32.mrb[0].mxu0
    %4132 = vdwg.mxu0
    %4133 = vmatprep.subr.bf16.mxu0 %v3360
    %4134 = vmatpush1.bf16.msra.mxu0 %v3359
    %4135 = vmatprep.subr.bf16.mxu0 %v3364
    %4136 = vmatpush1.bf16.msra.mxu0 %v3363
    %4137 = vmatprep.subr.bf16.mxu0 %v3368
    %4138 = vmatpush1.bf16.msra.mxu0 %v3367
    %4139 = vmatprep.subr.bf16.mxu0 %v3372
    %4140 = vmatpush1.bf16.msra.mxu0 %v3371
    %4141 = vmatprep.subr.bf16.mxu0 %v3376
    %4142 = vmatpush1.bf16.msra.mxu0 %v3375
    %4143 = vmatprep.subr.bf16.mxu0 %v3380
    %4144 = vmatpush1.bf16.msra.mxu0 %v3379
    %4145 = vmatprep.subr.bf16.mxu0 %v3384
    %4146 = vmatpush1.bf16.msra.mxu0 %v3383
    %4147 = vmatprep.subr.bf16.mxu0 %v3388
    %4148 = vmatpush1.bf16.msra.mxu0 %v3387
    %4149 = vmatprep.subr.bf16.mxu0 %v3392
    %4150 = vmatpush1.bf16.msra.mxu0 %v3391
    %4151 = vmatprep.subr.bf16.mxu0 %v3396
    %4152 = vmatpush1.bf16.msra.mxu0 %v3395
    %4153 = vmatprep.subr.bf16.mxu0 %v3400
    %4154 = vmatpush1.bf16.msra.mxu0 %v3399
    %4155 = vmatprep.subr.bf16.mxu0 %v3404
    %4156 = vmatpush1.bf16.msra.mxu0 %v3403
    %4157 = vmatprep.subr.bf16.mxu0 %v3408
    %4158 = vmatpush1.bf16.msra.mxu0 %v3407
    %4159 = vmatprep.subr.bf16.mxu0 %v3412
    %4160 = vmatpush1.bf16.msra.mxu0 %v3411
    %4161 = vmatprep.subr.bf16.mxu0 %v3416
    %4162 = vmatpush1.bf16.msra.mxu0 %v3415
    %4163 = vmatprep.subr.bf16.mxu0 %v3420
    %4164 = vmatpush1.bf16.msra.mxu0 %v3419
    %4165 = vmatprep.mubr.bf16.mxu0 %v1860
    %4166 = vmatmul.mubr.bf16.gmra.mrb[0].mxu0 %v1859
    %v4167 = vpop.f32.mrb[0].mxu0
    %v4168 = vadd.f32 %v4127, %v4167
    %v4169 = vpop.f32.mrb[0].mxu0
    %v4170 = vadd.f32 %v4129, %v4169
    %v4171 = vpop.f32.mrb[0].mxu0
    %v4172 = vpop.f32.mrb[0].mxu0
    %4173 = vdwg.mxu0
    %4174 = vmatprep.subr.bf16.mxu0 %v3424
    %4175 = vmatpush1.bf16.msra.mxu0 %v3423
    %4176 = vmatprep.subr.bf16.mxu0 %v3428
    %4177 = vmatpush1.bf16.msra.mxu0 %v3427
    %4178 = vmatprep.subr.bf16.mxu0 %v3432
    %4179 = vmatpush1.bf16.msra.mxu0 %v3431
    %4180 = vmatprep.subr.bf16.mxu0 %v3436
    %4181 = vmatpush1.bf16.msra.mxu0 %v3435
    %4182 = vmatprep.subr.bf16.mxu0 %v3440
    %4183 = vmatpush1.bf16.msra.mxu0 %v3439
    %4184 = vmatprep.subr.bf16.mxu0 %v3444
    %4185 = vmatpush1.bf16.msra.mxu0 %v3443
    %4186 = vmatprep.subr.bf16.mxu0 %v3448
    %4187 = vmatpush1.bf16.msra.mxu0 %v3447
    %4188 = vmatprep.subr.bf16.mxu0 %v3452
    %4189 = vmatpush1.bf16.msra.mxu0 %v3451
    %4190 = vmatprep.subr.bf16.mxu0 %v3456
    %4191 = vmatpush1.bf16.msra.mxu0 %v3455
    %4192 = vmatprep.subr.bf16.mxu0 %v3460
    %4193 = vmatpush1.bf16.msra.mxu0 %v3459
    %4194 = vmatprep.subr.bf16.mxu0 %v3464
    %4195 = vmatpush1.bf16.msra.mxu0 %v3463
    %4196 = vmatprep.subr.bf16.mxu0 %v3468
    %4197 = vmatpush1.bf16.msra.mxu0 %v3467
    %4198 = vmatprep.subr.bf16.mxu0 %v3472
    %4199 = vmatpush1.bf16.msra.mxu0 %v3471
    %4200 = vmatprep.subr.bf16.mxu0 %v3476
    %4201 = vmatpush1.bf16.msra.mxu0 %v3475
    %4202 = vmatprep.subr.bf16.mxu0 %v3480
    %4203 = vmatpush1.bf16.msra.mxu0 %v3479
    %4204 = vmatprep.subr.bf16.mxu0 %v3484
    %4205 = vmatpush1.bf16.msra.mxu0 %v3483
    %4206 = vmatprep.mubr.bf16.mxu0 %v1862
    %4207 = vmatmul.mubr.bf16.gmra.mrb[0].mxu0 %v1861
    %v4208 = vpop.f32.mrb[0].mxu0
    %v4209 = vadd.f32 %v4168, %v4208
    %v4210 = vpop.f32.mrb[0].mxu0
    %v4211 = vadd.f32 %v4170, %v4210
    %v4212 = vpop.f32.mrb[0].mxu0
    %v4213 = vpop.f32.mrb[0].mxu0
    %4214 = vdwg.mxu0
    %v4215 = vmax.f32 %v4004, 0.0
    %v4216 = vmax.f32 %v4006, 0.0
    %v4217 = vmax.f32 %v4209, 0.0
    %v4218 = vmax.f32 %v4211, 0.0
    %v4219 = vpack.c.bf16 %v4215, %v4215
    %v4220 = vpack.c.bf16 %v4216, %v4216
    %v4221 = vpack.c.bf16 %v4217, %v4217
    %v4222 = vpack.c.bf16 %v4218, %v4218
    %v4223 = vld [vmem:[#allocation19] sm:$0xf]
    %v4224 = vld [vmem:[#allocation19 + $0x4] sm:$0xf]
    %v4225 = vld [vmem:[#allocation19 + $0x8] sm:$0xf]
    %v4226 = vld [vmem:[#allocation19 + $0xc] sm:$0xf]
    %v4227 = vld [vmem:[#allocation19 + $0x10] sm:$0xf]
    %v4228 = vld [vmem:[#allocation19 + $0x14] sm:$0xf]
    %v4229 = vld [vmem:[#allocation19 + $0x18] sm:$0xf]
    %v4230 = vld [vmem:[#allocation19 + $0x1c] sm:$0xf]
    %v4231 = vld [vmem:[#allocation19 + $0x20] sm:$0xf]
    %v4232 = vld [vmem:[#allocation19 + $0x24] sm:$0xf]
    %v4233 = vld [vmem:[#allocation19 + $0x28] sm:$0xf]
    %v4234 = vld [vmem:[#allocation19 + $0x2c] sm:$0xf]
    %v4235 = vld [vmem:[#allocation19 + $0x30] sm:$0xf]
    %v4236 = vld [vmem:[#allocation19 + $0x34] sm:$0xf]
    %v4237 = vld [vmem:[#allocation19 + $0x38] sm:$0xf]
    %v4238 = vld [vmem:[#allocation19 + $0x3c] sm:$0xf]
    %v4239 = vld [vmem:[#allocation19 + $0x40] sm:$0xf]
    %v4240 = vld [vmem:[#allocation19 + $0x44] sm:$0xf]
    %v4241 = vld [vmem:[#allocation19 + $0x48] sm:$0xf]
    %v4242 = vld [vmem:[#allocation19 + $0x4c] sm:$0xf]
    %v4243 = vld [vmem:[#allocation19 + $0x50] sm:$0xf]
    %v4244 = vld [vmem:[#allocation19 + $0x54] sm:$0xf]
    %v4245 = vld [vmem:[#allocation19 + $0x58] sm:$0xf]
    %v4246 = vld [vmem:[#allocation19 + $0x5c] sm:$0xf]
    %v4247 = vld [vmem:[#allocation19 + $0x60] sm:$0xf]
    %v4248 = vld [vmem:[#allocation19 + $0x64] sm:$0xf]
    %v4249 = vld [vmem:[#allocation19 + $0x68] sm:$0xf]
    %v4250 = vld [vmem:[#allocation19 + $0x6c] sm:$0xf]
    %v4251 = vld [vmem:[#allocation19 + $0x70] sm:$0xf]
    %v4252 = vld [vmem:[#allocation19 + $0x74] sm:$0xf]
    %v4253 = vld [vmem:[#allocation19 + $0x78] sm:$0xf]
    %v4254 = vld [vmem:[#allocation19 + $0x7c] sm:$0xf]
    %v4255 = vld [vmem:[#allocation19 + $0x80] sm:$0xf]
    %v4256 = vld [vmem:[#allocation19 + $0x84] sm:$0xf]
    %v4257 = vld [vmem:[#allocation19 + $0x88] sm:$0xf]
    %v4258 = vld [vmem:[#allocation19 + $0x8c] sm:$0xf]
    %v4259 = vld [vmem:[#allocation19 + $0x90] sm:$0xf]
    %v4260 = vld [vmem:[#allocation19 + $0x94] sm:$0xf]
    %v4261 = vld [vmem:[#allocation19 + $0x98] sm:$0xf]
    %v4262 = vld [vmem:[#allocation19 + $0x9c] sm:$0xf]
    %v4263 = vld [vmem:[#allocation19 + $0xa0] sm:$0xf]
    %v4264 = vld [vmem:[#allocation19 + $0xa4] sm:$0xf]
    %v4265 = vld [vmem:[#allocation19 + $0xa8] sm:$0xf]
    %v4266 = vld [vmem:[#allocation19 + $0xac] sm:$0xf]
    %v4267 = vld [vmem:[#allocation19 + $0xb0] sm:$0xf]
    %v4268 = vld [vmem:[#allocation19 + $0xb4] sm:$0xf]
    %v4269 = vld [vmem:[#allocation19 + $0xb8] sm:$0xf]
    %v4270 = vld [vmem:[#allocation19 + $0xbc] sm:$0xf]
    %v4271 = vld [vmem:[#allocation19 + $0xc0] sm:$0xf]
    %v4272 = vld [vmem:[#allocation19 + $0xc4] sm:$0xf]
    %v4273 = vld [vmem:[#allocation19 + $0xc8] sm:$0xf]
    %v4274 = vld [vmem:[#allocation19 + $0xcc] sm:$0xf]
    %v4275 = vld [vmem:[#allocation19 + $0xd0] sm:$0xf]
    %v4276 = vld [vmem:[#allocation19 + $0xd4] sm:$0xf]
    %v4277 = vld [vmem:[#allocation19 + $0xd8] sm:$0xf]
    %v4278 = vld [vmem:[#allocation19 + $0xdc] sm:$0xf]
    %v4279 = vld [vmem:[#allocation19 + $0xe0] sm:$0xf]
    %v4280 = vld [vmem:[#allocation19 + $0xe4] sm:$0xf]
    %v4281 = vld [vmem:[#allocation19 + $0xe8] sm:$0xf]
    %v4282 = vld [vmem:[#allocation19 + $0xec] sm:$0xf]
    %v4283 = vld [vmem:[#allocation19 + $0xf0] sm:$0xf]
    %v4284 = vld [vmem:[#allocation19 + $0xf4] sm:$0xf]
    %v4285 = vld [vmem:[#allocation19 + $0xf8] sm:$0xf]
    %v4286 = vld [vmem:[#allocation19 + $0xfc] sm:$0xf]
    %v4287 = vld [vmem:[#allocation20] sm:$0x1]
    %v4289 = vlaneseq
    %v4290 = vshrl.u32 %v4289, 7
    %v4291 = vsub.s32 0, %v4290
    %v4292 = vrot.slane %v4287, %v4291
    %v4358 = vunpack.c.l.b16 %v4223
    %v4359 = vunpack.c.l.b16 %v4224
    %v4360 = vunpack.c.l.b16 %v4225
    %v4361 = vunpack.c.l.b16 %v4226
    %v4362 = vunpack.c.l.b16 %v4227
    %v4363 = vunpack.c.l.b16 %v4228
    %v4364 = vunpack.c.l.b16 %v4229
    %v4365 = vunpack.c.l.b16 %v4230
    %v4366 = vunpack.c.l.b16 %v4231
    %v4367 = vunpack.c.l.b16 %v4232
    %v4368 = vunpack.c.l.b16 %v4233
    %v4369 = vunpack.c.l.b16 %v4234
    %v4370 = vunpack.c.l.b16 %v4235
    %v4371 = vunpack.c.l.b16 %v4236
    %v4372 = vunpack.c.l.b16 %v4237
    %v4373 = vunpack.c.l.b16 %v4238
    %v4374 = vunpack.c.l.b16 %v4239
    %v4375 = vunpack.c.l.b16 %v4240
    %v4376 = vunpack.c.l.b16 %v4241
    %v4377 = vunpack.c.l.b16 %v4242
    %v4378 = vunpack.c.l.b16 %v4243
    %v4379 = vunpack.c.l.b16 %v4244
    %v4380 = vunpack.c.l.b16 %v4245
    %v4381 = vunpack.c.l.b16 %v4246
    %v4382 = vunpack.c.l.b16 %v4247
    %v4383 = vunpack.c.l.b16 %v4248
    %v4384 = vunpack.c.l.b16 %v4249
    %v4385 = vunpack.c.l.b16 %v4250
    %v4386 = vunpack.c.l.b16 %v4251
    %v4387 = vunpack.c.l.b16 %v4252
    %v4388 = vunpack.c.l.b16 %v4253
    %v4389 = vunpack.c.l.b16 %v4254
    %v4390 = vunpack.c.l.b16 %v4255
    %v4391 = vunpack.c.l.b16 %v4256
    %v4392 = vunpack.c.l.b16 %v4257
    %v4393 = vunpack.c.l.b16 %v4258
    %v4394 = vunpack.c.l.b16 %v4259
    %v4395 = vunpack.c.l.b16 %v4260
    %v4396 = vunpack.c.l.b16 %v4261
    %v4397 = vunpack.c.l.b16 %v4262
    %v4398 = vunpack.c.l.b16 %v4263
    %v4399 = vunpack.c.l.b16 %v4264
    %v4400 = vunpack.c.l.b16 %v4265
    %v4401 = vunpack.c.l.b16 %v4266
    %v4402 = vunpack.c.l.b16 %v4267
    %v4403 = vunpack.c.l.b16 %v4268
    %v4404 = vunpack.c.l.b16 %v4269
    %v4405 = vunpack.c.l.b16 %v4270
    %v4406 = vunpack.c.l.b16 %v4271
    %v4407 = vunpack.c.l.b16 %v4272
    %v4408 = vunpack.c.l.b16 %v4273
    %v4409 = vunpack.c.l.b16 %v4274
    %v4410 = vunpack.c.l.b16 %v4275
    %v4411 = vunpack.c.l.b16 %v4276
    %v4412 = vunpack.c.l.b16 %v4277
    %v4413 = vunpack.c.l.b16 %v4278
    %v4414 = vunpack.c.l.b16 %v4279
    %v4415 = vunpack.c.l.b16 %v4280
    %v4416 = vunpack.c.l.b16 %v4281
    %v4417 = vunpack.c.l.b16 %v4282
    %v4418 = vunpack.c.l.b16 %v4283
    %v4419 = vunpack.c.l.b16 %v4284
    %v4420 = vunpack.c.l.b16 %v4285
    %v4421 = vunpack.c.l.b16 %v4286
    %v4422 = vpack.c.b16 %v4359, %v4358
    %v4423 = vpack.c.b16 %v4361, %v4360
    %v4424 = vpack.c.b16 %v4363, %v4362
    %v4425 = vpack.c.b16 %v4365, %v4364
    %v4426 = vpack.c.b16 %v4367, %v4366
    %v4427 = vpack.c.b16 %v4369, %v4368
    %v4428 = vpack.c.b16 %v4371, %v4370
    %v4429 = vpack.c.b16 %v4373, %v4372
    %v4430 = vpack.c.b16 %v4375, %v4374
    %v4431 = vpack.c.b16 %v4377, %v4376
    %v4432 = vpack.c.b16 %v4379, %v4378
    %v4433 = vpack.c.b16 %v4381, %v4380
    %v4434 = vpack.c.b16 %v4383, %v4382
    %v4435 = vpack.c.b16 %v4385, %v4384
    %v4436 = vpack.c.b16 %v4387, %v4386
    %v4437 = vpack.c.b16 %v4389, %v4388
    %v4438 = vpack.c.b16 %v4391, %v4390
    %v4439 = vpack.c.b16 %v4393, %v4392
    %v4440 = vpack.c.b16 %v4395, %v4394
    %v4441 = vpack.c.b16 %v4397, %v4396
    %v4442 = vpack.c.b16 %v4399, %v4398
    %v4443 = vpack.c.b16 %v4401, %v4400
    %v4444 = vpack.c.b16 %v4403, %v4402
    %v4445 = vpack.c.b16 %v4405, %v4404
    %v4446 = vpack.c.b16 %v4407, %v4406
    %v4447 = vpack.c.b16 %v4409, %v4408
    %v4448 = vpack.c.b16 %v4411, %v4410
    %v4449 = vpack.c.b16 %v4413, %v4412
    %v4450 = vpack.c.b16 %v4415, %v4414
    %v4451 = vpack.c.b16 %v4417, %v4416
    %v4452 = vpack.c.b16 %v4419, %v4418
    %v4453 = vpack.c.b16 %v4421, %v4420
    %4486 = vmatprep.subr.bf16.mxu0 0
    %4487 = vmatpush1.bf16.msra.mxu0 %v4422
    %4488 = vmatprep.subr.bf16.mxu0 0
    %4489 = vmatpush1.bf16.msra.mxu0 %v4423
    %4490 = vmatprep.subr.bf16.mxu0 0
    %4491 = vmatpush1.bf16.msra.mxu0 %v4424
    %4492 = vmatprep.subr.bf16.mxu0 0
    %4493 = vmatpush1.bf16.msra.mxu0 %v4425
    %4494 = vmatprep.subr.bf16.mxu0 0
    %4495 = vmatpush1.bf16.msra.mxu0 %v4426
    %4496 = vmatprep.subr.bf16.mxu0 0
    %4497 = vmatpush1.bf16.msra.mxu0 %v4427
    %4498 = vmatprep.subr.bf16.mxu0 0
    %4499 = vmatpush1.bf16.msra.mxu0 %v4428
    %4500 = vmatprep.subr.bf16.mxu0 0
    %4501 = vmatpush1.bf16.msra.mxu0 %v4429
    %4502 = vmatprep.subr.bf16.mxu0 0
    %4503 = vmatpush1.bf16.msra.mxu0 %v4430
    %4504 = vmatprep.subr.bf16.mxu0 0
    %4505 = vmatpush1.bf16.msra.mxu0 %v4431
    %4506 = vmatprep.subr.bf16.mxu0 0
    %4507 = vmatpush1.bf16.msra.mxu0 %v4432
    %4508 = vmatprep.subr.bf16.mxu0 0
    %4509 = vmatpush1.bf16.msra.mxu0 %v4433
    %4510 = vmatprep.subr.bf16.mxu0 0
    %4511 = vmatpush1.bf16.msra.mxu0 %v4434
    %4512 = vmatprep.subr.bf16.mxu0 0
    %4513 = vmatpush1.bf16.msra.mxu0 %v4435
    %4514 = vmatprep.subr.bf16.mxu0 0
    %4515 = vmatpush1.bf16.msra.mxu0 %v4436
    %4516 = vmatprep.subr.bf16.mxu0 0
    %4517 = vmatpush1.bf16.msra.mxu0 %v4437
    %4518 = vmatprep.mubr.bf16.mxu0 %v4220
    %4519 = vmatmul.mubr.bf16.gmra.mrb[0].mxu0 %v4219
    %v4520 = vpop.f32.mrb[0].mxu0
    %v4521 = vadd.f32 %v4292, %v4520
    %v4522 = vpop.f32.mrb[0].mxu0
    %v4523 = vpop.f32.mrb[0].mxu0
    %v4524 = vpop.f32.mrb[0].mxu0
    %4525 = vdwg.mxu0
    %4526 = vmatprep.subr.bf16.mxu0 0
    %4527 = vmatpush1.bf16.msra.mxu0 %v4438
    %4528 = vmatprep.subr.bf16.mxu0 0
    %4529 = vmatpush1.bf16.msra.mxu0 %v4439
    %4530 = vmatprep.subr.bf16.mxu0 0
    %4531 = vmatpush1.bf16.msra.mxu0 %v4440
    %4532 = vmatprep.subr.bf16.mxu0 0
    %4533 = vmatpush1.bf16.msra.mxu0 %v4441
    %4534 = vmatprep.subr.bf16.mxu0 0
    %4535 = vmatpush1.bf16.msra.mxu0 %v4442
    %4536 = vmatprep.subr.bf16.mxu0 0
    %4537 = vmatpush1.bf16.msra.mxu0 %v4443
    %4538 = vmatprep.subr.bf16.mxu0 0
    %4539 = vmatpush1.bf16.msra.mxu0 %v4444
    %4540 = vmatprep.subr.bf16.mxu0 0
    %4541 = vmatpush1.bf16.msra.mxu0 %v4445
    %4542 = vmatprep.subr.bf16.mxu0 0
    %4543 = vmatpush1.bf16.msra.mxu0 %v4446
    %4544 = vmatprep.subr.bf16.mxu0 0
    %4545 = vmatpush1.bf16.msra.mxu0 %v4447
    %4546 = vmatprep.subr.bf16.mxu0 0
    %4547 = vmatpush1.bf16.msra.mxu0 %v4448
    %4548 = vmatprep.subr.bf16.mxu0 0
    %4549 = vmatpush1.bf16.msra.mxu0 %v4449
    %4550 = vmatprep.subr.bf16.mxu0 0
    %4551 = vmatpush1.bf16.msra.mxu0 %v4450
    %4552 = vmatprep.subr.bf16.mxu0 0
    %4553 = vmatpush1.bf16.msra.mxu0 %v4451
    %4554 = vmatprep.subr.bf16.mxu0 0
    %4555 = vmatpush1.bf16.msra.mxu0 %v4452
    %4556 = vmatprep.subr.bf16.mxu0 0
    %4557 = vmatpush1.bf16.msra.mxu0 %v4453
    %4558 = vmatprep.mubr.bf16.mxu0 %v4222
    %4559 = vmatmul.mubr.bf16.gmra.mrb[0].mxu0 %v4221
    %v4560 = vpop.f32.mrb[0].mxu0
    %v4561 = vadd.f32 %v4521, %v4560
    %v4562 = vpop.f32.mrb[0].mxu0
    %v4563 = vpop.f32.mrb[0].mxu0
    %v4564 = vpop.f32.mrb[0].mxu0
    %4565 = vdwg.mxu0
    %4566 = vst [vmem:[#allocation22] sm:$0x3] %v4561
    // Predicated region
    $region102: #{tpu_custom_call.1} parent=1 // pred_check
      _
    $region103: #{tpu_custom_call.1} parent=1 // pred_check_branch
      %4568 = sbr.rel (0) target = $region105
    $region104: #{tpu_custom_call.1} parent=1 // pred_region
      %s4570 = ssub.s32 32, 32
      %4571 = vsyncadd [#allocation4], %s4570
      %s4573 = sshll.u32 [#allocation22], 4
      %s4574 = int_to_ptr.vmem [resolvable:$true] %s4573
      %4576 = dma.vmem_to_hbm [thread:$0]  %s4574, 32, %s13, [#allocation4]
    $region105: #{tpu_custom_call.1} parent=1 // pred_fallthru
      _
    // Predicated region
    $region106: #{tpu_custom_call.1} parent=1 // pred_check
      _
    $region107: #{tpu_custom_call.1} parent=1 // pred_check_branch
      %4578 = sbr.rel (0) target = $region109
    $region108: #{tpu_custom_call.1} parent=1 // pred_region
      %4579 = dma.done [#allocation4], 32
    $region109: #{tpu_custom_call.1} parent=1 // pred_fallthru
      _
    %4580 = vsyncpa [#allocation3], 1
    %4581 = vsyncpa [#allocation6], 1
    %4582 = vsyncpa [#allocation9], 1
    %4583 = vsyncpa [#allocation12], 1
    %4584 = vsyncpa [#allocation15], 1
    %4585 = vsyncpa [#allocation18], 1
    %4586 = vsyncpa [#allocation21], 1
    %4587 = vsyncpa [#allocation4], 1

</llo_original>
